<compile_context>
chip_gen: v6e
topology: v6e:2x2x1
jax: 0.10.0
libtpu: 0.0.40
codegen_flags: <defaults>
</compile_context>

<pallas_src>
import functools

import numpy as np
import jax
import jax.numpy as jnp
from jax.experimental import pallas as pl
from jax.experimental.pallas import tpu as pltpu


def _round_up(x, m):
    return ((x + m - 1) // m) * m


def decoder_rnn_kernel(x_ref, h0_ref, wx_ref, wh_ref, bg_ref, wo_ref, bo_ref,
                       logp_ref, hout_ref, h_carry, *,
                       hidden_pad, chunk, real_steps):
    """One chunk of `chunk` GRU decode steps per grid iteration.

    grid = (batch_blocks, step_blocks); weights live whole in VMEM (loaded once),
    the hidden state is carried across step blocks in a VMEM scratch, and the
    (chunk, B, O_pad) log-prob tile is streamed back to HBM per iteration.
    """
    s = pl.program_id(1)
    Hp = hidden_pad
    Bb = h0_ref.shape[0]
    wdt = wx_ref.dtype

    @pl.when(s == 0)
    def _init():
        h_carry[...] = h0_ref[...]

    # Hoist bias broadcasts out of the unrolled step loop (no CSE inside).
    bg = jnp.broadcast_to(bg_ref[...], (Bb, 4 * Hp))       # f32
    bo = jnp.broadcast_to(bo_ref[...], (Bb, bo_ref.shape[-1]))  # f32 (-1e30 pads)

    h = h_carry[...]                                        # (Bb, Hp) f32
    snap_c = (real_steps - 1) % chunk

    for c in range(chunk):
        # relu(embedding(token)); embedding rows were gathered in the wrapper.
        x = jnp.maximum(x_ref[c], 0.0).astype(wdt)          # (Bb, Hp) bf16

        # Fused gate pre-activations: two lane-dense MXU dots (no x|h concat),
        # f32 accumulation.  Gate layout (each segment Hp lanes wide):
        #   [ r | z | n_in | n_hid ]
        gates = (jnp.dot(x, wx_ref[...], preferred_element_type=jnp.float32)
                 + jnp.dot(h.astype(wdt), wh_ref[...],
                           preferred_element_type=jnp.float32)
                 + bg)
        r = jax.nn.sigmoid(gates[:, 0 * Hp:1 * Hp])
        z = jax.nn.sigmoid(gates[:, 1 * Hp:2 * Hp])
        n = jnp.tanh(gates[:, 2 * Hp:3 * Hp] + r * gates[:, 3 * Hp:4 * Hp])
        h = (1.0 - z) * n + z * h                           # (Bb, Hp) f32

        # Output projection + max-shifted log-softmax.  Padded vocab columns
        # carry a -1e30 f32 bias, so exp(pad - m) underflows to exactly 0.
        logits = jnp.dot(h.astype(wdt), wo_ref[...],
                         preferred_element_type=jnp.float32) + bo
        m = jnp.max(logits, axis=-1, keepdims=True)
        lse = m + jnp.log(jnp.sum(jnp.exp(logits - m), axis=-1, keepdims=True))
        logp_ref[c] = logits - lse                          # whole-block row store

        # Only the hidden state after the last *real* step is returned.
        if c == snap_c:
            @pl.when(s * chunk + c == real_steps - 1)
            def _snap(h_snap=h):
                hout_ref[...] = h_snap

    h_carry[...] = h


def decoder_rnn_decode(tokens, hidden, params):
    """Batched multi-step decode.

    tokens: (B, T) or (T,) int32 token ids.
    hidden: (1, B, H) (or (1, 1, H)) f32 initial hidden state.
    Returns (log_probs (B, T, O) [or (T, O) for 1-D tokens], hidden (1, B, H)).
    """
    H, O = params["hidden_size"], params["output_size"]
    Hp, Op = params["padded_hidden"], params["padded_output"]
    wd = params["weight_dtype"]

    tokens = jnp.asarray(tokens, jnp.int32)
    single_seq = tokens.ndim == 1
    if single_seq:
        tokens = tokens[None, :]
    B, T = int(tokens.shape[0]), int(tokens.shape[1])
    h0 = jnp.asarray(hidden, jnp.float32).reshape(B, H)

    # Batch padded to the f32 sublane tile (>=8); blocked at 128 rows so the
    # leading grid axis can be split across TensorCores (v7x).
    B_pad = _round_up(max(B, 8), 8)
    if B_pad > 128:
        B_pad = _round_up(B_pad, 128)
        Bb = 128
    else:
        Bb = B_pad
    n_bblocks = B_pad // Bb

    chunk = min(8, T)                      # timesteps per grid iteration
    Tp = _round_up(T, chunk)
    n_sblocks = Tp // chunk

    tok_pad = jnp.zeros((B_pad, Tp), jnp.int32).at[:B, :T].set(tokens)
    h0_pad = jnp.zeros((B_pad, Hp), jnp.float32).at[:B, :H].set(h0)

    # Embedding gather (data-dependent) stays in JAX; the (Tp, B_pad, Hp) bf16
    # slab is then streamed chunk-by-chunk through the Pallas pipeline.
    # TODO(synk): fuse the per-step gather into the kernel (scalar-prefetched
    # token ids + per-row DMA) to drop the XLA gather and the HBM intermediate.
    x_seq = jnp.transpose(params["emb_pad"][tok_pad], (1, 0, 2))   # (Tp, B_pad, Hp)

    # Explicit VMEM budget: resident weights + biases + double-buffered x / logp
    # tiles + carry scratch, with 2x headroom (capped at v7x's 64 MiB per-core).
    wbytes = np.dtype(wd).itemsize
    need = (2 * Hp * 4 * Hp * wbytes + Hp * Op * wbytes       # W_x, W_h, W_out
            + (4 * Hp + Op) * 4                               # biases (f32)
            + 2 * Bb * Hp * 4 * 2                             # h0 / h_out buffers
            + 2 * chunk * Bb * Hp * wbytes                    # x double buffer
            + 2 * chunk * Bb * Op * 4                         # logp double buffer
            + Bb * Hp * 4)                                    # carry scratch
    vmem_limit = int(min(64 * 1024 * 1024, max(2 * need, 8 * 1024 * 1024)))

    vmem_resident = pl.BlockSpec(memory_space=pltpu.MemorySpace.VMEM)
    kernel = functools.partial(decoder_rnn_kernel,
                               hidden_pad=Hp, chunk=chunk, real_steps=T)

    logp_pad, h_last = pl.pallas_call(
        kernel,
        grid=(n_bblocks, n_sblocks),
        in_specs=[
            pl.BlockSpec((chunk, Bb, Hp), lambda b, s: (s, b, 0)),   # x stream
            pl.BlockSpec((Bb, Hp), lambda b, s: (b, 0)),             # h0
            vmem_resident,                                           # W_x
            vmem_resident,                                           # W_h
            vmem_resident,                                           # b_gates
            vmem_resident,                                           # W_out
            vmem_resident,                                           # b_out
        ],
        out_specs=(
            pl.BlockSpec((chunk, Bb, Op), lambda b, s: (s, b, 0)),   # logp stream
            pl.BlockSpec((Bb, Hp), lambda b, s: (b, 0)),             # final hidden
        ),
        out_shape=(
            jax.ShapeDtypeStruct((Tp, B_pad, Op), jnp.float32),
            jax.ShapeDtypeStruct((B_pad, Hp), jnp.float32),
        ),
        scratch_shapes=[pltpu.VMEM((Bb, Hp), jnp.float32)],
        compiler_params=pltpu.CompilerParams(
            dimension_semantics=("parallel", "arbitrary"),
            vmem_limit_bytes=vmem_limit),
    )(x_seq, h0_pad, params["W_x"], params["W_h"], params["b_gates"],
      params["W_out_pad"], params["b_out_pad"])

    log_probs = jnp.transpose(logp_pad, (1, 0, 2))[:B, :T, :O]       # (B, T, O)
    h_new = h_last[:B, :H].reshape(1, B, H)
    if single_seq:
        log_probs = log_probs[0]
    return log_probs, h_new


def decoder_rnn_forward(token, hidden, params):
    """Single step, identical semantics to DecoderRNN.forward(input, hidden)."""
    tokens = jnp.asarray(token, jnp.int32).reshape(1, 1)
    log_probs, h_new = decoder_rnn_decode(tokens, hidden, params)
    return log_probs.reshape(1, params["output_size"]), h_new


def init_hidden(hidden_size, batch=1):
    return jnp.zeros((1, batch, hidden_size), jnp.float32)


def init_params(key, hidden_size, output_size, weight_dtype=jnp.bfloat16):
    H, O = hidden_size, output_size
    Hp = _round_up(H, 128)       # per-gate lane-padded width
    Op = _round_up(O, 128)       # lane-padded vocab width
    ks = jax.random.split(key, 7)
    bound = 1.0 / np.sqrt(H)
    u = lambda k, shape: jax.random.uniform(k, shape, jnp.float32, -bound, bound)

    # Raw PyTorch-layout parameters (GRU gate order r, z, n).
    embedding = jax.random.normal(ks[0], (O, H), jnp.float32)
    W_ih = u(ks[1], (3 * H, H))     # nn.GRU weight_ih_l0
    W_hh = u(ks[2], (3 * H, H))     # nn.GRU weight_hh_l0
    b_ih = u(ks[3], (3 * H,))
    b_hh = u(ks[4], (3 * H,))
    W_out = u(ks[5], (O, H))        # nn.Linear weight (O, H)
    b_out = u(ks[6], (O,))

    # ---- pack for the kernel: bf16 weights, each gate segment padded to Hp ----
    def seg(mat_t):                 # (H, H) x@W layout -> (Hp, Hp) zero-padded
        return jnp.zeros((Hp, Hp), jnp.float32).at[:H, :H].set(mat_t)

    Z = jnp.zeros((Hp, Hp), jnp.float32)
    W_x = jnp.concatenate(          # x contributions: [r | z | n_in | 0]
        [seg(W_ih[:H].T), seg(W_ih[H:2 * H].T), seg(W_ih[2 * H:].T), Z],
        axis=1).astype(weight_dtype)                                   # (Hp, 4Hp)
    W_h = jnp.concatenate(          # h contributions: [r | z | 0 | n_hid]
        [seg(W_hh[:H].T), seg(W_hh[H:2 * H].T), Z, seg(W_hh[2 * H:].T)],
        axis=1).astype(weight_dtype)                                   # (Hp, 4Hp)

    b_gates = jnp.zeros((1, 4 * Hp), jnp.float32)
    b_gates = b_gates.at[0, 0 * Hp:0 * Hp + H].set(b_ih[:H] + b_hh[:H])          # r
    b_gates = b_gates.at[0, 1 * Hp:1 * Hp + H].set(b_ih[H:2 * H] + b_hh[H:2 * H])  # z
    b_gates = b_gates.at[0, 2 * Hp:2 * Hp + H].set(b_ih[2 * H:])                 # n (input)
    b_gates = b_gates.at[0, 3 * Hp:3 * Hp + H].set(b_hh[2 * H:])                 # n (hidden)

    W_out_pad = (jnp.zeros((Hp, Op), jnp.float32)
                 .at[:H, :O].set(W_out.T).astype(weight_dtype))                  # (Hp, Op)
    b_out_pad = jnp.full((1, Op), -1e30, jnp.float32).at[0, :O].set(b_out)       # f32!

    emb_pad = (jnp.zeros((O, Hp), jnp.float32)
               .at[:, :H].set(embedding).astype(weight_dtype))                   # (O, Hp)

    return {
        "hidden_size": H, "output_size": O,
        "padded_hidden": Hp, "padded_output": Op,
        "weight_dtype": weight_dtype,
        # raw f32 (for the reference check)
        "embedding": embedding, "W_ih": W_ih, "W_hh": W_hh,
        "b_ih": b_ih, "b_hh": b_hh, "W_out": W_out, "b_out": b_out,
        # packed, lane-dense, weight-dtype (for the kernel)
        "emb_pad": emb_pad, "W_x": W_x, "W_h": W_h, "b_gates": b_gates,
        "W_out_pad": W_out_pad, "b_out_pad": b_out_pad,
    }


def _reference_decode(tokens, hidden, params):
    """Pure-JAX reference mirroring PyTorch nn.GRU semantics step by step.

    Matmul inputs are rounded to the kernel's weight dtype (bf16) with f32
    accumulation so the comparison against the Pallas kernel stays tight.
    """
    H = params["hidden_size"]
    wd = params["weight_dtype"]
    emb = params["embedding"]
    W_ih, W_hh = params["W_ih"], params["W_hh"]
    b_ih, b_hh = params["b_ih"], params["b_hh"]
    W_out, b_out = params["W_out"], params["b_out"]

    def mm(a, b):
        return jnp.dot(a.astype(wd), b.astype(wd),
                       preferred_element_type=jnp.float32)

    tokens = jnp.asarray(tokens, jnp.int32)
    B, T = int(tokens.shape[0]), int(tokens.shape[1])
    h = jnp.asarray(hidden, jnp.float32).reshape(B, H)
    outs = []
    for t in range(T):
        x = jnp.maximum(emb[tokens[:, t]], 0.0)                  # (B, H)
        gi = mm(x, W_ih.T) + b_ih
        gh = mm(h, W_hh.T) + b_hh
        r = jax.nn.sigmoid(gi[:, :H] + gh[:, :H])
        z = jax.nn.sigmoid(gi[:, H:2 * H] + gh[:, H:2 * H])
        n = jnp.tanh(gi[:, 2 * H:] + r * gh[:, 2 * H:])
        h = (1.0 - z) * n + z * h
        logits = mm(h, W_out.T) + b_out
        outs.append(logits - jax.scipy.special.logsumexp(
            logits, axis=-1, keepdims=True))
    return jnp.stack(outs, axis=1), h.reshape(1, B, H)           # (B,T,O), (1,B,H)


if __name__ == "__main__":
    hidden_size = 32
    output_size = 64
    B, T = 4, 16

    key = jax.random.PRNGKey(0)
    pkey, hkey, tkey, tkey2, hkey2 = jax.random.split(key, 5)
    params = init_params(pkey, hidden_size, output_size)

    # --- batched multi-step decode (weights resident across all chunks) -------
    tokens = jax.random.randint(tkey, (B, T), 0, output_size, dtype=jnp.int32)
    hidden0 = jax.random.normal(hkey, (1, B, hidden_size), jnp.float32)

    log_probs, h_last = decoder_rnn_decode(tokens, hidden0, params)
    jax.block_until_ready((log_probs, h_last))

    ref_lp, ref_h = _reference_decode(tokens, hidden0, params)
    assert log_probs.shape == (B, T, output_size)
    assert h_last.shape == (1, B, hidden_size)
    assert np.allclose(np.asarray(log_probs), np.asarray(ref_lp), atol=2e-3, rtol=2e-3)
    assert np.allclose(np.asarray(h_last), np.asarray(ref_h), atol=2e-3, rtol=2e-3)

    # --- T not a multiple of the chunk (exercises the padded-tail path) -------
    tokens_odd = jax.random.randint(tkey2, (2, 13), 0, output_size, dtype=jnp.int32)
    hidden_odd = jax.random.normal(hkey2, (1, 2, hidden_size), jnp.float32)
    lp_odd, h_odd = decoder_rnn_decode(tokens_odd, hidden_odd, params)
    jax.block_until_ready((lp_odd, h_odd))
    ref_lp_odd, ref_h_odd = _reference_decode(tokens_odd, hidden_odd, params)
    assert np.allclose(np.asarray(lp_odd), np.asarray(ref_lp_odd), atol=2e-3, rtol=2e-3)
    assert np.allclose(np.asarray(h_odd), np.asarray(ref_h_odd), atol=2e-3, rtol=2e-3)

    # --- single step, identical signature/semantics to DecoderRNN.forward -----
    token = jnp.array([[3]], dtype=jnp.int32)
    h0_single = hidden0[:, :1]
    lp1, h1 = decoder_rnn_forward(token, h0_single, params)
    jax.block_until_ready((lp1, h1))
    ref_lp1, ref_h1 = _reference_decode(token, h0_single, params)
    assert lp1.shape == (1, output_size) and h1.shape == (1, 1, hidden_size)
    assert np.allclose(np.asarray(lp1), np.asarray(ref_lp1).reshape(1, -1),
                       atol=2e-3, rtol=2e-3)
    assert np.allclose(np.asarray(h1), np.asarray(ref_h1), atol=2e-3, rtol=2e-3)

    print("KERNEL_OK")
</pallas_src>

<mosaic_0001>
module attributes {stable_mosaic.version = 11 : i64} {
  func.func @decoder_rnn_kernel(%arg0: i32, %arg1: i32, %arg2: memref<8x8x128xbf16, #tpu.memory_space<vmem>>, %arg3: memref<8x128xf32, #tpu.memory_space<vmem>>, %arg4: memref<128x512xbf16, #tpu.memory_space<vmem>>, %arg5: memref<128x512xbf16, #tpu.memory_space<vmem>>, %arg6: memref<1x512xf32, #tpu.memory_space<vmem>>, %arg7: memref<128x128xbf16, #tpu.memory_space<vmem>>, %arg8: memref<1x128xf32, #tpu.memory_space<vmem>>, %arg9: memref<8x8x128xf32, #tpu.memory_space<vmem>>, %arg10: memref<8x128xf32, #tpu.memory_space<vmem>>, %arg11: memref<8x128xf32, #tpu.memory_space<vmem>>) attributes {dimension_semantics = [#tpu.dimension_semantics<parallel>, #tpu.dimension_semantics<arbitrary>], iteration_bounds = array<i64: 1, 2>, scalar_prefetch = 0 : i64, scratch_operands = 1 : i64, tpu.core_type = #tpu.core_type<tc>, window_params = [{transform_indices = @transform_0, window_bounds = array<i64: 8, 8, 128>}, {transform_indices = @transform_1, window_bounds = array<i64: 8, 128>}, {pipeline_mode = #tpu.pipeline_mode<synchronous>, transform_indices = @transform_2, window_bounds = array<i64: 128, 512>}, {pipeline_mode = #tpu.pipeline_mode<synchronous>, transform_indices = @transform_3, window_bounds = array<i64: 128, 512>}, {pipeline_mode = #tpu.pipeline_mode<synchronous>, transform_indices = @transform_4, window_bounds = array<i64: 1, 512>}, {pipeline_mode = #tpu.pipeline_mode<synchronous>, transform_indices = @transform_5, window_bounds = array<i64: 128, 128>}, {pipeline_mode = #tpu.pipeline_mode<synchronous>, transform_indices = @transform_6, window_bounds = array<i64: 1, 128>}, {transform_indices = @transform_7, window_bounds = array<i64: 8, 8, 128>}, {transform_indices = @transform_8, window_bounds = array<i64: 8, 128>}]} {
    %c0_i32 = arith.constant 0 : i32
    %0 = arith.cmpi eq, %arg1, %c0_i32 : i32
    %1 = arith.extui %0 : i1 to i32
    %c0_i32_0 = arith.constant 0 : i32
    %2 = arith.cmpi ne, %1, %c0_i32_0 : i32
    scf.if %2 {
      %c0_169 = arith.constant 0 : index
      %c0_170 = arith.constant 0 : index
      %424 = vector.load %arg3[%c0_169, %c0_170] : memref<8x128xf32, #tpu.memory_space<vmem>>, vector<8x128xf32>
      %c0_171 = arith.constant 0 : index
      %c0_172 = arith.constant 0 : index
      %425 = vector.load %arg11[%c0_171, %c0_172] : memref<8x128xf32, #tpu.memory_space<vmem>>, vector<8x128xf32>
      tpu.vector_store %arg11[%c0_171, %c0_172], %424 {strides = array<i32>} : memref<8x128xf32, #tpu.memory_space<vmem>>, vector<8x128xf32>,
    } else {
    }
    %c0 = arith.constant 0 : index
    %c0_1 = arith.constant 0 : index
    %3 = vector.load %arg6[%c0, %c0_1] : memref<1x512xf32, #tpu.memory_space<vmem>>, vector<1x512xf32>
    %4 = vector.shape_cast %3 : vector<1x512xf32> to vector<1x512xf32>
    %5 = vector.broadcast %4 : vector<1x512xf32> to vector<8x512xf32>
    %c0_2 = arith.constant 0 : index
    %c0_3 = arith.constant 0 : index
    %6 = vector.load %arg8[%c0_2, %c0_3] : memref<1x128xf32, #tpu.memory_space<vmem>>, vector<1x128xf32>
    %7 = vector.shape_cast %6 : vector<1x128xf32> to vector<1x128xf32>
    %8 = vector.broadcast %7 : vector<1x128xf32> to vector<8x128xf32>
    %c0_4 = arith.constant 0 : index
    %c0_5 = arith.constant 0 : index
    %9 = vector.load %arg11[%c0_4, %c0_5] : memref<8x128xf32, #tpu.memory_space<vmem>>, vector<8x128xf32>
    %c0_6 = arith.constant 0 : index
    %c0_7 = arith.constant 0 : index
    %c0_8 = arith.constant 0 : index
    %10 = vector.load %arg2[%c0_6, %c0_7, %c0_8] : memref<8x8x128xbf16, #tpu.memory_space<vmem>>, vector<1x8x128xbf16>
    %11 = vector.shape_cast %10 : vector<1x8x128xbf16> to vector<8x128xbf16>
    %cst = arith.constant 0.000000e+00 : bf16
    %12 = vector.broadcast %cst : bf16 to vector<8x128xbf16>
    %13 = arith.maximumf %11, %12 : vector<8x128xbf16>
    %c0_9 = arith.constant 0 : index
    %c0_10 = arith.constant 0 : index
    %14 = vector.load %arg4[%c0_9, %c0_10] : memref<128x512xbf16, #tpu.memory_space<vmem>>, vector<128x512xbf16>
    %cst_11 = arith.constant dense<0.000000e+00> : vector<8x512xf32>
    %15 = tpu.matmul %13, %14, %cst_11 {dimension_numbers = #tpu.dot_dimension_numbers<[1], [0], [0], [1], [0, 0, 1, 1], [], []>} : vector<8x128xbf16>, vector<128x512xbf16>, vector<8x512xf32> -> vector<8x512xf32>
    %16 = arith.truncf %9 : vector<8x128xf32> to vector<8x128xbf16>
    %c0_12 = arith.constant 0 : index
    %c0_13 = arith.constant 0 : index
    %17 = vector.load %arg5[%c0_12, %c0_13] : memref<128x512xbf16, #tpu.memory_space<vmem>>, vector<128x512xbf16>
    %cst_14 = arith.constant dense<0.000000e+00> : vector<8x512xf32>
    %18 = tpu.matmul %16, %17, %cst_14 {dimension_numbers = #tpu.dot_dimension_numbers<[1], [0], [0], [1], [0, 0, 1, 1], [], []>} : vector<8x128xbf16>, vector<128x512xbf16>, vector<8x512xf32> -> vector<8x512xf32>
    %19 = arith.addf %15, %18 : vector<8x512xf32>
    %20 = arith.addf %19, %5 : vector<8x512xf32>
    %21 = vector.extract_strided_slice %20 {offsets = [0, 0], sizes = [8, 128], strides = [1, 1]} : vector<8x512xf32> to vector<8x128xf32>
    %22 = arith.negf %21 : vector<8x128xf32>
    %23 = math.exp %22 : vector<8x128xf32>
    %cst_15 = arith.constant 1.000000e+00 : f32
    %24 = vector.broadcast %cst_15 : f32 to vector<8x128xf32>
    %25 = arith.addf %24, %23 : vector<8x128xf32>
    %26 = arith.divf %24, %25 : vector<8x128xf32>
    %27 = vector.extract_strided_slice %20 {offsets = [0, 128], sizes = [8, 128], strides = [1, 1]} : vector<8x512xf32> to vector<8x128xf32>
    %28 = arith.negf %27 : vector<8x128xf32>
    %29 = math.exp %28 : vector<8x128xf32>
    %cst_16 = arith.constant 1.000000e+00 : f32
    %30 = vector.broadcast %cst_16 : f32 to vector<8x128xf32>
    %31 = arith.addf %30, %29 : vector<8x128xf32>
    %32 = arith.divf %30, %31 : vector<8x128xf32>
    %33 = vector.extract_strided_slice %20 {offsets = [0, 256], sizes = [8, 128], strides = [1, 1]} : vector<8x512xf32> to vector<8x128xf32>
    %34 = vector.extract_strided_slice %20 {offsets = [0, 384], sizes = [8, 128], strides = [1, 1]} : vector<8x512xf32> to vector<8x128xf32>
    %35 = arith.mulf %26, %34 : vector<8x128xf32>
    %36 = arith.addf %33, %35 : vector<8x128xf32>
    %37 = math.tanh %36 : vector<8x128xf32>
    %cst_17 = arith.constant 1.000000e+00 : f32
    %38 = vector.broadcast %cst_17 : f32 to vector<8x128xf32>
    %39 = arith.subf %38, %32 : vector<8x128xf32>
    %40 = arith.mulf %39, %37 : vector<8x128xf32>
    %41 = arith.mulf %32, %9 : vector<8x128xf32>
    %42 = arith.addf %40, %41 : vector<8x128xf32>
    %43 = arith.truncf %42 : vector<8x128xf32> to vector<8x128xbf16>
    %c0_18 = arith.constant 0 : index
    %c0_19 = arith.constant 0 : index
    %44 = vector.load %arg7[%c0_18, %c0_19] : memref<128x128xbf16, #tpu.memory_space<vmem>>, vector<128x128xbf16>
    %cst_20 = arith.constant dense<0.000000e+00> : vector<8x128xf32>
    %45 = tpu.matmul %43, %44, %cst_20 {dimension_numbers = #tpu.dot_dimension_numbers<[1], [0], [0], [1], [0, 0, 1, 1], [], []>} : vector<8x128xbf16>, vector<128x128xbf16>, vector<8x128xf32> -> vector<8x128xf32>
    %46 = arith.addf %45, %8 : vector<8x128xf32>
    %cst_21 = arith.constant dense<0xFF800000> : vector<8xf32>
    %47 = vector.multi_reduction <maximumf>, %46, %cst_21 [1] : vector<8x128xf32> to vector<8xf32>
    %48 = vector.shape_cast %47 : vector<8xf32> to vector<8x1xf32>
    %49 = vector.broadcast %48 : vector<8x1xf32> to vector<8x128xf32>
    %50 = arith.subf %46, %49 : vector<8x128xf32>
    %51 = math.exp %50 : vector<8x128xf32>
    %cst_22 = arith.constant dense<0.000000e+00> : vector<8xf32>
    %52 = vector.multi_reduction <add>, %51, %cst_22 [1] : vector<8x128xf32> to vector<8xf32>
    %53 = vector.shape_cast %52 : vector<8xf32> to vector<8x1xf32>
    %54 = math.log %53 : vector<8x1xf32>
    %55 = arith.addf %48, %54 : vector<8x1xf32>
    %56 = vector.broadcast %55 : vector<8x1xf32> to vector<8x128xf32>
    %57 = arith.subf %46, %56 : vector<8x128xf32>
    %c0_23 = arith.constant 0 : index
    %c0_24 = arith.constant 0 : index
    %c0_25 = arith.constant 0 : index
    %58 = vector.load %arg9[%c0_23, %c0_24, %c0_25] : memref<8x8x128xf32, #tpu.memory_space<vmem>>, vector<1x8x128xf32>
    %59 = vector.shape_cast %58 : vector<1x8x128xf32> to vector<8x128xf32>
    %60 = vector.shape_cast %57 : vector<8x128xf32> to vector<1x8x128xf32>
    tpu.vector_store %arg9[%c0_23, %c0_24, %c0_25], %60 {strides = array<i32>} : memref<8x8x128xf32, #tpu.memory_space<vmem>>, vector<1x8x128xf32>,
    %c1 = arith.constant 1 : index
    %c0_26 = arith.constant 0 : index
    %c0_27 = arith.constant 0 : index
    %61 = vector.load %arg2[%c1, %c0_26, %c0_27] : memref<8x8x128xbf16, #tpu.memory_space<vmem>>, vector<1x8x128xbf16>
    %62 = vector.shape_cast %61 : vector<1x8x128xbf16> to vector<8x128xbf16>
    %cst_28 = arith.constant 0.000000e+00 : bf16
    %63 = vector.broadcast %cst_28 : bf16 to vector<8x128xbf16>
    %64 = arith.maximumf %62, %63 : vector<8x128xbf16>
    %c0_29 = arith.constant 0 : index
    %c0_30 = arith.constant 0 : index
    %65 = vector.load %arg4[%c0_29, %c0_30] : memref<128x512xbf16, #tpu.memory_space<vmem>>, vector<128x512xbf16>
    %cst_31 = arith.constant dense<0.000000e+00> : vector<8x512xf32>
    %66 = tpu.matmul %64, %65, %cst_31 {dimension_numbers = #tpu.dot_dimension_numbers<[1], [0], [0], [1], [0, 0, 1, 1], [], []>} : vector<8x128xbf16>, vector<128x512xbf16>, vector<8x512xf32> -> vector<8x512xf32>
    %67 = arith.truncf %42 : vector<8x128xf32> to vector<8x128xbf16>
    %c0_32 = arith.constant 0 : index
    %c0_33 = arith.constant 0 : index
    %68 = vector.load %arg5[%c0_32, %c0_33] : memref<128x512xbf16, #tpu.memory_space<vmem>>, vector<128x512xbf16>
    %cst_34 = arith.constant dense<0.000000e+00> : vector<8x512xf32>
    %69 = tpu.matmul %67, %68, %cst_34 {dimension_numbers = #tpu.dot_dimension_numbers<[1], [0], [0], [1], [0, 0, 1, 1], [], []>} : vector<8x128xbf16>, vector<128x512xbf16>, vector<8x512xf32> -> vector<8x512xf32>
    %70 = arith.addf %66, %69 : vector<8x512xf32>
    %71 = arith.addf %70, %5 : vector<8x512xf32>
    %72 = vector.extract_strided_slice %71 {offsets = [0, 0], sizes = [8, 128], strides = [1, 1]} : vector<8x512xf32> to vector<8x128xf32>
    %73 = arith.negf %72 : vector<8x128xf32>
    %74 = math.exp %73 : vector<8x128xf32>
    %cst_35 = arith.constant 1.000000e+00 : f32
    %75 = vector.broadcast %cst_35 : f32 to vector<8x128xf32>
    %76 = arith.addf %75, %74 : vector<8x128xf32>
    %77 = arith.divf %75, %76 : vector<8x128xf32>
    %78 = vector.extract_strided_slice %71 {offsets = [0, 128], sizes = [8, 128], strides = [1, 1]} : vector<8x512xf32> to vector<8x128xf32>
    %79 = arith.negf %78 : vector<8x128xf32>
    %80 = math.exp %79 : vector<8x128xf32>
    %cst_36 = arith.constant 1.000000e+00 : f32
    %81 = vector.broadcast %cst_36 : f32 to vector<8x128xf32>
    %82 = arith.addf %81, %80 : vector<8x128xf32>
    %83 = arith.divf %81, %82 : vector<8x128xf32>
    %84 = vector.extract_strided_slice %71 {offsets = [0, 256], sizes = [8, 128], strides = [1, 1]} : vector<8x512xf32> to vector<8x128xf32>
    %85 = vector.extract_strided_slice %71 {offsets = [0, 384], sizes = [8, 128], strides = [1, 1]} : vector<8x512xf32> to vector<8x128xf32>
    %86 = arith.mulf %77, %85 : vector<8x128xf32>
    %87 = arith.addf %84, %86 : vector<8x128xf32>
    %88 = math.tanh %87 : vector<8x128xf32>
    %cst_37 = arith.constant 1.000000e+00 : f32
    %89 = vector.broadcast %cst_37 : f32 to vector<8x128xf32>
    %90 = arith.subf %89, %83 : vector<8x128xf32>
    %91 = arith.mulf %90, %88 : vector<8x128xf32>
    %92 = arith.mulf %83, %42 : vector<8x128xf32>
    %93 = arith.addf %91, %92 : vector<8x128xf32>
    %94 = arith.truncf %93 : vector<8x128xf32> to vector<8x128xbf16>
    %c0_38 = arith.constant 0 : index
    %c0_39 = arith.constant 0 : index
    %95 = vector.load %arg7[%c0_38, %c0_39] : memref<128x128xbf16, #tpu.memory_space<vmem>>, vector<128x128xbf16>
    %cst_40 = arith.constant dense<0.000000e+00> : vector<8x128xf32>
    %96 = tpu.matmul %94, %95, %cst_40 {dimension_numbers = #tpu.dot_dimension_numbers<[1], [0], [0], [1], [0, 0, 1, 1], [], []>} : vector<8x128xbf16>, vector<128x128xbf16>, vector<8x128xf32> -> vector<8x128xf32>
    %97 = arith.addf %96, %8 : vector<8x128xf32>
    %cst_41 = arith.constant dense<0xFF800000> : vector<8xf32>
    %98 = vector.multi_reduction <maximumf>, %97, %cst_41 [1] : vector<8x128xf32> to vector<8xf32>
    %99 = vector.shape_cast %98 : vector<8xf32> to vector<8x1xf32>
    %100 = vector.broadcast %99 : vector<8x1xf32> to vector<8x128xf32>
    %101 = arith.subf %97, %100 : vector<8x128xf32>
    %102 = math.exp %101 : vector<8x128xf32>
    %cst_42 = arith.constant dense<0.000000e+00> : vector<8xf32>
    %103 = vector.multi_reduction <add>, %102, %cst_42 [1] : vector<8x128xf32> to vector<8xf32>
    %104 = vector.shape_cast %103 : vector<8xf32> to vector<8x1xf32>
    %105 = math.log %104 : vector<8x1xf32>
    %106 = arith.addf %99, %105 : vector<8x1xf32>
    %107 = vector.broadcast %106 : vector<8x1xf32> to vector<8x128xf32>
    %108 = arith.subf %97, %107 : vector<8x128xf32>
    %c1_43 = arith.constant 1 : index
    %c0_44 = arith.constant 0 : index
    %c0_45 = arith.constant 0 : index
    %109 = vector.load %arg9[%c1_43, %c0_44, %c0_45] : memref<8x8x128xf32, #tpu.memory_space<vmem>>, vector<1x8x128xf32>
    %110 = vector.shape_cast %109 : vector<1x8x128xf32> to vector<8x128xf32>
    %111 = vector.shape_cast %108 : vector<8x128xf32> to vector<1x8x128xf32>
    tpu.vector_store %arg9[%c1_43, %c0_44, %c0_45], %111 {strides = array<i32>} : memref<8x8x128xf32, #tpu.memory_space<vmem>>, vector<1x8x128xf32>,
    %c2 = arith.constant 2 : index
    %c0_46 = arith.constant 0 : index
    %c0_47 = arith.constant 0 : index
    %112 = vector.load %arg2[%c2, %c0_46, %c0_47] : memref<8x8x128xbf16, #tpu.memory_space<vmem>>, vector<1x8x128xbf16>
    %113 = vector.shape_cast %112 : vector<1x8x128xbf16> to vector<8x128xbf16>
    %cst_48 = arith.constant 0.000000e+00 : bf16
    %114 = vector.broadcast %cst_48 : bf16 to vector<8x128xbf16>
    %115 = arith.maximumf %113, %114 : vector<8x128xbf16>
    %c0_49 = arith.constant 0 : index
    %c0_50 = arith.constant 0 : index
    %116 = vector.load %arg4[%c0_49, %c0_50] : memref<128x512xbf16, #tpu.memory_space<vmem>>, vector<128x512xbf16>
    %cst_51 = arith.constant dense<0.000000e+00> : vector<8x512xf32>
    %117 = tpu.matmul %115, %116, %cst_51 {dimension_numbers = #tpu.dot_dimension_numbers<[1], [0], [0], [1], [0, 0, 1, 1], [], []>} : vector<8x128xbf16>, vector<128x512xbf16>, vector<8x512xf32> -> vector<8x512xf32>
    %118 = arith.truncf %93 : vector<8x128xf32> to vector<8x128xbf16>
    %c0_52 = arith.constant 0 : index
    %c0_53 = arith.constant 0 : index
    %119 = vector.load %arg5[%c0_52, %c0_53] : memref<128x512xbf16, #tpu.memory_space<vmem>>, vector<128x512xbf16>
    %cst_54 = arith.constant dense<0.000000e+00> : vector<8x512xf32>
    %120 = tpu.matmul %118, %119, %cst_54 {dimension_numbers = #tpu.dot_dimension_numbers<[1], [0], [0], [1], [0, 0, 1, 1], [], []>} : vector<8x128xbf16>, vector<128x512xbf16>, vector<8x512xf32> -> vector<8x512xf32>
    %121 = arith.addf %117, %120 : vector<8x512xf32>
    %122 = arith.addf %121, %5 : vector<8x512xf32>
    %123 = vector.extract_strided_slice %122 {offsets = [0, 0], sizes = [8, 128], strides = [1, 1]} : vector<8x512xf32> to vector<8x128xf32>
    %124 = arith.negf %123 : vector<8x128xf32>
    %125 = math.exp %124 : vector<8x128xf32>
    %cst_55 = arith.constant 1.000000e+00 : f32
    %126 = vector.broadcast %cst_55 : f32 to vector<8x128xf32>
    %127 = arith.addf %126, %125 : vector<8x128xf32>
    %128 = arith.divf %126, %127 : vector<8x128xf32>
    %129 = vector.extract_strided_slice %122 {offsets = [0, 128], sizes = [8, 128], strides = [1, 1]} : vector<8x512xf32> to vector<8x128xf32>
    %130 = arith.negf %129 : vector<8x128xf32>
    %131 = math.exp %130 : vector<8x128xf32>
    %cst_56 = arith.constant 1.000000e+00 : f32
    %132 = vector.broadcast %cst_56 : f32 to vector<8x128xf32>
    %133 = arith.addf %132, %131 : vector<8x128xf32>
    %134 = arith.divf %132, %133 : vector<8x128xf32>
    %135 = vector.extract_strided_slice %122 {offsets = [0, 256], sizes = [8, 128], strides = [1, 1]} : vector<8x512xf32> to vector<8x128xf32>
    %136 = vector.extract_strided_slice %122 {offsets = [0, 384], sizes = [8, 128], strides = [1, 1]} : vector<8x512xf32> to vector<8x128xf32>
    %137 = arith.mulf %128, %136 : vector<8x128xf32>
    %138 = arith.addf %135, %137 : vector<8x128xf32>
    %139 = math.tanh %138 : vector<8x128xf32>
    %cst_57 = arith.constant 1.000000e+00 : f32
    %140 = vector.broadcast %cst_57 : f32 to vector<8x128xf32>
    %141 = arith.subf %140, %134 : vector<8x128xf32>
    %142 = arith.mulf %141, %139 : vector<8x128xf32>
    %143 = arith.mulf %134, %93 : vector<8x128xf32>
    %144 = arith.addf %142, %143 : vector<8x128xf32>
    %145 = arith.truncf %144 : vector<8x128xf32> to vector<8x128xbf16>
    %c0_58 = arith.constant 0 : index
    %c0_59 = arith.constant 0 : index
    %146 = vector.load %arg7[%c0_58, %c0_59] : memref<128x128xbf16, #tpu.memory_space<vmem>>, vector<128x128xbf16>
    %cst_60 = arith.constant dense<0.000000e+00> : vector<8x128xf32>
    %147 = tpu.matmul %145, %146, %cst_60 {dimension_numbers = #tpu.dot_dimension_numbers<[1], [0], [0], [1], [0, 0, 1, 1], [], []>} : vector<8x128xbf16>, vector<128x128xbf16>, vector<8x128xf32> -> vector<8x128xf32>
    %148 = arith.addf %147, %8 : vector<8x128xf32>
    %cst_61 = arith.constant dense<0xFF800000> : vector<8xf32>
    %149 = vector.multi_reduction <maximumf>, %148, %cst_61 [1] : vector<8x128xf32> to vector<8xf32>
    %150 = vector.shape_cast %149 : vector<8xf32> to vector<8x1xf32>
    %151 = vector.broadcast %150 : vector<8x1xf32> to vector<8x128xf32>
    %152 = arith.subf %148, %151 : vector<8x128xf32>
    %153 = math.exp %152 : vector<8x128xf32>
    %cst_62 = arith.constant dense<0.000000e+00> : vector<8xf32>
    %154 = vector.multi_reduction <add>, %153, %cst_62 [1] : vector<8x128xf32> to vector<8xf32>
    %155 = vector.shape_cast %154 : vector<8xf32> to vector<8x1xf32>
    %156 = math.log %155 : vector<8x1xf32>
    %157 = arith.addf %150, %156 : vector<8x1xf32>
    %158 = vector.broadcast %157 : vector<8x1xf32> to vector<8x128xf32>
    %159 = arith.subf %148, %158 : vector<8x128xf32>
    %c2_63 = arith.constant 2 : index
    %c0_64 = arith.constant 0 : index
    %c0_65 = arith.constant 0 : index
    %160 = vector.load %arg9[%c2_63, %c0_64, %c0_65] : memref<8x8x128xf32, #tpu.memory_space<vmem>>, vector<1x8x128xf32>
    %161 = vector.shape_cast %160 : vector<1x8x128xf32> to vector<8x128xf32>
    %162 = vector.shape_cast %159 : vector<8x128xf32> to vector<1x8x128xf32>
    tpu.vector_store %arg9[%c2_63, %c0_64, %c0_65], %162 {strides = array<i32>} : memref<8x8x128xf32, #tpu.memory_space<vmem>>, vector<1x8x128xf32>,
    %c3 = arith.constant 3 : index
    %c0_66 = arith.constant 0 : index
    %c0_67 = arith.constant 0 : index
    %163 = vector.load %arg2[%c3, %c0_66, %c0_67] : memref<8x8x128xbf16, #tpu.memory_space<vmem>>, vector<1x8x128xbf16>
    %164 = vector.shape_cast %163 : vector<1x8x128xbf16> to vector<8x128xbf16>
    %cst_68 = arith.constant 0.000000e+00 : bf16
    %165 = vector.broadcast %cst_68 : bf16 to vector<8x128xbf16>
    %166 = arith.maximumf %164, %165 : vector<8x128xbf16>
    %c0_69 = arith.constant 0 : index
    %c0_70 = arith.constant 0 : index
    %167 = vector.load %arg4[%c0_69, %c0_70] : memref<128x512xbf16, #tpu.memory_space<vmem>>, vector<128x512xbf16>
    %cst_71 = arith.constant dense<0.000000e+00> : vector<8x512xf32>
    %168 = tpu.matmul %166, %167, %cst_71 {dimension_numbers = #tpu.dot_dimension_numbers<[1], [0], [0], [1], [0, 0, 1, 1], [], []>} : vector<8x128xbf16>, vector<128x512xbf16>, vector<8x512xf32> -> vector<8x512xf32>
    %169 = arith.truncf %144 : vector<8x128xf32> to vector<8x128xbf16>
    %c0_72 = arith.constant 0 : index
    %c0_73 = arith.constant 0 : index
    %170 = vector.load %arg5[%c0_72, %c0_73] : memref<128x512xbf16, #tpu.memory_space<vmem>>, vector<128x512xbf16>
    %cst_74 = arith.constant dense<0.000000e+00> : vector<8x512xf32>
    %171 = tpu.matmul %169, %170, %cst_74 {dimension_numbers = #tpu.dot_dimension_numbers<[1], [0], [0], [1], [0, 0, 1, 1], [], []>} : vector<8x128xbf16>, vector<128x512xbf16>, vector<8x512xf32> -> vector<8x512xf32>
    %172 = arith.addf %168, %171 : vector<8x512xf32>
    %173 = arith.addf %172, %5 : vector<8x512xf32>
    %174 = vector.extract_strided_slice %173 {offsets = [0, 0], sizes = [8, 128], strides = [1, 1]} : vector<8x512xf32> to vector<8x128xf32>
    %175 = arith.negf %174 : vector<8x128xf32>
    %176 = math.exp %175 : vector<8x128xf32>
    %cst_75 = arith.constant 1.000000e+00 : f32
    %177 = vector.broadcast %cst_75 : f32 to vector<8x128xf32>
    %178 = arith.addf %177, %176 : vector<8x128xf32>
    %179 = arith.divf %177, %178 : vector<8x128xf32>
    %180 = vector.extract_strided_slice %173 {offsets = [0, 128], sizes = [8, 128], strides = [1, 1]} : vector<8x512xf32> to vector<8x128xf32>
    %181 = arith.negf %180 : vector<8x128xf32>
    %182 = math.exp %181 : vector<8x128xf32>
    %cst_76 = arith.constant 1.000000e+00 : f32
    %183 = vector.broadcast %cst_76 : f32 to vector<8x128xf32>
    %184 = arith.addf %183, %182 : vector<8x128xf32>
    %185 = arith.divf %183, %184 : vector<8x128xf32>
    %186 = vector.extract_strided_slice %173 {offsets = [0, 256], sizes = [8, 128], strides = [1, 1]} : vector<8x512xf32> to vector<8x128xf32>
    %187 = vector.extract_strided_slice %173 {offsets = [0, 384], sizes = [8, 128], strides = [1, 1]} : vector<8x512xf32> to vector<8x128xf32>
    %188 = arith.mulf %179, %187 : vector<8x128xf32>
    %189 = arith.addf %186, %188 : vector<8x128xf32>
    %190 = math.tanh %189 : vector<8x128xf32>
    %cst_77 = arith.constant 1.000000e+00 : f32
    %191 = vector.broadcast %cst_77 : f32 to vector<8x128xf32>
    %192 = arith.subf %191, %185 : vector<8x128xf32>
    %193 = arith.mulf %192, %190 : vector<8x128xf32>
    %194 = arith.mulf %185, %144 : vector<8x128xf32>
    %195 = arith.addf %193, %194 : vector<8x128xf32>
    %196 = arith.truncf %195 : vector<8x128xf32> to vector<8x128xbf16>
    %c0_78 = arith.constant 0 : index
    %c0_79 = arith.constant 0 : index
    %197 = vector.load %arg7[%c0_78, %c0_79] : memref<128x128xbf16, #tpu.memory_space<vmem>>, vector<128x128xbf16>
    %cst_80 = arith.constant dense<0.000000e+00> : vector<8x128xf32>
    %198 = tpu.matmul %196, %197, %cst_80 {dimension_numbers = #tpu.dot_dimension_numbers<[1], [0], [0], [1], [0, 0, 1, 1], [], []>} : vector<8x128xbf16>, vector<128x128xbf16>, vector<8x128xf32> -> vector<8x128xf32>
    %199 = arith.addf %198, %8 : vector<8x128xf32>
    %cst_81 = arith.constant dense<0xFF800000> : vector<8xf32>
    %200 = vector.multi_reduction <maximumf>, %199, %cst_81 [1] : vector<8x128xf32> to vector<8xf32>
    %201 = vector.shape_cast %200 : vector<8xf32> to vector<8x1xf32>
    %202 = vector.broadcast %201 : vector<8x1xf32> to vector<8x128xf32>
    %203 = arith.subf %199, %202 : vector<8x128xf32>
    %204 = math.exp %203 : vector<8x128xf32>
    %cst_82 = arith.constant dense<0.000000e+00> : vector<8xf32>
    %205 = vector.multi_reduction <add>, %204, %cst_82 [1] : vector<8x128xf32> to vector<8xf32>
    %206 = vector.shape_cast %205 : vector<8xf32> to vector<8x1xf32>
    %207 = math.log %206 : vector<8x1xf32>
    %208 = arith.addf %201, %207 : vector<8x1xf32>
    %209 = vector.broadcast %208 : vector<8x1xf32> to vector<8x128xf32>
    %210 = arith.subf %199, %209 : vector<8x128xf32>
    %c3_83 = arith.constant 3 : index
    %c0_84 = arith.constant 0 : index
    %c0_85 = arith.constant 0 : index
    %211 = vector.load %arg9[%c3_83, %c0_84, %c0_85] : memref<8x8x128xf32, #tpu.memory_space<vmem>>, vector<1x8x128xf32>
    %212 = vector.shape_cast %211 : vector<1x8x128xf32> to vector<8x128xf32>
    %213 = vector.shape_cast %210 : vector<8x128xf32> to vector<1x8x128xf32>
    tpu.vector_store %arg9[%c3_83, %c0_84, %c0_85], %213 {strides = array<i32>} : memref<8x8x128xf32, #tpu.memory_space<vmem>>, vector<1x8x128xf32>,
    %c4 = arith.constant 4 : index
    %c0_86 = arith.constant 0 : index
    %c0_87 = arith.constant 0 : index
    %214 = vector.load %arg2[%c4, %c0_86, %c0_87] : memref<8x8x128xbf16, #tpu.memory_space<vmem>>, vector<1x8x128xbf16>
    %215 = vector.shape_cast %214 : vector<1x8x128xbf16> to vector<8x128xbf16>
    %cst_88 = arith.constant 0.000000e+00 : bf16
    %216 = vector.broadcast %cst_88 : bf16 to vector<8x128xbf16>
    %217 = arith.maximumf %215, %216 : vector<8x128xbf16>
    %c0_89 = arith.constant 0 : index
    %c0_90 = arith.constant 0 : index
    %218 = vector.load %arg4[%c0_89, %c0_90] : memref<128x512xbf16, #tpu.memory_space<vmem>>, vector<128x512xbf16>
    %cst_91 = arith.constant dense<0.000000e+00> : vector<8x512xf32>
    %219 = tpu.matmul %217, %218, %cst_91 {dimension_numbers = #tpu.dot_dimension_numbers<[1], [0], [0], [1], [0, 0, 1, 1], [], []>} : vector<8x128xbf16>, vector<128x512xbf16>, vector<8x512xf32> -> vector<8x512xf32>
    %220 = arith.truncf %195 : vector<8x128xf32> to vector<8x128xbf16>
    %c0_92 = arith.constant 0 : index
    %c0_93 = arith.constant 0 : index
    %221 = vector.load %arg5[%c0_92, %c0_93] : memref<128x512xbf16, #tpu.memory_space<vmem>>, vector<128x512xbf16>
    %cst_94 = arith.constant dense<0.000000e+00> : vector<8x512xf32>
    %222 = tpu.matmul %220, %221, %cst_94 {dimension_numbers = #tpu.dot_dimension_numbers<[1], [0], [0], [1], [0, 0, 1, 1], [], []>} : vector<8x128xbf16>, vector<128x512xbf16>, vector<8x512xf32> -> vector<8x512xf32>
    %223 = arith.addf %219, %222 : vector<8x512xf32>
    %224 = arith.addf %223, %5 : vector<8x512xf32>
    %225 = vector.extract_strided_slice %224 {offsets = [0, 0], sizes = [8, 128], strides = [1, 1]} : vector<8x512xf32> to vector<8x128xf32>
    %226 = arith.negf %225 : vector<8x128xf32>
    %227 = math.exp %226 : vector<8x128xf32>
    %cst_95 = arith.constant 1.000000e+00 : f32
    %228 = vector.broadcast %cst_95 : f32 to vector<8x128xf32>
    %229 = arith.addf %228, %227 : vector<8x128xf32>
    %230 = arith.divf %228, %229 : vector<8x128xf32>
    %231 = vector.extract_strided_slice %224 {offsets = [0, 128], sizes = [8, 128], strides = [1, 1]} : vector<8x512xf32> to vector<8x128xf32>
    %232 = arith.negf %231 : vector<8x128xf32>
    %233 = math.exp %232 : vector<8x128xf32>
    %cst_96 = arith.constant 1.000000e+00 : f32
    %234 = vector.broadcast %cst_96 : f32 to vector<8x128xf32>
    %235 = arith.addf %234, %233 : vector<8x128xf32>
    %236 = arith.divf %234, %235 : vector<8x128xf32>
    %237 = vector.extract_strided_slice %224 {offsets = [0, 256], sizes = [8, 128], strides = [1, 1]} : vector<8x512xf32> to vector<8x128xf32>
    %238 = vector.extract_strided_slice %224 {offsets = [0, 384], sizes = [8, 128], strides = [1, 1]} : vector<8x512xf32> to vector<8x128xf32>
    %239 = arith.mulf %230, %238 : vector<8x128xf32>
    %240 = arith.addf %237, %239 : vector<8x128xf32>
    %241 = math.tanh %240 : vector<8x128xf32>
    %cst_97 = arith.constant 1.000000e+00 : f32
    %242 = vector.broadcast %cst_97 : f32 to vector<8x128xf32>
    %243 = arith.subf %242, %236 : vector<8x128xf32>
    %244 = arith.mulf %243, %241 : vector<8x128xf32>
    %245 = arith.mulf %236, %195 : vector<8x128xf32>
    %246 = arith.addf %244, %245 : vector<8x128xf32>
    %247 = arith.truncf %246 : vector<8x128xf32> to vector<8x128xbf16>
    %c0_98 = arith.constant 0 : index
    %c0_99 = arith.constant 0 : index
    %248 = vector.load %arg7[%c0_98, %c0_99] : memref<128x128xbf16, #tpu.memory_space<vmem>>, vector<128x128xbf16>
    %cst_100 = arith.constant dense<0.000000e+00> : vector<8x128xf32>
    %249 = tpu.matmul %247, %248, %cst_100 {dimension_numbers = #tpu.dot_dimension_numbers<[1], [0], [0], [1], [0, 0, 1, 1], [], []>} : vector<8x128xbf16>, vector<128x128xbf16>, vector<8x128xf32> -> vector<8x128xf32>
    %250 = arith.addf %249, %8 : vector<8x128xf32>
    %cst_101 = arith.constant dense<0xFF800000> : vector<8xf32>
    %251 = vector.multi_reduction <maximumf>, %250, %cst_101 [1] : vector<8x128xf32> to vector<8xf32>
    %252 = vector.shape_cast %251 : vector<8xf32> to vector<8x1xf32>
    %253 = vector.broadcast %252 : vector<8x1xf32> to vector<8x128xf32>
    %254 = arith.subf %250, %253 : vector<8x128xf32>
    %255 = math.exp %254 : vector<8x128xf32>
    %cst_102 = arith.constant dense<0.000000e+00> : vector<8xf32>
    %256 = vector.multi_reduction <add>, %255, %cst_102 [1] : vector<8x128xf32> to vector<8xf32>
    %257 = vector.shape_cast %256 : vector<8xf32> to vector<8x1xf32>
    %258 = math.log %257 : vector<8x1xf32>
    %259 = arith.addf %252, %258 : vector<8x1xf32>
    %260 = vector.broadcast %259 : vector<8x1xf32> to vector<8x128xf32>
    %261 = arith.subf %250, %260 : vector<8x128xf32>
    %c4_103 = arith.constant 4 : index
    %c0_104 = arith.constant 0 : index
    %c0_105 = arith.constant 0 : index
    %262 = vector.load %arg9[%c4_103, %c0_104, %c0_105] : memref<8x8x128xf32, #tpu.memory_space<vmem>>, vector<1x8x128xf32>
    %263 = vector.shape_cast %262 : vector<1x8x128xf32> to vector<8x128xf32>
    %264 = vector.shape_cast %261 : vector<8x128xf32> to vector<1x8x128xf32>
    tpu.vector_store %arg9[%c4_103, %c0_104, %c0_105], %264 {strides = array<i32>} : memref<8x8x128xf32, #tpu.memory_space<vmem>>, vector<1x8x128xf32>,
    %c5 = arith.constant 5 : index
    %c0_106 = arith.constant 0 : index
    %c0_107 = arith.constant 0 : index
    %265 = vector.load %arg2[%c5, %c0_106, %c0_107] : memref<8x8x128xbf16, #tpu.memory_space<vmem>>, vector<1x8x128xbf16>
    %266 = vector.shape_cast %265 : vector<1x8x128xbf16> to vector<8x128xbf16>
    %cst_108 = arith.constant 0.000000e+00 : bf16
    %267 = vector.broadcast %cst_108 : bf16 to vector<8x128xbf16>
    %268 = arith.maximumf %266, %267 : vector<8x128xbf16>
    %c0_109 = arith.constant 0 : index
    %c0_110 = arith.constant 0 : index
    %269 = vector.load %arg4[%c0_109, %c0_110] : memref<128x512xbf16, #tpu.memory_space<vmem>>, vector<128x512xbf16>
    %cst_111 = arith.constant dense<0.000000e+00> : vector<8x512xf32>
    %270 = tpu.matmul %268, %269, %cst_111 {dimension_numbers = #tpu.dot_dimension_numbers<[1], [0], [0], [1], [0, 0, 1, 1], [], []>} : vector<8x128xbf16>, vector<128x512xbf16>, vector<8x512xf32> -> vector<8x512xf32>
    %271 = arith.truncf %246 : vector<8x128xf32> to vector<8x128xbf16>
    %c0_112 = arith.constant 0 : index
    %c0_113 = arith.constant 0 : index
    %272 = vector.load %arg5[%c0_112, %c0_113] : memref<128x512xbf16, #tpu.memory_space<vmem>>, vector<128x512xbf16>
    %cst_114 = arith.constant dense<0.000000e+00> : vector<8x512xf32>
    %273 = tpu.matmul %271, %272, %cst_114 {dimension_numbers = #tpu.dot_dimension_numbers<[1], [0], [0], [1], [0, 0, 1, 1], [], []>} : vector<8x128xbf16>, vector<128x512xbf16>, vector<8x512xf32> -> vector<8x512xf32>
    %274 = arith.addf %270, %273 : vector<8x512xf32>
    %275 = arith.addf %274, %5 : vector<8x512xf32>
    %276 = vector.extract_strided_slice %275 {offsets = [0, 0], sizes = [8, 128], strides = [1, 1]} : vector<8x512xf32> to vector<8x128xf32>
    %277 = arith.negf %276 : vector<8x128xf32>
    %278 = math.exp %277 : vector<8x128xf32>
    %cst_115 = arith.constant 1.000000e+00 : f32
    %279 = vector.broadcast %cst_115 : f32 to vector<8x128xf32>
    %280 = arith.addf %279, %278 : vector<8x128xf32>
    %281 = arith.divf %279, %280 : vector<8x128xf32>
    %282 = vector.extract_strided_slice %275 {offsets = [0, 128], sizes = [8, 128], strides = [1, 1]} : vector<8x512xf32> to vector<8x128xf32>
    %283 = arith.negf %282 : vector<8x128xf32>
    %284 = math.exp %283 : vector<8x128xf32>
    %cst_116 = arith.constant 1.000000e+00 : f32
    %285 = vector.broadcast %cst_116 : f32 to vector<8x128xf32>
    %286 = arith.addf %285, %284 : vector<8x128xf32>
    %287 = arith.divf %285, %286 : vector<8x128xf32>
    %288 = vector.extract_strided_slice %275 {offsets = [0, 256], sizes = [8, 128], strides = [1, 1]} : vector<8x512xf32> to vector<8x128xf32>
    %289 = vector.extract_strided_slice %275 {offsets = [0, 384], sizes = [8, 128], strides = [1, 1]} : vector<8x512xf32> to vector<8x128xf32>
    %290 = arith.mulf %281, %289 : vector<8x128xf32>
    %291 = arith.addf %288, %290 : vector<8x128xf32>
    %292 = math.tanh %291 : vector<8x128xf32>
    %cst_117 = arith.constant 1.000000e+00 : f32
    %293 = vector.broadcast %cst_117 : f32 to vector<8x128xf32>
    %294 = arith.subf %293, %287 : vector<8x128xf32>
    %295 = arith.mulf %294, %292 : vector<8x128xf32>
    %296 = arith.mulf %287, %246 : vector<8x128xf32>
    %297 = arith.addf %295, %296 : vector<8x128xf32>
    %298 = arith.truncf %297 : vector<8x128xf32> to vector<8x128xbf16>
    %c0_118 = arith.constant 0 : index
    %c0_119 = arith.constant 0 : index
    %299 = vector.load %arg7[%c0_118, %c0_119] : memref<128x128xbf16, #tpu.memory_space<vmem>>, vector<128x128xbf16>
    %cst_120 = arith.constant dense<0.000000e+00> : vector<8x128xf32>
    %300 = tpu.matmul %298, %299, %cst_120 {dimension_numbers = #tpu.dot_dimension_numbers<[1], [0], [0], [1], [0, 0, 1, 1], [], []>} : vector<8x128xbf16>, vector<128x128xbf16>, vector<8x128xf32> -> vector<8x128xf32>
    %301 = arith.addf %300, %8 : vector<8x128xf32>
    %cst_121 = arith.constant dense<0xFF800000> : vector<8xf32>
    %302 = vector.multi_reduction <maximumf>, %301, %cst_121 [1] : vector<8x128xf32> to vector<8xf32>
    %303 = vector.shape_cast %302 : vector<8xf32> to vector<8x1xf32>
    %304 = vector.broadcast %303 : vector<8x1xf32> to vector<8x128xf32>
    %305 = arith.subf %301, %304 : vector<8x128xf32>
    %306 = math.exp %305 : vector<8x128xf32>
    %cst_122 = arith.constant dense<0.000000e+00> : vector<8xf32>
    %307 = vector.multi_reduction <add>, %306, %cst_122 [1] : vector<8x128xf32> to vector<8xf32>
    %308 = vector.shape_cast %307 : vector<8xf32> to vector<8x1xf32>
    %309 = math.log %308 : vector<8x1xf32>
    %310 = arith.addf %303, %309 : vector<8x1xf32>
    %311 = vector.broadcast %310 : vector<8x1xf32> to vector<8x128xf32>
    %312 = arith.subf %301, %311 : vector<8x128xf32>
    %c5_123 = arith.constant 5 : index
    %c0_124 = arith.constant 0 : index
    %c0_125 = arith.constant 0 : index
    %313 = vector.load %arg9[%c5_123, %c0_124, %c0_125] : memref<8x8x128xf32, #tpu.memory_space<vmem>>, vector<1x8x128xf32>
    %314 = vector.shape_cast %313 : vector<1x8x128xf32> to vector<8x128xf32>
    %315 = vector.shape_cast %312 : vector<8x128xf32> to vector<1x8x128xf32>
    tpu.vector_store %arg9[%c5_123, %c0_124, %c0_125], %315 {strides = array<i32>} : memref<8x8x128xf32, #tpu.memory_space<vmem>>, vector<1x8x128xf32>,
    %c6 = arith.constant 6 : index
    %c0_126 = arith.constant 0 : index
    %c0_127 = arith.constant 0 : index
    %316 = vector.load %arg2[%c6, %c0_126, %c0_127] : memref<8x8x128xbf16, #tpu.memory_space<vmem>>, vector<1x8x128xbf16>
    %317 = vector.shape_cast %316 : vector<1x8x128xbf16> to vector<8x128xbf16>
    %cst_128 = arith.constant 0.000000e+00 : bf16
    %318 = vector.broadcast %cst_128 : bf16 to vector<8x128xbf16>
    %319 = arith.maximumf %317, %318 : vector<8x128xbf16>
    %c0_129 = arith.constant 0 : index
    %c0_130 = arith.constant 0 : index
    %320 = vector.load %arg4[%c0_129, %c0_130] : memref<128x512xbf16, #tpu.memory_space<vmem>>, vector<128x512xbf16>
    %cst_131 = arith.constant dense<0.000000e+00> : vector<8x512xf32>
    %321 = tpu.matmul %319, %320, %cst_131 {dimension_numbers = #tpu.dot_dimension_numbers<[1], [0], [0], [1], [0, 0, 1, 1], [], []>} : vector<8x128xbf16>, vector<128x512xbf16>, vector<8x512xf32> -> vector<8x512xf32>
    %322 = arith.truncf %297 : vector<8x128xf32> to vector<8x128xbf16>
    %c0_132 = arith.constant 0 : index
    %c0_133 = arith.constant 0 : index
    %323 = vector.load %arg5[%c0_132, %c0_133] : memref<128x512xbf16, #tpu.memory_space<vmem>>, vector<128x512xbf16>
    %cst_134 = arith.constant dense<0.000000e+00> : vector<8x512xf32>
    %324 = tpu.matmul %322, %323, %cst_134 {dimension_numbers = #tpu.dot_dimension_numbers<[1], [0], [0], [1], [0, 0, 1, 1], [], []>} : vector<8x128xbf16>, vector<128x512xbf16>, vector<8x512xf32> -> vector<8x512xf32>
    %325 = arith.addf %321, %324 : vector<8x512xf32>
    %326 = arith.addf %325, %5 : vector<8x512xf32>
    %327 = vector.extract_strided_slice %326 {offsets = [0, 0], sizes = [8, 128], strides = [1, 1]} : vector<8x512xf32> to vector<8x128xf32>
    %328 = arith.negf %327 : vector<8x128xf32>
    %329 = math.exp %328 : vector<8x128xf32>
    %cst_135 = arith.constant 1.000000e+00 : f32
    %330 = vector.broadcast %cst_135 : f32 to vector<8x128xf32>
    %331 = arith.addf %330, %329 : vector<8x128xf32>
    %332 = arith.divf %330, %331 : vector<8x128xf32>
    %333 = vector.extract_strided_slice %326 {offsets = [0, 128], sizes = [8, 128], strides = [1, 1]} : vector<8x512xf32> to vector<8x128xf32>
    %334 = arith.negf %333 : vector<8x128xf32>
    %335 = math.exp %334 : vector<8x128xf32>
    %cst_136 = arith.constant 1.000000e+00 : f32
    %336 = vector.broadcast %cst_136 : f32 to vector<8x128xf32>
    %337 = arith.addf %336, %335 : vector<8x128xf32>
    %338 = arith.divf %336, %337 : vector<8x128xf32>
    %339 = vector.extract_strided_slice %326 {offsets = [0, 256], sizes = [8, 128], strides = [1, 1]} : vector<8x512xf32> to vector<8x128xf32>
    %340 = vector.extract_strided_slice %326 {offsets = [0, 384], sizes = [8, 128], strides = [1, 1]} : vector<8x512xf32> to vector<8x128xf32>
    %341 = arith.mulf %332, %340 : vector<8x128xf32>
    %342 = arith.addf %339, %341 : vector<8x128xf32>
    %343 = math.tanh %342 : vector<8x128xf32>
    %cst_137 = arith.constant 1.000000e+00 : f32
    %344 = vector.broadcast %cst_137 : f32 to vector<8x128xf32>
    %345 = arith.subf %344, %338 : vector<8x128xf32>
    %346 = arith.mulf %345, %343 : vector<8x128xf32>
    %347 = arith.mulf %338, %297 : vector<8x128xf32>
    %348 = arith.addf %346, %347 : vector<8x128xf32>
    %349 = arith.truncf %348 : vector<8x128xf32> to vector<8x128xbf16>
    %c0_138 = arith.constant 0 : index
    %c0_139 = arith.constant 0 : index
    %350 = vector.load %arg7[%c0_138, %c0_139] : memref<128x128xbf16, #tpu.memory_space<vmem>>, vector<128x128xbf16>
    %cst_140 = arith.constant dense<0.000000e+00> : vector<8x128xf32>
    %351 = tpu.matmul %349, %350, %cst_140 {dimension_numbers = #tpu.dot_dimension_numbers<[1], [0], [0], [1], [0, 0, 1, 1], [], []>} : vector<8x128xbf16>, vector<128x128xbf16>, vector<8x128xf32> -> vector<8x128xf32>
    %352 = arith.addf %351, %8 : vector<8x128xf32>
    %cst_141 = arith.constant dense<0xFF800000> : vector<8xf32>
    %353 = vector.multi_reduction <maximumf>, %352, %cst_141 [1] : vector<8x128xf32> to vector<8xf32>
    %354 = vector.shape_cast %353 : vector<8xf32> to vector<8x1xf32>
    %355 = vector.broadcast %354 : vector<8x1xf32> to vector<8x128xf32>
    %356 = arith.subf %352, %355 : vector<8x128xf32>
    %357 = math.exp %356 : vector<8x128xf32>
    %cst_142 = arith.constant dense<0.000000e+00> : vector<8xf32>
    %358 = vector.multi_reduction <add>, %357, %cst_142 [1] : vector<8x128xf32> to vector<8xf32>
    %359 = vector.shape_cast %358 : vector<8xf32> to vector<8x1xf32>
    %360 = math.log %359 : vector<8x1xf32>
    %361 = arith.addf %354, %360 : vector<8x1xf32>
    %362 = vector.broadcast %361 : vector<8x1xf32> to vector<8x128xf32>
    %363 = arith.subf %352, %362 : vector<8x128xf32>
    %c6_143 = arith.constant 6 : index
    %c0_144 = arith.constant 0 : index
    %c0_145 = arith.constant 0 : index
    %364 = vector.load %arg9[%c6_143, %c0_144, %c0_145] : memref<8x8x128xf32, #tpu.memory_space<vmem>>, vector<1x8x128xf32>
    %365 = vector.shape_cast %364 : vector<1x8x128xf32> to vector<8x128xf32>
    %366 = vector.shape_cast %363 : vector<8x128xf32> to vector<1x8x128xf32>
    tpu.vector_store %arg9[%c6_143, %c0_144, %c0_145], %366 {strides = array<i32>} : memref<8x8x128xf32, #tpu.memory_space<vmem>>, vector<1x8x128xf32>,
    %c7 = arith.constant 7 : index
    %c0_146 = arith.constant 0 : index
    %c0_147 = arith.constant 0 : index
    %367 = vector.load %arg2[%c7, %c0_146, %c0_147] : memref<8x8x128xbf16, #tpu.memory_space<vmem>>, vector<1x8x128xbf16>
    %368 = vector.shape_cast %367 : vector<1x8x128xbf16> to vector<8x128xbf16>
    %cst_148 = arith.constant 0.000000e+00 : bf16
    %369 = vector.broadcast %cst_148 : bf16 to vector<8x128xbf16>
    %370 = arith.maximumf %368, %369 : vector<8x128xbf16>
    %c0_149 = arith.constant 0 : index
    %c0_150 = arith.constant 0 : index
    %371 = vector.load %arg4[%c0_149, %c0_150] : memref<128x512xbf16, #tpu.memory_space<vmem>>, vector<128x512xbf16>
    %cst_151 = arith.constant dense<0.000000e+00> : vector<8x512xf32>
    %372 = tpu.matmul %370, %371, %cst_151 {dimension_numbers = #tpu.dot_dimension_numbers<[1], [0], [0], [1], [0, 0, 1, 1], [], []>} : vector<8x128xbf16>, vector<128x512xbf16>, vector<8x512xf32> -> vector<8x512xf32>
    %373 = arith.truncf %348 : vector<8x128xf32> to vector<8x128xbf16>
    %c0_152 = arith.constant 0 : index
    %c0_153 = arith.constant 0 : index
    %374 = vector.load %arg5[%c0_152, %c0_153] : memref<128x512xbf16, #tpu.memory_space<vmem>>, vector<128x512xbf16>
    %cst_154 = arith.constant dense<0.000000e+00> : vector<8x512xf32>
    %375 = tpu.matmul %373, %374, %cst_154 {dimension_numbers = #tpu.dot_dimension_numbers<[1], [0], [0], [1], [0, 0, 1, 1], [], []>} : vector<8x128xbf16>, vector<128x512xbf16>, vector<8x512xf32> -> vector<8x512xf32>
    %376 = arith.addf %372, %375 : vector<8x512xf32>
    %377 = arith.addf %376, %5 : vector<8x512xf32>
    %378 = vector.extract_strided_slice %377 {offsets = [0, 0], sizes = [8, 128], strides = [1, 1]} : vector<8x512xf32> to vector<8x128xf32>
    %379 = arith.negf %378 : vector<8x128xf32>
    %380 = math.exp %379 : vector<8x128xf32>
    %cst_155 = arith.constant 1.000000e+00 : f32
    %381 = vector.broadcast %cst_155 : f32 to vector<8x128xf32>
    %382 = arith.addf %381, %380 : vector<8x128xf32>
    %383 = arith.divf %381, %382 : vector<8x128xf32>
    %384 = vector.extract_strided_slice %377 {offsets = [0, 128], sizes = [8, 128], strides = [1, 1]} : vector<8x512xf32> to vector<8x128xf32>
    %385 = arith.negf %384 : vector<8x128xf32>
    %386 = math.exp %385 : vector<8x128xf32>
    %cst_156 = arith.constant 1.000000e+00 : f32
    %387 = vector.broadcast %cst_156 : f32 to vector<8x128xf32>
    %388 = arith.addf %387, %386 : vector<8x128xf32>
    %389 = arith.divf %387, %388 : vector<8x128xf32>
    %390 = vector.extract_strided_slice %377 {offsets = [0, 256], sizes = [8, 128], strides = [1, 1]} : vector<8x512xf32> to vector<8x128xf32>
    %391 = vector.extract_strided_slice %377 {offsets = [0, 384], sizes = [8, 128], strides = [1, 1]} : vector<8x512xf32> to vector<8x128xf32>
    %392 = arith.mulf %383, %391 : vector<8x128xf32>
    %393 = arith.addf %390, %392 : vector<8x128xf32>
    %394 = math.tanh %393 : vector<8x128xf32>
    %cst_157 = arith.constant 1.000000e+00 : f32
    %395 = vector.broadcast %cst_157 : f32 to vector<8x128xf32>
    %396 = arith.subf %395, %389 : vector<8x128xf32>
    %397 = arith.mulf %396, %394 : vector<8x128xf32>
    %398 = arith.mulf %389, %348 : vector<8x128xf32>
    %399 = arith.addf %397, %398 : vector<8x128xf32>
    %400 = arith.truncf %399 : vector<8x128xf32> to vector<8x128xbf16>
    %c0_158 = arith.constant 0 : index
    %c0_159 = arith.constant 0 : index
    %401 = vector.load %arg7[%c0_158, %c0_159] : memref<128x128xbf16, #tpu.memory_space<vmem>>, vector<128x128xbf16>
    %cst_160 = arith.constant dense<0.000000e+00> : vector<8x128xf32>
    %402 = tpu.matmul %400, %401, %cst_160 {dimension_numbers = #tpu.dot_dimension_numbers<[1], [0], [0], [1], [0, 0, 1, 1], [], []>} : vector<8x128xbf16>, vector<128x128xbf16>, vector<8x128xf32> -> vector<8x128xf32>
    %403 = arith.addf %402, %8 : vector<8x128xf32>
    %cst_161 = arith.constant dense<0xFF800000> : vector<8xf32>
    %404 = vector.multi_reduction <maximumf>, %403, %cst_161 [1] : vector<8x128xf32> to vector<8xf32>
    %405 = vector.shape_cast %404 : vector<8xf32> to vector<8x1xf32>
    %406 = vector.broadcast %405 : vector<8x1xf32> to vector<8x128xf32>
    %407 = arith.subf %403, %406 : vector<8x128xf32>
    %408 = math.exp %407 : vector<8x128xf32>
    %cst_162 = arith.constant dense<0.000000e+00> : vector<8xf32>
    %409 = vector.multi_reduction <add>, %408, %cst_162 [1] : vector<8x128xf32> to vector<8xf32>
    %410 = vector.shape_cast %409 : vector<8xf32> to vector<8x1xf32>
    %411 = math.log %410 : vector<8x1xf32>
    %412 = arith.addf %405, %411 : vector<8x1xf32>
    %413 = vector.broadcast %412 : vector<8x1xf32> to vector<8x128xf32>
    %414 = arith.subf %403, %413 : vector<8x128xf32>
    %c7_163 = arith.constant 7 : index
    %c0_164 = arith.constant 0 : index
    %c0_165 = arith.constant 0 : index
    %415 = vector.load %arg9[%c7_163, %c0_164, %c0_165] : memref<8x8x128xf32, #tpu.memory_space<vmem>>, vector<1x8x128xf32>
    %416 = vector.shape_cast %415 : vector<1x8x128xf32> to vector<8x128xf32>
    %417 = vector.shape_cast %414 : vector<8x128xf32> to vector<1x8x128xf32>
    tpu.vector_store %arg9[%c7_163, %c0_164, %c0_165], %417 {strides = array<i32>} : memref<8x8x128xf32, #tpu.memory_space<vmem>>, vector<1x8x128xf32>,
    %c8_i32 = arith.constant 8 : i32
    %418 = arith.muli %arg1, %c8_i32 : i32
    %c7_i32 = arith.constant 7 : i32
    %419 = arith.addi %418, %c7_i32 : i32
    %c15_i32 = arith.constant 15 : i32
    %420 = arith.cmpi eq, %419, %c15_i32 : i32
    %421 = arith.extui %420 : i1 to i32
    %c0_i32_166 = arith.constant 0 : i32
    %422 = arith.cmpi ne, %421, %c0_i32_166 : i32
    scf.if %422 {
      %c0_169 = arith.constant 0 : index
      %c0_170 = arith.constant 0 : index
      %424 = vector.load %arg10[%c0_169, %c0_170] : memref<8x128xf32, #tpu.memory_space<vmem>>, vector<8x128xf32>
      tpu.vector_store %arg10[%c0_169, %c0_170], %399 {strides = array<i32>} : memref<8x128xf32, #tpu.memory_space<vmem>>, vector<8x128xf32>,
    } else {
    }
    %c0_167 = arith.constant 0 : index
    %c0_168 = arith.constant 0 : index
    %423 = vector.load %arg11[%c0_167, %c0_168] : memref<8x128xf32, #tpu.memory_space<vmem>>, vector<8x128xf32>
    tpu.vector_store %arg11[%c0_167, %c0_168], %399 {strides = array<i32>} : memref<8x128xf32, #tpu.memory_space<vmem>>, vector<8x128xf32>,
    return
  }
  func.func @transform_0(%arg0: i32, %arg1: i32) -> (i32, i32, i32) {
    %c0_i32 = arith.constant 0 : i32
    %c0_i32_0 = arith.constant 0 : i32
    return %arg1, %arg0, %c0_i32 : i32, i32, i32
  }
  func.func @transform_1(%arg0: i32, %arg1: i32) -> (i32, i32) {
    %c0_i32 = arith.constant 0 : i32
    %c0_i32_0 = arith.constant 0 : i32
    return %arg0, %c0_i32 : i32, i32
  }
  func.func @transform_2(%arg0: i32, %arg1: i32) -> (i32, i32) {
    %c0_i32 = arith.constant 0 : i32
    %c0_i32_0 = arith.constant 0 : i32
    %c0_i32_1 = arith.constant 0 : i32
    return %c0_i32, %c0_i32_0 : i32, i32
  }
  func.func @transform_3(%arg0: i32, %arg1: i32) -> (i32, i32) {
    %c0_i32 = arith.constant 0 : i32
    %c0_i32_0 = arith.constant 0 : i32
    %c0_i32_1 = arith.constant 0 : i32
    return %c0_i32, %c0_i32_0 : i32, i32
  }
  func.func @transform_4(%arg0: i32, %arg1: i32) -> (i32, i32) {
    %c0_i32 = arith.constant 0 : i32
    %c0_i32_0 = arith.constant 0 : i32
    %c0_i32_1 = arith.constant 0 : i32
    return %c0_i32, %c0_i32_0 : i32, i32
  }
  func.func @transform_5(%arg0: i32, %arg1: i32) -> (i32, i32) {
    %c0_i32 = arith.constant 0 : i32
    %c0_i32_0 = arith.constant 0 : i32
    %c0_i32_1 = arith.constant 0 : i32
    return %c0_i32, %c0_i32_0 : i32, i32
  }
  func.func @transform_6(%arg0: i32, %arg1: i32) -> (i32, i32) {
    %c0_i32 = arith.constant 0 : i32
    %c0_i32_0 = arith.constant 0 : i32
    %c0_i32_1 = arith.constant 0 : i32
    return %c0_i32, %c0_i32_0 : i32, i32
  }
  func.func @transform_7(%arg0: i32, %arg1: i32) -> (i32, i32, i32) {
    %c0_i32 = arith.constant 0 : i32
    %c0_i32_0 = arith.constant 0 : i32
    return %arg1, %arg0, %c0_i32 : i32, i32, i32
  }
  func.func @transform_8(%arg0: i32, %arg1: i32) -> (i32, i32) {
    %c0_i32 = arith.constant 0 : i32
    %c0_i32_0 = arith.constant 0 : i32
    return %arg0, %c0_i32 : i32, i32
  }
}

</mosaic_0001>

<llo_original>
// kernel: tpu_custom_call.1
$region0: #{tpu_custom_call.1}
  #allocation0 [shape = 'u32[]', space=smem, size = 0x4, offset = 0x4, fixed_abs, tag = 'smem constant byte address 0x4 - core index']
  #allocation1 [shape = 'u32[144,128]{1,0:T(1,128)}', space=vmem, size = 0x12000, scoped, tag = 'internal scratch']
  #allocation2 [shape = 'f32[8,128]{1,0:T(8,128)}', space=vmem, size = 0x1000, scoped, tag = 'scratch operand']
  %s0 = inlined_call_operand.hbm [shape: bf16[16,8,128], index: 0, kind: input, shape index: {}]
  %s1 = inlined_call_operand.hbm [shape: f32[8,128], index: 1, kind: input, shape index: {}]
  %s2 = inlined_call_operand.hbm [shape: bf16[128,512], index: 2, kind: input, shape index: {}]
  %s3 = inlined_call_operand.hbm [shape: bf16[128,512], index: 3, kind: input, shape index: {}]
  %s4 = inlined_call_operand.vmem [shape: f32[1,512], index: 4, kind: input, shape index: {}]
  %s5 = inlined_call_operand.hbm [shape: bf16[128,128], index: 5, kind: input, shape index: {}]
  %s6 = inlined_call_operand.vmem [shape: f32[1,128], index: 6, kind: input, shape index: {}]
  %s7 = inlined_call_operand.hbm [shape: f32[16,8,128], index: 7, kind: output, shape index: {0}]
  %s8 = inlined_call_operand.hbm [shape: f32[8,128], index: 8, kind: output, shape index: {1}]
  %9 = xla_tuple %s7, %s8
  %s10 = sld [smem:[#allocation0]]
  $region97: #{tpu_custom_call.1} parent=0
    _
  %s12 = ssub.s32 1, %s10
  %s13 = scalar_select 0, %s12, %s10
  $region1: #{tpu_custom_call.1} parent=0
    #allocation3 [shape = 'u8[32768]{0}', space=vmem, size = 0x8000, scoped, tag = 'input window, operand 0']
    #allocation4 [shape = 's32[2]{0}', space=sflag, size = 0x8, scoped, tag = 'scoped memory for tpu_custom_call.1']
    #allocation5 [shape = 's32[2]{0}', space=sflag, size = 0x8, scoped, tag = 'scoped memory for tpu_custom_call.1']
    #allocation6 [shape = 'u8[4096]{0}', space=vmem, size = 0x1000, scoped, tag = 'input window, operand 1, single buffered']
    #allocation7 [shape = 's32[1]{0}', space=sflag, size = 0x4, scoped, tag = 'scoped memory for tpu_custom_call.1']
    #allocation8 [shape = 'u8[131072]{0}', space=vmem, size = 0x20000, scoped, tag = 'input window, operand 2, single buffered']
    #allocation9 [shape = 'u8[131072]{0}', space=vmem, size = 0x20000, scoped, tag = 'input window, operand 3, single buffered']
    #allocation10 [shape = 's32[1]{0}', space=sflag, size = 0x4, scoped, tag = 'scoped memory for tpu_custom_call.1']
    #allocation11 [shape = 'u8[32768]{0}', space=vmem, size = 0x8000, scoped, tag = 'input window, operand 5, single buffered']
    #allocation12 [shape = 'u8[65536]{0}', space=vmem, size = 0x10000, scoped, tag = 'output window, operand 0']
    #allocation13 [shape = 'u8[4096]{0}', space=vmem, size = 0x1000, scoped, tag = 'output window, operand 1, single buffered']
    #allocation14 [shape = 's32[1]{0}', space=sflag, size = 0x4, scoped, tag = 'scoped memory for tpu_custom_call.1']
    %14 = vsyncpa [#allocation4], 0
    %s15 = scalar_lea.sflag [#allocation4], 1
    %16 = vsyncpa %s15, 0
    %17 = vsyncpa [#allocation7], 0
    %18 = vsyncpa [#allocation10], 0
    %19 = vsyncpa [#allocation5], 0
    %s20 = scalar_lea.sflag [#allocation5], 1
    %21 = vsyncpa %s20, 0
    %22 = vsyncpa [#allocation14], 0
    loop: start=0, step=1, limit=4
    $region2: #{tpu_custom_call.1} parent=1 // loop_pre_header
      _
    $region3: #{tpu_custom_call.1} parent=1 // loop_header
      %s24 = sphi 0, %s28
      %p25 = scmp.ge.s32.totalorder %s24, 4
      %s31 = sphi 0, %s43
      %s32 = sphi 0, %s39
      %s33 = sphi 0, %s31
      %s34 = sphi 0, %s32
      %s35 = sphi 0, %s33
      %s36 = sphi 0, %s34
      %s48 = sphi 0, %s50
      %s51 = sphi 0, %s48
      %s52 = sphi 0, %s51
      %s68 = sphi 0, %s52
      %s74 = sphi 0, %s76
      %s77 = sphi 0, %s74
      %s78 = sphi 0, %s77
      %s94 = sphi 0, %s78
      %s98 = sphi 0, %s98
      %s100 = sphi 0, %s98
      %s101 = sphi 0, %s100
      %s115 = sphi 0, %s101
      %s119 = sphi 0, %s119
      %s121 = sphi 0, %s119
      %s122 = sphi 0, %s121
      %s136 = sphi 0, %s122
      %s140 = sphi 0, %s140
      %s142 = sphi 0, %s140
      %s143 = sphi 0, %s142
      %s157 = sphi 0, %s143
      %s161 = sphi 0, %s161
      %s163 = sphi 0, %s161
      %s164 = sphi 0, %s163
      %s178 = sphi 0, %s164
      %s182 = sphi 0, %s182
      %s184 = sphi 0, %s182
      %s185 = sphi 0, %s184
      %s199 = sphi 0, %s185
      %s207 = sphi 0, %s209
      %s210 = sphi 0, %s207
      %s211 = sphi 0, %s210
      %s227 = sphi 0, %s211
      %s233 = sphi 0, %s235
      %s236 = sphi 0, %s233
      %s237 = sphi 0, %s236
      %s253 = sphi 0, %s237
    $region4: #{tpu_custom_call.1} parent=1 // loop_header_branch
      %27 = sbr.rel (%p25) target = $region8
    $region5: #{tpu_custom_call.1} parent=1 // loop_body
      %s29 = ssub.s32 %s24, 1
      %s30 = ssub.s32 %s24, 2
      %s37 = sadd.s32 1, %s32
      %p38 = scmp.ge.s32.totalorder %s37, 2
      %s39 = scalar_select %p38, 0, %s37
      %s40 = sadd.s32 1, %s31
      %s41 = scalar_select %p38, %s40, %s31
      %p42 = scmp.ge.s32.totalorder %s41, 1
      %s43 = scalar_select %p42, 0, %s41
      %s44 = ssub.s32 %s32, %s39
      %s45 = ssub.s32 %s31, %s43
      %s46 = sor.u32 %s44, %s45
      %p47 = scmp.eq.s32.totalorder %s46, 0
      %s49 = sadd.s32 %s48, 1
      %s50 = scalar_select %p47, %s48, %s49
      %p53 = pneg %p47
      %p54 = scmp.eq.s32.totalorder %s24, 1
      %p55 = por %p53, %p54
      %p56 = scmp.ne.s32.totalorder %s48, %s51
      %p57 = scmp.eq.s32.totalorder %s24, 0
      %p58 = por %p56, %p57
      %p59 = scmp.ne.s32.totalorder %s48, %s51
      %p60 = scmp.eq.s32.totalorder %s29, 1
      %p61 = por %p59, %p60
      %p62 = scmp.ne.s32.totalorder %s51, %s52
      %p63 = scmp.eq.s32.totalorder %s29, 0
      %p64 = por %p62, %p63
      %p65 = scmp.ne.s32.totalorder %s51, %s52
      %p66 = scmp.eq.s32.totalorder %s30, 1
      %p67 = por %p65, %p66
      %p69 = scmp.ne.s32.totalorder %s52, %s68
      %p70 = scmp.eq.s32.totalorder %s30, 0
      %p71 = por %p69, %p70
      %s72 = ssub.s32 %s31, %s43
      %p73 = scmp.eq.s32.totalorder %s72, 0
      %s75 = sadd.s32 %s74, 1
      %s76 = scalar_select %p73, %s74, %s75
      %p79 = pneg %p73
      %p80 = scmp.eq.s32.totalorder %s24, 1
      %p81 = por %p79, %p80
      %p82 = scmp.ne.s32.totalorder %s74, %s77
      %p83 = scmp.eq.s32.totalorder %s24, 0
      %p84 = por %p82, %p83
      %p85 = scmp.ne.s32.totalorder %s74, %s77
      %p86 = scmp.eq.s32.totalorder %s29, 1
      %p87 = por %p85, %p86
      %p88 = scmp.ne.s32.totalorder %s77, %s78
      %p89 = scmp.eq.s32.totalorder %s29, 0
      %p90 = por %p88, %p89
      %p91 = scmp.ne.s32.totalorder %s77, %s78
      %p92 = scmp.eq.s32.totalorder %s30, 1
      %p93 = por %p91, %p92
      %p95 = scmp.ne.s32.totalorder %s78, %s94
      %p96 = scmp.eq.s32.totalorder %s30, 0
      %p97 = por %p95, %p96
      %s99 = sadd.s32 %s98, 1
      %p102 = scmp.eq.s32.totalorder %s24, 1
      %p103 = scmp.ne.s32.totalorder %s98, %s100
      %p104 = scmp.eq.s32.totalorder %s24, 0
      %p105 = por %p103, %p104
      %p106 = scmp.ne.s32.totalorder %s98, %s100
      %p107 = scmp.eq.s32.totalorder %s29, 1
      %p108 = por %p106, %p107
      %p109 = scmp.ne.s32.totalorder %s100, %s101
      %p110 = scmp.eq.s32.totalorder %s29, 0
      %p111 = por %p109, %p110
      %p112 = scmp.ne.s32.totalorder %s100, %s101
      %p113 = scmp.eq.s32.totalorder %s30, 1
      %p114 = por %p112, %p113
      %p116 = scmp.ne.s32.totalorder %s101, %s115
      %p117 = scmp.eq.s32.totalorder %s30, 0
      %p118 = por %p116, %p117
      %s120 = sadd.s32 %s119, 1
      %p123 = scmp.eq.s32.totalorder %s24, 1
      %p124 = scmp.ne.s32.totalorder %s119, %s121
      %p125 = scmp.eq.s32.totalorder %s24, 0
      %p126 = por %p124, %p125
      %p127 = scmp.ne.s32.totalorder %s119, %s121
      %p128 = scmp.eq.s32.totalorder %s29, 1
      %p129 = por %p127, %p128
      %p130 = scmp.ne.s32.totalorder %s121, %s122
      %p131 = scmp.eq.s32.totalorder %s29, 0
      %p132 = por %p130, %p131
      %p133 = scmp.ne.s32.totalorder %s121, %s122
      %p134 = scmp.eq.s32.totalorder %s30, 1
      %p135 = por %p133, %p134
      %p137 = scmp.ne.s32.totalorder %s122, %s136
      %p138 = scmp.eq.s32.totalorder %s30, 0
      %p139 = por %p137, %p138
      %s141 = sadd.s32 %s140, 1
      %p144 = scmp.eq.s32.totalorder %s24, 1
      %p145 = scmp.ne.s32.totalorder %s140, %s142
      %p146 = scmp.eq.s32.totalorder %s24, 0
      %p147 = por %p145, %p146
      %p148 = scmp.ne.s32.totalorder %s140, %s142
      %p149 = scmp.eq.s32.totalorder %s29, 1
      %p150 = por %p148, %p149
      %p151 = scmp.ne.s32.totalorder %s142, %s143
      %p152 = scmp.eq.s32.totalorder %s29, 0
      %p153 = por %p151, %p152
      %p154 = scmp.ne.s32.totalorder %s142, %s143
      %p155 = scmp.eq.s32.totalorder %s30, 1
      %p156 = por %p154, %p155
      %p158 = scmp.ne.s32.totalorder %s143, %s157
      %p159 = scmp.eq.s32.totalorder %s30, 0
      %p160 = por %p158, %p159
      %s162 = sadd.s32 %s161, 1
      %p165 = scmp.eq.s32.totalorder %s24, 1
      %p166 = scmp.ne.s32.totalorder %s161, %s163
      %p167 = scmp.eq.s32.totalorder %s24, 0
      %p168 = por %p166, %p167
      %p169 = scmp.ne.s32.totalorder %s161, %s163
      %p170 = scmp.eq.s32.totalorder %s29, 1
      %p171 = por %p169, %p170
      %p172 = scmp.ne.s32.totalorder %s163, %s164
      %p173 = scmp.eq.s32.totalorder %s29, 0
      %p174 = por %p172, %p173
      %p175 = scmp.ne.s32.totalorder %s163, %s164
      %p176 = scmp.eq.s32.totalorder %s30, 1
      %p177 = por %p175, %p176
      %p179 = scmp.ne.s32.totalorder %s164, %s178
      %p180 = scmp.eq.s32.totalorder %s30, 0
      %p181 = por %p179, %p180
      %s183 = sadd.s32 %s182, 1
      %p186 = scmp.eq.s32.totalorder %s24, 1
      %p187 = scmp.ne.s32.totalorder %s182, %s184
      %p188 = scmp.eq.s32.totalorder %s24, 0
      %p189 = por %p187, %p188
      %p190 = scmp.ne.s32.totalorder %s182, %s184
      %p191 = scmp.eq.s32.totalorder %s29, 1
      %p192 = por %p190, %p191
      %p193 = scmp.ne.s32.totalorder %s184, %s185
      %p194 = scmp.eq.s32.totalorder %s29, 0
      %p195 = por %p193, %p194
      %p196 = scmp.ne.s32.totalorder %s184, %s185
      %p197 = scmp.eq.s32.totalorder %s30, 1
      %p198 = por %p196, %p197
      %p200 = scmp.ne.s32.totalorder %s185, %s199
      %p201 = scmp.eq.s32.totalorder %s30, 0
      %p202 = por %p200, %p201
      %s203 = ssub.s32 %s32, %s39
      %s204 = ssub.s32 %s31, %s43
      %s205 = sor.u32 %s203, %s204
      %p206 = scmp.eq.s32.totalorder %s205, 0
      %s208 = sadd.s32 %s207, 1
      %s209 = scalar_select %p206, %s207, %s208
      %p212 = pneg %p206
      %p213 = scmp.eq.s32.totalorder %s24, 1
      %p214 = por %p212, %p213
      %p215 = scmp.ne.s32.totalorder %s207, %s210
      %p216 = scmp.eq.s32.totalorder %s24, 0
      %p217 = por %p215, %p216
      %p218 = scmp.ne.s32.totalorder %s207, %s210
      %p219 = scmp.eq.s32.totalorder %s29, 1
      %p220 = por %p218, %p219
      %p221 = scmp.ne.s32.totalorder %s210, %s211
      %p222 = scmp.eq.s32.totalorder %s29, 0
      %p223 = por %p221, %p222
      %p224 = scmp.ne.s32.totalorder %s210, %s211
      %p225 = scmp.eq.s32.totalorder %s30, 1
      %p226 = por %p224, %p225
      %p228 = scmp.ne.s32.totalorder %s211, %s227
      %p229 = scmp.eq.s32.totalorder %s30, 0
      %p230 = por %p228, %p229
      %s231 = ssub.s32 %s31, %s43
      %p232 = scmp.eq.s32.totalorder %s231, 0
      %s234 = sadd.s32 %s233, 1
      %s235 = scalar_select %p232, %s233, %s234
      %p238 = pneg %p232
      %p239 = scmp.eq.s32.totalorder %s24, 1
      %p240 = por %p238, %p239
      %p241 = scmp.ne.s32.totalorder %s233, %s236
      %p242 = scmp.eq.s32.totalorder %s24, 0
      %p243 = por %p241, %p242
      %p244 = scmp.ne.s32.totalorder %s233, %s236
      %p245 = scmp.eq.s32.totalorder %s29, 1
      %p246 = por %p244, %p245
      %p247 = scmp.ne.s32.totalorder %s236, %s237
      %p248 = scmp.eq.s32.totalorder %s29, 0
      %p249 = por %p247, %p248
      %p250 = scmp.ne.s32.totalorder %s236, %s237
      %p251 = scmp.eq.s32.totalorder %s30, 1
      %p252 = por %p250, %p251
      %p254 = scmp.ne.s32.totalorder %s237, %s253
      %p255 = scmp.eq.s32.totalorder %s30, 0
      %p256 = por %p254, %p255
      %p257 = scmp.le.s32.totalorder 1, %s24
      %p258 = scmp.lt.s32.totalorder %s24, 3
      %p259 = pnand %p257, %p258
      %p260 = pneg %p259
      // Predicated region
      $region9: #{tpu_custom_call.1} parent=5 // pred_check
        _
      $region10: #{tpu_custom_call.1} parent=5 // pred_check_branch
        %262 = sbr.rel (%p259) target = $region12
      $region11: #{tpu_custom_call.1} parent=5 // pred_region
        %s263 = ssub.s32 %s24, 1
        // Predicated region
        $region13: #{tpu_custom_call.1} parent=11 // pred_check
          %p264 = pneg %p90
        $region14: #{tpu_custom_call.1} parent=11 // pred_check_branch
          %266 = sbr.rel (%p264) target = $region16
        $region15: #{tpu_custom_call.1} parent=11 // pred_region
          %s268 = ssub.s32 128, 128
          %269 = vsyncadd [#allocation7], %s268
          %s270 = smul.addr %s33, 128
          %s271 = scalar_lea.hbm %s1, %s270
          %s273 = sshll.u32 [#allocation6], 4
          %s274 = int_to_ptr.vmem [resolvable:$true] %s273
          %276 = dma.hbm_to_vmem [thread:$0]  %s271, 128, %s274, [#allocation7]
        $region16: #{tpu_custom_call.1} parent=11 // pred_fallthru
          _
        // Predicated region
        $region17: #{tpu_custom_call.1} parent=11 // pred_check
          %p277 = pneg %p111
        $region18: #{tpu_custom_call.1} parent=11 // pred_check_branch
          %279 = sbr.rel (%p277) target = $region20
        $region19: #{tpu_custom_call.1} parent=11 // pred_region
          %s281 = ssub.s32 4096, 4096
          %282 = vsyncadd [#allocation7], %s281
          %s283 = sshll.u32 [#allocation8], 4
          %s284 = int_to_ptr.vmem [resolvable:$true] %s283
          %289 = dma.hbm_to_vmem [thread:$0]  %s2, 4096, %s284, [#allocation7], 256, 256, 16
        $region20: #{tpu_custom_call.1} parent=11 // pred_fallthru
          _
        // Predicated region
        $region21: #{tpu_custom_call.1} parent=11 // pred_check
          %p290 = pneg %p132
        $region22: #{tpu_custom_call.1} parent=11 // pred_check_branch
          %292 = sbr.rel (%p290) target = $region24
        $region23: #{tpu_custom_call.1} parent=11 // pred_region
          %s294 = ssub.s32 4096, 4096
          %295 = vsyncadd [#allocation10], %s294
          %s296 = sshll.u32 [#allocation9], 4
          %s297 = int_to_ptr.vmem [resolvable:$true] %s296
          %302 = dma.hbm_to_vmem [thread:$0]  %s3, 4096, %s297, [#allocation10], 256, 256, 16
        $region24: #{tpu_custom_call.1} parent=11 // pred_fallthru
          _
        // Predicated region
        $region25: #{tpu_custom_call.1} parent=11 // pred_check
          %p303 = pneg %p153
        $region26: #{tpu_custom_call.1} parent=11 // pred_check_branch
          %305 = sbr.rel (%p303) target = $region28
        $region27: #{tpu_custom_call.1} parent=11 // pred_region
          _
        $region28: #{tpu_custom_call.1} parent=11 // pred_fallthru
          _
        // Predicated region
        $region29: #{tpu_custom_call.1} parent=11 // pred_check
          %p306 = pneg %p174
        $region30: #{tpu_custom_call.1} parent=11 // pred_check_branch
          %308 = sbr.rel (%p306) target = $region32
        $region31: #{tpu_custom_call.1} parent=11 // pred_region
          %s310 = ssub.s32 1024, 1024
          %311 = vsyncadd [#allocation10], %s310
          %s312 = sshll.u32 [#allocation11], 4
          %s313 = int_to_ptr.vmem [resolvable:$true] %s312
          %318 = dma.hbm_to_vmem [thread:$0]  %s5, 1024, %s313, [#allocation10], 64, 64, 4
        $region32: #{tpu_custom_call.1} parent=11 // pred_fallthru
          _
        // Predicated region
        $region33: #{tpu_custom_call.1} parent=11 // pred_check
          %p319 = pneg %p195
        $region34: #{tpu_custom_call.1} parent=11 // pred_check_branch
          %321 = sbr.rel (%p319) target = $region36
        $region35: #{tpu_custom_call.1} parent=11 // pred_region
          _
        $region36: #{tpu_custom_call.1} parent=11 // pred_fallthru
          _
      $region12: #{tpu_custom_call.1} parent=5 // pred_fallthru
        _
      %p322 = scmp.lt.s32.totalorder %s24, 2
      // Predicated region
      $region37: #{tpu_custom_call.1} parent=5 // pred_check
        %p323 = pneg %p322
      $region38: #{tpu_custom_call.1} parent=5 // pred_check_branch
        %325 = sbr.rel (%p323) target = $region40
      $region39: #{tpu_custom_call.1} parent=5 // pred_region
        // Predicated region
        $region41: #{tpu_custom_call.1} parent=39 // pred_check
          %p326 = pneg %p58
        $region42: #{tpu_custom_call.1} parent=39 // pred_check_branch
          %328 = sbr.rel (%p326) target = $region44
        $region43: #{tpu_custom_call.1} parent=39 // pred_region
          %s329 = sand.u32 %s48, 1
          %s330 = scalar_lea.sflag [#allocation4], %s329
          %s331 = sand.u32 %s48, 1
          %s332 = smul.addr %s331, 32
          %s333 = scalar_lea.vmem [#allocation3], %s332
          %s334 = smul.u32 8, %s32
          %s336 = ssub.s32 512, 512
          %337 = vsyncadd %s330, %s336
          %s338 = sadd.s32 %s31, %s334
          %s339 = smul.addr %s338, 64
          %s340 = scalar_lea.hbm %s0, %s339
          %s341 = sshll.u32 %s333, 4
          %s342 = int_to_ptr.vmem [resolvable:$true] %s341
          %347 = dma.hbm_to_vmem [thread:$0]  %s340, 512, %s342, %s330, 64, 64, 4
        $region44: #{tpu_custom_call.1} parent=39 // pred_fallthru
          _
      $region40: #{tpu_custom_call.1} parent=5 // pred_fallthru
        _
      %p348 = scmp.le.s32.totalorder 1, %s24
      %p349 = scmp.lt.s32.totalorder %s24, 3
      %p350 = pnand %p348, %p349
      %p351 = pneg %p350
      // Predicated region
      $region45: #{tpu_custom_call.1} parent=5 // pred_check
        _
      $region46: #{tpu_custom_call.1} parent=5 // pred_check_branch
        %353 = sbr.rel (%p350) target = $region48
      $region47: #{tpu_custom_call.1} parent=5 // pred_region
        %s354 = ssub.s32 %s24, 1
        %s355 = sand.u32 %s51, 1
        %s356 = scalar_lea.sflag [#allocation4], %s355
        %s357 = sand.u32 %s51, 1
        %s358 = smul.addr %s357, 32
        %s359 = scalar_lea.vmem [#allocation3], %s358
        // Predicated region
        $region49: #{tpu_custom_call.1} parent=47 // pred_check
          %p360 = pneg %p64
        $region50: #{tpu_custom_call.1} parent=47 // pred_check_branch
          %362 = sbr.rel (%p360) target = $region52
        $region51: #{tpu_custom_call.1} parent=47 // pred_region
          %363 = dma.done %s356, 512
        $region52: #{tpu_custom_call.1} parent=47 // pred_fallthru
          _
        // Predicated region
        $region53: #{tpu_custom_call.1} parent=47 // pred_check
          %p364 = pneg %p90
        $region54: #{tpu_custom_call.1} parent=47 // pred_check_branch
          %366 = sbr.rel (%p364) target = $region56
        $region55: #{tpu_custom_call.1} parent=47 // pred_region
          %367 = dma.done [#allocation7], 128
        $region56: #{tpu_custom_call.1} parent=47 // pred_fallthru
          _
        // Predicated region
        $region57: #{tpu_custom_call.1} parent=47 // pred_check
          %p368 = pneg %p111
        $region58: #{tpu_custom_call.1} parent=47 // pred_check_branch
          %370 = sbr.rel (%p368) target = $region60
        $region59: #{tpu_custom_call.1} parent=47 // pred_region
          %371 = dma.done [#allocation7], 4096
        $region60: #{tpu_custom_call.1} parent=47 // pred_fallthru
          _
        // Predicated region
        $region61: #{tpu_custom_call.1} parent=47 // pred_check
          %p372 = pneg %p132
        $region62: #{tpu_custom_call.1} parent=47 // pred_check_branch
          %374 = sbr.rel (%p372) target = $region64
        $region63: #{tpu_custom_call.1} parent=47 // pred_region
          %375 = dma.done [#allocation10], 4096
        $region64: #{tpu_custom_call.1} parent=47 // pred_fallthru
          _
        // Predicated region
        $region65: #{tpu_custom_call.1} parent=47 // pred_check
          %p376 = pneg %p174
        $region66: #{tpu_custom_call.1} parent=47 // pred_check_branch
          %378 = sbr.rel (%p376) target = $region68
        $region67: #{tpu_custom_call.1} parent=47 // pred_region
          %379 = dma.done [#allocation10], 1024
        $region68: #{tpu_custom_call.1} parent=47 // pred_fallthru
          _
        %s380 = sand.u32 %s51, 1
        %s381 = scalar_lea.sflag [#allocation4], %s380
        %s382 = sand.u32 %s51, 1
        %s383 = smul.addr %s382, 32
        %s384 = scalar_lea.vmem [#allocation3], %s383
        %p385 = pneg %p64
        %p386 = pneg %p61
        %p387 = pneg %p90
        %p388 = pneg %p87
        %p389 = pneg %p111
        %p390 = pneg %p108
        %p391 = pneg %p132
        %p392 = pneg %p129
        %p393 = pneg %p153
        %p394 = pneg %p150
        %p395 = pneg %p174
        %p396 = pneg %p171
        %p397 = pneg %p195
        %p398 = pneg %p192
        %p399 = pneg %p223
        %p400 = pneg %p220
        %s401 = sand.u32 %s210, 1
        %s402 = scalar_lea.sflag [#allocation5], %s401
        %s403 = sand.u32 %s210, 1
        %s404 = smul.addr %s403, 64
        %s405 = scalar_lea.vmem [#allocation12], %s404
        %p406 = pneg %p249
        %p407 = pneg %p246
        %s408 = smul.u32 8, %s34
        %s409 = smul.u32 8, %s34
        %p411 = scmp.eq.s32.totalorder %s34, 0
        // Predicated region
        $region69: #{tpu_custom_call.1} parent=47 // pred_check
          %p412 = pneg %p411
        $region70: #{tpu_custom_call.1} parent=47 // pred_check_branch
          %414 = sbr.rel (%p412) target = $region72
        $region71: #{tpu_custom_call.1} parent=47 // pred_region
          %v415 = vld [vmem:[#allocation6] sm:$0xff]
          %416 = vst [vmem:[#allocation2] sm:$0xff] %v415
        $region72: #{tpu_custom_call.1} parent=47 // pred_fallthru
          _
        %v417 = vld [vmem:[%s4] sm:$0xf]
        %v419 = vlaneseq
        %v420 = vshrl.u32 %v419, 7
        %v421 = vsub.s32 0, %v420
        %v422 = vrot.slane %v417, %v421
        %v423 = vlaneseq
        %v424 = vshrl.u32 %v423, 7
        %v425 = vsub.s32 1, %v424
        %v426 = vrot.slane %v417, %v425
        %v427 = vlaneseq
        %v428 = vshrl.u32 %v427, 7
        %v429 = vsub.s32 2, %v428
        %v430 = vrot.slane %v417, %v429
        %v431 = vlaneseq
        %v432 = vshrl.u32 %v431, 7
        %v433 = vsub.s32 3, %v432
        %v434 = vrot.slane %v417, %v433
        %v439 = vld [vmem:[%s6] sm:$0x1]
        %v441 = vlaneseq
        %v442 = vshrl.u32 %v441, 7
        %v443 = vsub.s32 0, %v442
        %v444 = vrot.slane %v439, %v443
        %v446 = vld [vmem:[#allocation2] sm:$0xff]
        %v447 = vld [vmem:[%s359] sm:$0xf]
        %v448 = vmax.bf16 %v447, 0
        %v449 = vld [vmem:[#allocation8] sm:$0xff]
        %v450 = vld [vmem:[#allocation8 + $0x8] sm:$0xff]
        %v451 = vld [vmem:[#allocation8 + $0x10] sm:$0xff]
        %v452 = vld [vmem:[#allocation8 + $0x18] sm:$0xff]
        %v453 = vld [vmem:[#allocation8 + $0x20] sm:$0xff]
        %v454 = vld [vmem:[#allocation8 + $0x28] sm:$0xff]
        %v455 = vld [vmem:[#allocation8 + $0x30] sm:$0xff]
        %v456 = vld [vmem:[#allocation8 + $0x38] sm:$0xff]
        %v457 = vld [vmem:[#allocation8 + $0x40] sm:$0xff]
        %v458 = vld [vmem:[#allocation8 + $0x48] sm:$0xff]
        %v459 = vld [vmem:[#allocation8 + $0x50] sm:$0xff]
        %v460 = vld [vmem:[#allocation8 + $0x58] sm:$0xff]
        %v461 = vld [vmem:[#allocation8 + $0x60] sm:$0xff]
        %v462 = vld [vmem:[#allocation8 + $0x68] sm:$0xff]
        %v463 = vld [vmem:[#allocation8 + $0x70] sm:$0xff]
        %v464 = vld [vmem:[#allocation8 + $0x78] sm:$0xff]
        %v465 = vld [vmem:[#allocation8 + $0x80] sm:$0xff]
        %v466 = vld [vmem:[#allocation8 + $0x88] sm:$0xff]
        %v467 = vld [vmem:[#allocation8 + $0x90] sm:$0xff]
        %v468 = vld [vmem:[#allocation8 + $0x98] sm:$0xff]
        %v469 = vld [vmem:[#allocation8 + $0xa0] sm:$0xff]
        %v470 = vld [vmem:[#allocation8 + $0xa8] sm:$0xff]
        %v471 = vld [vmem:[#allocation8 + $0xb0] sm:$0xff]
        %v472 = vld [vmem:[#allocation8 + $0xb8] sm:$0xff]
        %v473 = vld [vmem:[#allocation8 + $0xc0] sm:$0xff]
        %v474 = vld [vmem:[#allocation8 + $0xc8] sm:$0xff]
        %v475 = vld [vmem:[#allocation8 + $0xd0] sm:$0xff]
        %v476 = vld [vmem:[#allocation8 + $0xd8] sm:$0xff]
        %v477 = vld [vmem:[#allocation8 + $0xe0] sm:$0xff]
        %v478 = vld [vmem:[#allocation8 + $0xe8] sm:$0xff]
        %v479 = vld [vmem:[#allocation8 + $0xf0] sm:$0xff]
        %v480 = vld [vmem:[#allocation8 + $0xf8] sm:$0xff]
        %v481 = vpack.c.bf16 %v446, %v446
        %v482 = vld [vmem:[#allocation9] sm:$0xff]
        %v483 = vld [vmem:[#allocation9 + $0x8] sm:$0xff]
        %v484 = vld [vmem:[#allocation9 + $0x10] sm:$0xff]
        %v485 = vld [vmem:[#allocation9 + $0x18] sm:$0xff]
        %v486 = vld [vmem:[#allocation9 + $0x20] sm:$0xff]
        %v487 = vld [vmem:[#allocation9 + $0x28] sm:$0xff]
        %v488 = vld [vmem:[#allocation9 + $0x30] sm:$0xff]
        %v489 = vld [vmem:[#allocation9 + $0x38] sm:$0xff]
        %v490 = vld [vmem:[#allocation9 + $0x40] sm:$0xff]
        %v491 = vld [vmem:[#allocation9 + $0x48] sm:$0xff]
        %v492 = vld [vmem:[#allocation9 + $0x50] sm:$0xff]
        %v493 = vld [vmem:[#allocation9 + $0x58] sm:$0xff]
        %v494 = vld [vmem:[#allocation9 + $0x60] sm:$0xff]
        %v495 = vld [vmem:[#allocation9 + $0x68] sm:$0xff]
        %v496 = vld [vmem:[#allocation9 + $0x70] sm:$0xff]
        %v497 = vld [vmem:[#allocation9 + $0x78] sm:$0xff]
        %v498 = vld [vmem:[#allocation9 + $0x80] sm:$0xff]
        %v499 = vld [vmem:[#allocation9 + $0x88] sm:$0xff]
        %v500 = vld [vmem:[#allocation9 + $0x90] sm:$0xff]
        %v501 = vld [vmem:[#allocation9 + $0x98] sm:$0xff]
        %v502 = vld [vmem:[#allocation9 + $0xa0] sm:$0xff]
        %v503 = vld [vmem:[#allocation9 + $0xa8] sm:$0xff]
        %v504 = vld [vmem:[#allocation9 + $0xb0] sm:$0xff]
        %v505 = vld [vmem:[#allocation9 + $0xb8] sm:$0xff]
        %v506 = vld [vmem:[#allocation9 + $0xc0] sm:$0xff]
        %v507 = vld [vmem:[#allocation9 + $0xc8] sm:$0xff]
        %v508 = vld [vmem:[#allocation9 + $0xd0] sm:$0xff]
        %v509 = vld [vmem:[#allocation9 + $0xd8] sm:$0xff]
        %v510 = vld [vmem:[#allocation9 + $0xe0] sm:$0xff]
        %v511 = vld [vmem:[#allocation9 + $0xe8] sm:$0xff]
        %v512 = vld [vmem:[#allocation9 + $0xf0] sm:$0xff]
        %v513 = vld [vmem:[#allocation9 + $0xf8] sm:$0xff]
        %v546 = vunpack.c.l.b16 %v482
        %v547 = vunpack.c.h.b16 %v482
        %v548 = vunpack.c.l.b16 %v483
        %v549 = vunpack.c.h.b16 %v483
        %v550 = vunpack.c.l.b16 %v484
        %v551 = vunpack.c.h.b16 %v484
        %v552 = vunpack.c.l.b16 %v485
        %v553 = vunpack.c.h.b16 %v485
        %v554 = vunpack.c.l.b16 %v486
        %v555 = vunpack.c.h.b16 %v486
        %v556 = vunpack.c.l.b16 %v487
        %v557 = vunpack.c.h.b16 %v487
        %v558 = vunpack.c.l.b16 %v488
        %v559 = vunpack.c.h.b16 %v488
        %v560 = vunpack.c.l.b16 %v489
        %v561 = vunpack.c.h.b16 %v489
        %v562 = vunpack.c.l.b16 %v490
        %v563 = vunpack.c.h.b16 %v490
        %v564 = vunpack.c.l.b16 %v491
        %v565 = vunpack.c.h.b16 %v491
        %v566 = vunpack.c.l.b16 %v492
        %v567 = vunpack.c.h.b16 %v492
        %v568 = vunpack.c.l.b16 %v493
        %v569 = vunpack.c.h.b16 %v493
        %v570 = vunpack.c.l.b16 %v494
        %v571 = vunpack.c.h.b16 %v494
        %v572 = vunpack.c.l.b16 %v495
        %v573 = vunpack.c.h.b16 %v495
        %v574 = vunpack.c.l.b16 %v496
        %v575 = vunpack.c.h.b16 %v496
        %v576 = vunpack.c.l.b16 %v497
        %v577 = vunpack.c.h.b16 %v497
        %v578 = vunpack.c.l.b16 %v498
        %v579 = vunpack.c.h.b16 %v498
        %v580 = vunpack.c.l.b16 %v499
        %v581 = vunpack.c.h.b16 %v499
        %v582 = vunpack.c.l.b16 %v500
        %v583 = vunpack.c.h.b16 %v500
        %v584 = vunpack.c.l.b16 %v501
        %v585 = vunpack.c.h.b16 %v501
        %v586 = vunpack.c.l.b16 %v502
        %v587 = vunpack.c.h.b16 %v502
        %v588 = vunpack.c.l.b16 %v503
        %v589 = vunpack.c.h.b16 %v503
        %v590 = vunpack.c.l.b16 %v504
        %v591 = vunpack.c.h.b16 %v504
        %v592 = vunpack.c.l.b16 %v505
        %v593 = vunpack.c.h.b16 %v505
        %v594 = vunpack.c.l.b16 %v506
        %v595 = vunpack.c.h.b16 %v506
        %v596 = vunpack.c.l.b16 %v507
        %v597 = vunpack.c.h.b16 %v507
        %v598 = vunpack.c.l.b16 %v508
        %v599 = vunpack.c.h.b16 %v508
        %v600 = vunpack.c.l.b16 %v509
        %v601 = vunpack.c.h.b16 %v509
        %v602 = vunpack.c.l.b16 %v510
        %v603 = vunpack.c.h.b16 %v510
        %v604 = vunpack.c.l.b16 %v511
        %v605 = vunpack.c.h.b16 %v511
        %v606 = vunpack.c.l.b16 %v512
        %v607 = vunpack.c.h.b16 %v512
        %v608 = vunpack.c.l.b16 %v513
        %v609 = vunpack.c.h.b16 %v513
        %v610 = vpack.c.b16 %v550, %v546
        %v611 = vpack.c.b16 %v551, %v547
        %v612 = vpack.c.b16 %v552, %v548
        %v613 = vpack.c.b16 %v553, %v549
        %v614 = vpack.c.b16 %v558, %v554
        %v615 = vpack.c.b16 %v559, %v555
        %v616 = vpack.c.b16 %v560, %v556
        %v617 = vpack.c.b16 %v561, %v557
        %v618 = vpack.c.b16 %v566, %v562
        %v619 = vpack.c.b16 %v567, %v563
        %v620 = vpack.c.b16 %v568, %v564
        %v621 = vpack.c.b16 %v569, %v565
        %v622 = vpack.c.b16 %v574, %v570
        %v623 = vpack.c.b16 %v575, %v571
        %v624 = vpack.c.b16 %v576, %v572
        %v625 = vpack.c.b16 %v577, %v573
        %v626 = vpack.c.b16 %v582, %v578
        %v627 = vpack.c.b16 %v583, %v579
        %v628 = vpack.c.b16 %v584, %v580
        %v629 = vpack.c.b16 %v585, %v581
        %v630 = vpack.c.b16 %v590, %v586
        %v631 = vpack.c.b16 %v591, %v587
        %v632 = vpack.c.b16 %v592, %v588
        %v633 = vpack.c.b16 %v593, %v589
        %v634 = vpack.c.b16 %v598, %v594
        %v635 = vpack.c.b16 %v599, %v595
        %v636 = vpack.c.b16 %v600, %v596
        %v637 = vpack.c.b16 %v601, %v597
        %v638 = vpack.c.b16 %v606, %v602
        %v639 = vpack.c.b16 %v607, %v603
        %v640 = vpack.c.b16 %v608, %v604
        %v641 = vpack.c.b16 %v609, %v605
        %674 = vmatprep.subr.bf16.mxu0 %v639
        %675 = vmatpush1.bf16.msra.mxu0 %v638
        %676 = vmatprep.subr.bf16.mxu0 %v635
        %677 = vmatpush1.bf16.msra.mxu0 %v634
        %678 = vmatprep.subr.bf16.mxu0 %v631
        %679 = vmatpush1.bf16.msra.mxu0 %v630
        %680 = vmatprep.subr.bf16.mxu0 %v627
        %681 = vmatpush1.bf16.msra.mxu0 %v626
        %682 = vmatprep.subr.bf16.mxu0 %v623
        %683 = vmatpush1.bf16.msra.mxu0 %v622
        %684 = vmatprep.subr.bf16.mxu0 %v619
        %685 = vmatpush1.bf16.msra.mxu0 %v618
        %686 = vmatprep.subr.bf16.mxu0 %v615
        %687 = vmatpush1.bf16.msra.mxu0 %v614
        %688 = vmatprep.subr.bf16.mxu0 %v611
        %689 = vmatpush1.bf16.msra.mxu0 %v610
        %690 = vmatprep.subr.bf16.mxu0 0
        %691 = vmatpush2.bf16.msra.mxu0 0
        %692 = vmatprep.subr.bf16.mxu0 0
        %693 = vmatpush2.bf16.msra.mxu0 0
        %694 = vmatprep.subr.bf16.mxu0 0
        %695 = vmatpush2.bf16.msra.mxu0 0
        %696 = vmatprep.subr.bf16.mxu0 0
        %697 = vmatpush2.bf16.msra.mxu0 0
        %698 = vmatprep.subr.bf16.mxu0 0
        %699 = vmatpush2.bf16.msra.mxu0 0
        %700 = vmatprep.subr.bf16.mxu0 0
        %701 = vmatpush2.bf16.msra.mxu0 0
        %702 = vmatprep.subr.bf16.mxu0 0
        %703 = vmatpush2.bf16.msra.mxu0 0
        %704 = vmatprep.subr.bf16.mxu0 0
        %705 = vmatpush2.bf16.msra.mxu0 0
        %706 = vmatprep.mubr.bf16.mxu0 0
        %707 = vmatmul.mubr.bf16.gmra.mxu0 %v481
        %v708 = vpop.f32.mrf.mxu0
        %v709 = vadd.f32 0.0, %v708
        %v710 = vpop.f32.mrf.mxu0
        %v711 = vadd.f32 0.0, %v710
        %v712 = vpop.f32.mrf.mxu0
        %v713 = vpop.f32.mrf.mxu0
        %714 = vdwg.mxu0
        %715 = vmatprep.subr.bf16.mxu0 %v641
        %716 = vmatpush1.bf16.msra.mxu0 %v640
        %717 = vmatprep.subr.bf16.mxu0 %v637
        %718 = vmatpush1.bf16.msra.mxu0 %v636
        %719 = vmatprep.subr.bf16.mxu0 %v633
        %720 = vmatpush1.bf16.msra.mxu0 %v632
        %721 = vmatprep.subr.bf16.mxu0 %v629
        %722 = vmatpush1.bf16.msra.mxu0 %v628
        %723 = vmatprep.subr.bf16.mxu0 %v625
        %724 = vmatpush1.bf16.msra.mxu0 %v624
        %725 = vmatprep.subr.bf16.mxu0 %v621
        %726 = vmatpush1.bf16.msra.mxu0 %v620
        %727 = vmatprep.subr.bf16.mxu0 %v617
        %728 = vmatpush1.bf16.msra.mxu0 %v616
        %729 = vmatprep.subr.bf16.mxu0 %v613
        %730 = vmatpush1.bf16.msra.mxu0 %v612
        %731 = vmatprep.subr.bf16.mxu0 0
        %732 = vmatpush2.bf16.msra.mxu0 0
        %733 = vmatprep.subr.bf16.mxu0 0
        %734 = vmatpush2.bf16.msra.mxu0 0
        %735 = vmatprep.subr.bf16.mxu0 0
        %736 = vmatpush2.bf16.msra.mxu0 0
        %737 = vmatprep.subr.bf16.mxu0 0
        %738 = vmatpush2.bf16.msra.mxu0 0
        %739 = vmatprep.subr.bf16.mxu0 0
        %740 = vmatpush2.bf16.msra.mxu0 0
        %741 = vmatprep.subr.bf16.mxu0 0
        %742 = vmatpush2.bf16.msra.mxu0 0
        %743 = vmatprep.subr.bf16.mxu0 0
        %744 = vmatpush2.bf16.msra.mxu0 0
        %745 = vmatprep.subr.bf16.mxu0 0
        %746 = vmatpush2.bf16.msra.mxu0 0
        %747 = vmatprep.mubr.bf16.mxu0 0
        %748 = vmatmul.mubr.bf16.gmra.mxu0 %v481
        %v749 = vpop.f32.mrf.mxu0
        %v750 = vadd.f32 0.0, %v749
        %v751 = vpop.f32.mrf.mxu0
        %v752 = vadd.f32 0.0, %v751
        %v753 = vpop.f32.mrf.mxu0
        %v754 = vpop.f32.mrf.mxu0
        %755 = vdwg.mxu0
        %v788 = vunpack.c.l.b16 %v449
        %v789 = vunpack.c.h.b16 %v449
        %v790 = vunpack.c.l.b16 %v450
        %v791 = vunpack.c.h.b16 %v450
        %v792 = vunpack.c.l.b16 %v451
        %v793 = vunpack.c.h.b16 %v451
        %v794 = vunpack.c.l.b16 %v452
        %v795 = vunpack.c.h.b16 %v452
        %v796 = vunpack.c.l.b16 %v453
        %v797 = vunpack.c.h.b16 %v453
        %v798 = vunpack.c.l.b16 %v454
        %v799 = vunpack.c.h.b16 %v454
        %v800 = vunpack.c.l.b16 %v455
        %v801 = vunpack.c.h.b16 %v455
        %v802 = vunpack.c.l.b16 %v456
        %v803 = vunpack.c.h.b16 %v456
        %v804 = vunpack.c.l.b16 %v457
        %v805 = vunpack.c.h.b16 %v457
        %v806 = vunpack.c.l.b16 %v458
        %v807 = vunpack.c.h.b16 %v458
        %v808 = vunpack.c.l.b16 %v459
        %v809 = vunpack.c.h.b16 %v459
        %v810 = vunpack.c.l.b16 %v460
        %v811 = vunpack.c.h.b16 %v460
        %v812 = vunpack.c.l.b16 %v461
        %v813 = vunpack.c.h.b16 %v461
        %v814 = vunpack.c.l.b16 %v462
        %v815 = vunpack.c.h.b16 %v462
        %v816 = vunpack.c.l.b16 %v463
        %v817 = vunpack.c.h.b16 %v463
        %v818 = vunpack.c.l.b16 %v464
        %v819 = vunpack.c.h.b16 %v464
        %v820 = vunpack.c.l.b16 %v465
        %v821 = vunpack.c.h.b16 %v465
        %v822 = vunpack.c.l.b16 %v466
        %v823 = vunpack.c.h.b16 %v466
        %v824 = vunpack.c.l.b16 %v467
        %v825 = vunpack.c.h.b16 %v467
        %v826 = vunpack.c.l.b16 %v468
        %v827 = vunpack.c.h.b16 %v468
        %v828 = vunpack.c.l.b16 %v469
        %v829 = vunpack.c.h.b16 %v469
        %v830 = vunpack.c.l.b16 %v470
        %v831 = vunpack.c.h.b16 %v470
        %v832 = vunpack.c.l.b16 %v471
        %v833 = vunpack.c.h.b16 %v471
        %v834 = vunpack.c.l.b16 %v472
        %v835 = vunpack.c.h.b16 %v472
        %v836 = vunpack.c.l.b16 %v473
        %v837 = vunpack.c.h.b16 %v473
        %v838 = vunpack.c.l.b16 %v474
        %v839 = vunpack.c.h.b16 %v474
        %v840 = vunpack.c.l.b16 %v475
        %v841 = vunpack.c.h.b16 %v475
        %v842 = vunpack.c.l.b16 %v476
        %v843 = vunpack.c.h.b16 %v476
        %v844 = vunpack.c.l.b16 %v477
        %v845 = vunpack.c.h.b16 %v477
        %v846 = vunpack.c.l.b16 %v478
        %v847 = vunpack.c.h.b16 %v478
        %v848 = vunpack.c.l.b16 %v479
        %v849 = vunpack.c.h.b16 %v479
        %v850 = vunpack.c.l.b16 %v480
        %v851 = vunpack.c.h.b16 %v480
        %v852 = vpack.c.b16 %v792, %v788
        %v853 = vpack.c.b16 %v793, %v789
        %v854 = vpack.c.b16 %v794, %v790
        %v855 = vpack.c.b16 %v795, %v791
        %v856 = vpack.c.b16 %v800, %v796
        %v857 = vpack.c.b16 %v801, %v797
        %v858 = vpack.c.b16 %v802, %v798
        %v859 = vpack.c.b16 %v803, %v799
        %v860 = vpack.c.b16 %v808, %v804
        %v861 = vpack.c.b16 %v809, %v805
        %v862 = vpack.c.b16 %v810, %v806
        %v863 = vpack.c.b16 %v811, %v807
        %v864 = vpack.c.b16 %v816, %v812
        %v865 = vpack.c.b16 %v817, %v813
        %v866 = vpack.c.b16 %v818, %v814
        %v867 = vpack.c.b16 %v819, %v815
        %v868 = vpack.c.b16 %v824, %v820
        %v869 = vpack.c.b16 %v825, %v821
        %v870 = vpack.c.b16 %v826, %v822
        %v871 = vpack.c.b16 %v827, %v823
        %v872 = vpack.c.b16 %v832, %v828
        %v873 = vpack.c.b16 %v833, %v829
        %v874 = vpack.c.b16 %v834, %v830
        %v875 = vpack.c.b16 %v835, %v831
        %v876 = vpack.c.b16 %v840, %v836
        %v877 = vpack.c.b16 %v841, %v837
        %v878 = vpack.c.b16 %v842, %v838
        %v879 = vpack.c.b16 %v843, %v839
        %v880 = vpack.c.b16 %v848, %v844
        %v881 = vpack.c.b16 %v849, %v845
        %v882 = vpack.c.b16 %v850, %v846
        %v883 = vpack.c.b16 %v851, %v847
        %916 = vmatprep.subr.bf16.mxu0 %v881
        %917 = vmatpush1.bf16.msra.mxu0 %v880
        %918 = vmatprep.subr.bf16.mxu0 %v877
        %919 = vmatpush1.bf16.msra.mxu0 %v876
        %920 = vmatprep.subr.bf16.mxu0 %v873
        %921 = vmatpush1.bf16.msra.mxu0 %v872
        %922 = vmatprep.subr.bf16.mxu0 %v869
        %923 = vmatpush1.bf16.msra.mxu0 %v868
        %924 = vmatprep.subr.bf16.mxu0 %v865
        %925 = vmatpush1.bf16.msra.mxu0 %v864
        %926 = vmatprep.subr.bf16.mxu0 %v861
        %927 = vmatpush1.bf16.msra.mxu0 %v860
        %928 = vmatprep.subr.bf16.mxu0 %v857
        %929 = vmatpush1.bf16.msra.mxu0 %v856
        %930 = vmatprep.subr.bf16.mxu0 %v853
        %931 = vmatpush1.bf16.msra.mxu0 %v852
        %932 = vmatprep.subr.bf16.mxu0 0
        %933 = vmatpush2.bf16.msra.mxu0 0
        %934 = vmatprep.subr.bf16.mxu0 0
        %935 = vmatpush2.bf16.msra.mxu0 0
        %936 = vmatprep.subr.bf16.mxu0 0
        %937 = vmatpush2.bf16.msra.mxu0 0
        %938 = vmatprep.subr.bf16.mxu0 0
        %939 = vmatpush2.bf16.msra.mxu0 0
        %940 = vmatprep.subr.bf16.mxu0 0
        %941 = vmatpush2.bf16.msra.mxu0 0
        %942 = vmatprep.subr.bf16.mxu0 0
        %943 = vmatpush2.bf16.msra.mxu0 0
        %944 = vmatprep.subr.bf16.mxu0 0
        %945 = vmatpush2.bf16.msra.mxu0 0
        %946 = vmatprep.subr.bf16.mxu0 0
        %947 = vmatpush2.bf16.msra.mxu0 0
        %948 = vmatprep.mubr.bf16.mxu0 0
        %949 = vmatmul.mubr.bf16.gmra.mxu0 %v448
        %v950 = vpop.f32.mrf.mxu0
        %v951 = vadd.f32 %v709, %v950
        %v952 = vpop.f32.mrf.mxu0
        %v953 = vadd.f32 %v711, %v952
        %v954 = vpop.f32.mrf.mxu0
        %v955 = vpop.f32.mrf.mxu0
        %956 = vdwg.mxu0
        %957 = vmatprep.subr.bf16.mxu0 %v883
        %958 = vmatpush1.bf16.msra.mxu0 %v882
        %959 = vmatprep.subr.bf16.mxu0 %v879
        %960 = vmatpush1.bf16.msra.mxu0 %v878
        %961 = vmatprep.subr.bf16.mxu0 %v875
        %962 = vmatpush1.bf16.msra.mxu0 %v874
        %963 = vmatprep.subr.bf16.mxu0 %v871
        %964 = vmatpush1.bf16.msra.mxu0 %v870
        %965 = vmatprep.subr.bf16.mxu0 %v867
        %966 = vmatpush1.bf16.msra.mxu0 %v866
        %967 = vmatprep.subr.bf16.mxu0 %v863
        %968 = vmatpush1.bf16.msra.mxu0 %v862
        %969 = vmatprep.subr.bf16.mxu0 %v859
        %970 = vmatpush1.bf16.msra.mxu0 %v858
        %971 = vmatprep.subr.bf16.mxu0 %v855
        %972 = vmatpush1.bf16.msra.mxu0 %v854
        %973 = vmatprep.subr.bf16.mxu0 0
        %974 = vmatpush2.bf16.msra.mxu0 0
        %975 = vmatprep.subr.bf16.mxu0 0
        %976 = vmatpush2.bf16.msra.mxu0 0
        %977 = vmatprep.subr.bf16.mxu0 0
        %978 = vmatpush2.bf16.msra.mxu0 0
        %979 = vmatprep.subr.bf16.mxu0 0
        %980 = vmatpush2.bf16.msra.mxu0 0
        %981 = vmatprep.subr.bf16.mxu0 0
        %982 = vmatpush2.bf16.msra.mxu0 0
        %983 = vmatprep.subr.bf16.mxu0 0
        %984 = vmatpush2.bf16.msra.mxu0 0
        %985 = vmatprep.subr.bf16.mxu0 0
        %986 = vmatpush2.bf16.msra.mxu0 0
        %987 = vmatprep.subr.bf16.mxu0 0
        %988 = vmatpush2.bf16.msra.mxu0 0
        %989 = vmatprep.mubr.bf16.mxu0 0
        %990 = vmatmul.mubr.bf16.gmra.mxu0 %v448
        %v991 = vpop.f32.mrf.mxu0
        %v992 = vadd.f32 %v750, %v991
        %v993 = vpop.f32.mrf.mxu0
        %v994 = vadd.f32 %v752, %v993
        %v995 = vpop.f32.mrf.mxu0
        %v996 = vpop.f32.mrf.mxu0
        %997 = vdwg.mxu0
        %v998 = vadd.f32 %v951, %v422
        %v999 = vadd.f32 %v953, %v426
        %v1000 = vadd.f32 %v992, %v430
        %v1001 = vadd.f32 %v994, %v434
        %v1002 = vxor.u32 %v998, 2147483648
        %v1003 = vmul.f32 %v1002, 1.442695
        %v1004 = vpow.pop %v1003
        %v1005 = vadd.f32 %v1004, 1.0
        %v1006 = vrcp.pop %v1005
        %v1007 = vmul.f32 1.0, %v1006
        %v1008 = vxor.u32 %v999, 2147483648
        %v1009 = vmul.f32 %v1008, 1.442695
        %v1010 = vpow.pop %v1009
        %v1011 = vadd.f32 %v1010, 1.0
        %v1012 = vrcp.pop %v1011
        %v1013 = vmul.f32 1.0, %v1012
        %v1014 = vmul.f32 %v1007, %v1001
        %v1015 = vadd.f32 %v1000, %v1014
        %v1016 = vtanh.pop %v1015
        %v1017 = vsub.f32 1.0, %v1013
        %v1018 = vmul.f32 %v1017, %v1016
        %v1019 = vmul.f32 %v1013, %v446
        %v1020 = vadd.f32 %v1018, %v1019
        %v1021 = vpack.c.bf16 %v1020, %v1020
        %v1022 = vld [vmem:[#allocation11] sm:$0xf]
        %v1023 = vld [vmem:[#allocation11 + $0x4] sm:$0xf]
        %v1024 = vld [vmem:[#allocation11 + $0x8] sm:$0xf]
        %v1025 = vld [vmem:[#allocation11 + $0xc] sm:$0xf]
        %v1026 = vld [vmem:[#allocation11 + $0x10] sm:$0xf]
        %v1027 = vld [vmem:[#allocation11 + $0x14] sm:$0xf]
        %v1028 = vld [vmem:[#allocation11 + $0x18] sm:$0xf]
        %v1029 = vld [vmem:[#allocation11 + $0x1c] sm:$0xf]
        %v1030 = vld [vmem:[#allocation11 + $0x20] sm:$0xf]
        %v1031 = vld [vmem:[#allocation11 + $0x24] sm:$0xf]
        %v1032 = vld [vmem:[#allocation11 + $0x28] sm:$0xf]
        %v1033 = vld [vmem:[#allocation11 + $0x2c] sm:$0xf]
        %v1034 = vld [vmem:[#allocation11 + $0x30] sm:$0xf]
        %v1035 = vld [vmem:[#allocation11 + $0x34] sm:$0xf]
        %v1036 = vld [vmem:[#allocation11 + $0x38] sm:$0xf]
        %v1037 = vld [vmem:[#allocation11 + $0x3c] sm:$0xf]
        %v1054 = vunpack.c.l.b16 %v1022
        %v1055 = vunpack.c.l.b16 %v1023
        %v1056 = vunpack.c.l.b16 %v1024
        %v1057 = vunpack.c.l.b16 %v1025
        %v1058 = vunpack.c.l.b16 %v1026
        %v1059 = vunpack.c.l.b16 %v1027
        %v1060 = vunpack.c.l.b16 %v1028
        %v1061 = vunpack.c.l.b16 %v1029
        %v1062 = vunpack.c.l.b16 %v1030
        %v1063 = vunpack.c.l.b16 %v1031
        %v1064 = vunpack.c.l.b16 %v1032
        %v1065 = vunpack.c.l.b16 %v1033
        %v1066 = vunpack.c.l.b16 %v1034
        %v1067 = vunpack.c.l.b16 %v1035
        %v1068 = vunpack.c.l.b16 %v1036
        %v1069 = vunpack.c.l.b16 %v1037
        %v1070 = vpack.c.b16 %v1055, %v1054
        %v1071 = vpack.c.b16 %v1057, %v1056
        %v1072 = vpack.c.b16 %v1059, %v1058
        %v1073 = vpack.c.b16 %v1061, %v1060
        %v1074 = vpack.c.b16 %v1063, %v1062
        %v1075 = vpack.c.b16 %v1065, %v1064
        %v1076 = vpack.c.b16 %v1067, %v1066
        %v1077 = vpack.c.b16 %v1069, %v1068
        %1086 = vmatprep.subr.bf16.mxu0 0
        %1087 = vmatpush1.bf16.msra.mxu0 %v1077
        %1088 = vmatprep.subr.bf16.mxu0 0
        %1089 = vmatpush1.bf16.msra.mxu0 %v1076
        %1090 = vmatprep.subr.bf16.mxu0 0
        %1091 = vmatpush1.bf16.msra.mxu0 %v1075
        %1092 = vmatprep.subr.bf16.mxu0 0
        %1093 = vmatpush1.bf16.msra.mxu0 %v1074
        %1094 = vmatprep.subr.bf16.mxu0 0
        %1095 = vmatpush1.bf16.msra.mxu0 %v1073
        %1096 = vmatprep.subr.bf16.mxu0 0
        %1097 = vmatpush1.bf16.msra.mxu0 %v1072
        %1098 = vmatprep.subr.bf16.mxu0 0
        %1099 = vmatpush1.bf16.msra.mxu0 %v1071
        %1100 = vmatprep.subr.bf16.mxu0 0
        %1101 = vmatpush1.bf16.msra.mxu0 %v1070
        %1102 = vmatprep.subr.bf16.mxu0 0
        %1103 = vmatpush2.bf16.msra.mxu0 0
        %1104 = vmatprep.subr.bf16.mxu0 0
        %1105 = vmatpush2.bf16.msra.mxu0 0
        %1106 = vmatprep.subr.bf16.mxu0 0
        %1107 = vmatpush2.bf16.msra.mxu0 0
        %1108 = vmatprep.subr.bf16.mxu0 0
        %1109 = vmatpush2.bf16.msra.mxu0 0
        %1110 = vmatprep.subr.bf16.mxu0 0
        %1111 = vmatpush2.bf16.msra.mxu0 0
        %1112 = vmatprep.subr.bf16.mxu0 0
        %1113 = vmatpush2.bf16.msra.mxu0 0
        %1114 = vmatprep.subr.bf16.mxu0 0
        %1115 = vmatpush2.bf16.msra.mxu0 0
        %1116 = vmatprep.subr.bf16.mxu0 0
        %1117 = vmatpush2.bf16.msra.mxu0 0
        %1118 = vmatprep.mubr.bf16.mxu0 0
        %1119 = vmatmul.mubr.bf16.gmra.mxu0 %v1021
        %v1120 = vpop.f32.mrf.mxu0
        %v1121 = vadd.f32 %v444, %v1120
        %v1122 = vpop.f32.mrf.mxu0
        %v1123 = vpop.f32.mrf.mxu0
        %v1124 = vpop.f32.mrf.mxu0
        %1125 = vdwg.mxu0
        %1126 = vmax.xlane.f32.xlu0 %v1121
        %v1127 = vpop.xlane.xlu0 %1126
        %v1128 = vsub.f32 %v1121, %v1127
        %v1129 = vmul.f32 %v1128, 1.442695
        %v1130 = vpow.pop %v1129
        %1131 = vadd.xlane.f32.xlu0 %v1130
        %v1132 = vpop.xlane.xlu0 %1131
        %v1133 = vlog2.pop %v1132
        %v1134 = vmul.f32 %v1133, 0.6931472
        %v1135 = vadd.f32 %v1127, %v1134
        %v1136 = vsub.f32 %v1121, %v1135
        %1137 = vst [vmem:[%s405] sm:$0xff] %v1136
        %s1138 = scalar_lea.vmem %s359, 4 [#allocation3]
        %v1139 = vld [vmem:[%s1138] sm:$0xf]
        %v1140 = vmax.bf16 %v1139, 0
        %v1141 = vld [vmem:[#allocation8] sm:$0xff]
        %v1142 = vld [vmem:[#allocation8 + $0x8] sm:$0xff]
        %v1143 = vld [vmem:[#allocation8 + $0x10] sm:$0xff]
        %v1144 = vld [vmem:[#allocation8 + $0x18] sm:$0xff]
        %v1145 = vld [vmem:[#allocation8 + $0x20] sm:$0xff]
        %v1146 = vld [vmem:[#allocation8 + $0x28] sm:$0xff]
        %v1147 = vld [vmem:[#allocation8 + $0x30] sm:$0xff]
        %v1148 = vld [vmem:[#allocation8 + $0x38] sm:$0xff]
        %v1149 = vld [vmem:[#allocation8 + $0x40] sm:$0xff]
        %v1150 = vld [vmem:[#allocation8 + $0x48] sm:$0xff]
        %v1151 = vld [vmem:[#allocation8 + $0x50] sm:$0xff]
        %v1152 = vld [vmem:[#allocation8 + $0x58] sm:$0xff]
        %v1153 = vld [vmem:[#allocation8 + $0x60] sm:$0xff]
        %v1154 = vld [vmem:[#allocation8 + $0x68] sm:$0xff]
        %v1155 = vld [vmem:[#allocation8 + $0x70] sm:$0xff]
        %v1156 = vld [vmem:[#allocation8 + $0x78] sm:$0xff]
        %v1157 = vld [vmem:[#allocation8 + $0x80] sm:$0xff]
        %v1158 = vld [vmem:[#allocation8 + $0x88] sm:$0xff]
        %v1159 = vld [vmem:[#allocation8 + $0x90] sm:$0xff]
        %v1160 = vld [vmem:[#allocation8 + $0x98] sm:$0xff]
        %v1161 = vld [vmem:[#allocation8 + $0xa0] sm:$0xff]
        %v1162 = vld [vmem:[#allocation8 + $0xa8] sm:$0xff]
        %v1163 = vld [vmem:[#allocation8 + $0xb0] sm:$0xff]
        %v1164 = vld [vmem:[#allocation8 + $0xb8] sm:$0xff]
        %v1165 = vld [vmem:[#allocation8 + $0xc0] sm:$0xff]
        %v1166 = vld [vmem:[#allocation8 + $0xc8] sm:$0xff]
        %v1167 = vld [vmem:[#allocation8 + $0xd0] sm:$0xff]
        %v1168 = vld [vmem:[#allocation8 + $0xd8] sm:$0xff]
        %v1169 = vld [vmem:[#allocation8 + $0xe0] sm:$0xff]
        %v1170 = vld [vmem:[#allocation8 + $0xe8] sm:$0xff]
        %v1171 = vld [vmem:[#allocation8 + $0xf0] sm:$0xff]
        %v1172 = vld [vmem:[#allocation8 + $0xf8] sm:$0xff]
        %v1173 = vld [vmem:[#allocation9] sm:$0xff]
        %v1174 = vld [vmem:[#allocation9 + $0x8] sm:$0xff]
        %v1175 = vld [vmem:[#allocation9 + $0x10] sm:$0xff]
        %v1176 = vld [vmem:[#allocation9 + $0x18] sm:$0xff]
        %v1177 = vld [vmem:[#allocation9 + $0x20] sm:$0xff]
        %v1178 = vld [vmem:[#allocation9 + $0x28] sm:$0xff]
        %v1179 = vld [vmem:[#allocation9 + $0x30] sm:$0xff]
        %v1180 = vld [vmem:[#allocation9 + $0x38] sm:$0xff]
        %v1181 = vld [vmem:[#allocation9 + $0x40] sm:$0xff]
        %v1182 = vld [vmem:[#allocation9 + $0x48] sm:$0xff]
        %v1183 = vld [vmem:[#allocation9 + $0x50] sm:$0xff]
        %v1184 = vld [vmem:[#allocation9 + $0x58] sm:$0xff]
        %v1185 = vld [vmem:[#allocation9 + $0x60] sm:$0xff]
        %v1186 = vld [vmem:[#allocation9 + $0x68] sm:$0xff]
        %v1187 = vld [vmem:[#allocation9 + $0x70] sm:$0xff]
        %v1188 = vld [vmem:[#allocation9 + $0x78] sm:$0xff]
        %v1189 = vld [vmem:[#allocation9 + $0x80] sm:$0xff]
        %v1190 = vld [vmem:[#allocation9 + $0x88] sm:$0xff]
        %v1191 = vld [vmem:[#allocation9 + $0x90] sm:$0xff]
        %v1192 = vld [vmem:[#allocation9 + $0x98] sm:$0xff]
        %v1193 = vld [vmem:[#allocation9 + $0xa0] sm:$0xff]
        %v1194 = vld [vmem:[#allocation9 + $0xa8] sm:$0xff]
        %v1195 = vld [vmem:[#allocation9 + $0xb0] sm:$0xff]
        %v1196 = vld [vmem:[#allocation9 + $0xb8] sm:$0xff]
        %v1197 = vld [vmem:[#allocation9 + $0xc0] sm:$0xff]
        %v1198 = vld [vmem:[#allocation9 + $0xc8] sm:$0xff]
        %v1199 = vld [vmem:[#allocation9 + $0xd0] sm:$0xff]
        %v1200 = vld [vmem:[#allocation9 + $0xd8] sm:$0xff]
        %v1201 = vld [vmem:[#allocation9 + $0xe0] sm:$0xff]
        %v1202 = vld [vmem:[#allocation9 + $0xe8] sm:$0xff]
        %v1203 = vld [vmem:[#allocation9 + $0xf0] sm:$0xff]
        %v1204 = vld [vmem:[#allocation9 + $0xf8] sm:$0xff]
        %v1237 = vunpack.c.l.b16 %v1173
        %v1238 = vunpack.c.h.b16 %v1173
        %v1239 = vunpack.c.l.b16 %v1174
        %v1240 = vunpack.c.h.b16 %v1174
        %v1241 = vunpack.c.l.b16 %v1175
        %v1242 = vunpack.c.h.b16 %v1175
        %v1243 = vunpack.c.l.b16 %v1176
        %v1244 = vunpack.c.h.b16 %v1176
        %v1245 = vunpack.c.l.b16 %v1177
        %v1246 = vunpack.c.h.b16 %v1177
        %v1247 = vunpack.c.l.b16 %v1178
        %v1248 = vunpack.c.h.b16 %v1178
        %v1249 = vunpack.c.l.b16 %v1179
        %v1250 = vunpack.c.h.b16 %v1179
        %v1251 = vunpack.c.l.b16 %v1180
        %v1252 = vunpack.c.h.b16 %v1180
        %v1253 = vunpack.c.l.b16 %v1181
        %v1254 = vunpack.c.h.b16 %v1181
        %v1255 = vunpack.c.l.b16 %v1182
        %v1256 = vunpack.c.h.b16 %v1182
        %v1257 = vunpack.c.l.b16 %v1183
        %v1258 = vunpack.c.h.b16 %v1183
        %v1259 = vunpack.c.l.b16 %v1184
        %v1260 = vunpack.c.h.b16 %v1184
        %v1261 = vunpack.c.l.b16 %v1185
        %v1262 = vunpack.c.h.b16 %v1185
        %v1263 = vunpack.c.l.b16 %v1186
        %v1264 = vunpack.c.h.b16 %v1186
        %v1265 = vunpack.c.l.b16 %v1187
        %v1266 = vunpack.c.h.b16 %v1187
        %v1267 = vunpack.c.l.b16 %v1188
        %v1268 = vunpack.c.h.b16 %v1188
        %v1269 = vunpack.c.l.b16 %v1189
        %v1270 = vunpack.c.h.b16 %v1189
        %v1271 = vunpack.c.l.b16 %v1190
        %v1272 = vunpack.c.h.b16 %v1190
        %v1273 = vunpack.c.l.b16 %v1191
        %v1274 = vunpack.c.h.b16 %v1191
        %v1275 = vunpack.c.l.b16 %v1192
        %v1276 = vunpack.c.h.b16 %v1192
        %v1277 = vunpack.c.l.b16 %v1193
        %v1278 = vunpack.c.h.b16 %v1193
        %v1279 = vunpack.c.l.b16 %v1194
        %v1280 = vunpack.c.h.b16 %v1194
        %v1281 = vunpack.c.l.b16 %v1195
        %v1282 = vunpack.c.h.b16 %v1195
        %v1283 = vunpack.c.l.b16 %v1196
        %v1284 = vunpack.c.h.b16 %v1196
        %v1285 = vunpack.c.l.b16 %v1197
        %v1286 = vunpack.c.h.b16 %v1197
        %v1287 = vunpack.c.l.b16 %v1198
        %v1288 = vunpack.c.h.b16 %v1198
        %v1289 = vunpack.c.l.b16 %v1199
        %v1290 = vunpack.c.h.b16 %v1199
        %v1291 = vunpack.c.l.b16 %v1200
        %v1292 = vunpack.c.h.b16 %v1200
        %v1293 = vunpack.c.l.b16 %v1201
        %v1294 = vunpack.c.h.b16 %v1201
        %v1295 = vunpack.c.l.b16 %v1202
        %v1296 = vunpack.c.h.b16 %v1202
        %v1297 = vunpack.c.l.b16 %v1203
        %v1298 = vunpack.c.h.b16 %v1203
        %v1299 = vunpack.c.l.b16 %v1204
        %v1300 = vunpack.c.h.b16 %v1204
        %v1301 = vpack.c.b16 %v1241, %v1237
        %v1302 = vpack.c.b16 %v1242, %v1238
        %v1303 = vpack.c.b16 %v1243, %v1239
        %v1304 = vpack.c.b16 %v1244, %v1240
        %v1305 = vpack.c.b16 %v1249, %v1245
        %v1306 = vpack.c.b16 %v1250, %v1246
        %v1307 = vpack.c.b16 %v1251, %v1247
        %v1308 = vpack.c.b16 %v1252, %v1248
        %v1309 = vpack.c.b16 %v1257, %v1253
        %v1310 = vpack.c.b16 %v1258, %v1254
        %v1311 = vpack.c.b16 %v1259, %v1255
        %v1312 = vpack.c.b16 %v1260, %v1256
        %v1313 = vpack.c.b16 %v1265, %v1261
        %v1314 = vpack.c.b16 %v1266, %v1262
        %v1315 = vpack.c.b16 %v1267, %v1263
        %v1316 = vpack.c.b16 %v1268, %v1264
        %v1317 = vpack.c.b16 %v1273, %v1269
        %v1318 = vpack.c.b16 %v1274, %v1270
        %v1319 = vpack.c.b16 %v1275, %v1271
        %v1320 = vpack.c.b16 %v1276, %v1272
        %v1321 = vpack.c.b16 %v1281, %v1277
        %v1322 = vpack.c.b16 %v1282, %v1278
        %v1323 = vpack.c.b16 %v1283, %v1279
        %v1324 = vpack.c.b16 %v1284, %v1280
        %v1325 = vpack.c.b16 %v1289, %v1285
        %v1326 = vpack.c.b16 %v1290, %v1286
        %v1327 = vpack.c.b16 %v1291, %v1287
        %v1328 = vpack.c.b16 %v1292, %v1288
        %v1329 = vpack.c.b16 %v1297, %v1293
        %v1330 = vpack.c.b16 %v1298, %v1294
        %v1331 = vpack.c.b16 %v1299, %v1295
        %v1332 = vpack.c.b16 %v1300, %v1296
        %1365 = vmatprep.subr.bf16.mxu0 %v1330
        %1366 = vmatpush1.bf16.msra.mxu0 %v1329
        %1367 = vmatprep.subr.bf16.mxu0 %v1326
        %1368 = vmatpush1.bf16.msra.mxu0 %v1325
        %1369 = vmatprep.subr.bf16.mxu0 %v1322
        %1370 = vmatpush1.bf16.msra.mxu0 %v1321
        %1371 = vmatprep.subr.bf16.mxu0 %v1318
        %1372 = vmatpush1.bf16.msra.mxu0 %v1317
        %1373 = vmatprep.subr.bf16.mxu0 %v1314
        %1374 = vmatpush1.bf16.msra.mxu0 %v1313
        %1375 = vmatprep.subr.bf16.mxu0 %v1310
        %1376 = vmatpush1.bf16.msra.mxu0 %v1309
        %1377 = vmatprep.subr.bf16.mxu0 %v1306
        %1378 = vmatpush1.bf16.msra.mxu0 %v1305
        %1379 = vmatprep.subr.bf16.mxu0 %v1302
        %1380 = vmatpush1.bf16.msra.mxu0 %v1301
        %1381 = vmatprep.subr.bf16.mxu0 0
        %1382 = vmatpush2.bf16.msra.mxu0 0
        %1383 = vmatprep.subr.bf16.mxu0 0
        %1384 = vmatpush2.bf16.msra.mxu0 0
        %1385 = vmatprep.subr.bf16.mxu0 0
        %1386 = vmatpush2.bf16.msra.mxu0 0
        %1387 = vmatprep.subr.bf16.mxu0 0
        %1388 = vmatpush2.bf16.msra.mxu0 0
        %1389 = vmatprep.subr.bf16.mxu0 0
        %1390 = vmatpush2.bf16.msra.mxu0 0
        %1391 = vmatprep.subr.bf16.mxu0 0
        %1392 = vmatpush2.bf16.msra.mxu0 0
        %1393 = vmatprep.subr.bf16.mxu0 0
        %1394 = vmatpush2.bf16.msra.mxu0 0
        %1395 = vmatprep.subr.bf16.mxu0 0
        %1396 = vmatpush2.bf16.msra.mxu0 0
        %1397 = vmatprep.mubr.bf16.mxu0 0
        %1398 = vmatmul.mubr.bf16.gmra.mxu0 %v1021
        %v1399 = vpop.f32.mrf.mxu0
        %v1400 = vadd.f32 0.0, %v1399
        %v1401 = vpop.f32.mrf.mxu0
        %v1402 = vadd.f32 0.0, %v1401
        %v1403 = vpop.f32.mrf.mxu0
        %v1404 = vpop.f32.mrf.mxu0
        %1405 = vdwg.mxu0
        %1406 = vmatprep.subr.bf16.mxu0 %v1332
        %1407 = vmatpush1.bf16.msra.mxu0 %v1331
        %1408 = vmatprep.subr.bf16.mxu0 %v1328
        %1409 = vmatpush1.bf16.msra.mxu0 %v1327
        %1410 = vmatprep.subr.bf16.mxu0 %v1324
        %1411 = vmatpush1.bf16.msra.mxu0 %v1323
        %1412 = vmatprep.subr.bf16.mxu0 %v1320
        %1413 = vmatpush1.bf16.msra.mxu0 %v1319
        %1414 = vmatprep.subr.bf16.mxu0 %v1316
        %1415 = vmatpush1.bf16.msra.mxu0 %v1315
        %1416 = vmatprep.subr.bf16.mxu0 %v1312
        %1417 = vmatpush1.bf16.msra.mxu0 %v1311
        %1418 = vmatprep.subr.bf16.mxu0 %v1308
        %1419 = vmatpush1.bf16.msra.mxu0 %v1307
        %1420 = vmatprep.subr.bf16.mxu0 %v1304
        %1421 = vmatpush1.bf16.msra.mxu0 %v1303
        %1422 = vmatprep.subr.bf16.mxu0 0
        %1423 = vmatpush2.bf16.msra.mxu0 0
        %1424 = vmatprep.subr.bf16.mxu0 0
        %1425 = vmatpush2.bf16.msra.mxu0 0
        %1426 = vmatprep.subr.bf16.mxu0 0
        %1427 = vmatpush2.bf16.msra.mxu0 0
        %1428 = vmatprep.subr.bf16.mxu0 0
        %1429 = vmatpush2.bf16.msra.mxu0 0
        %1430 = vmatprep.subr.bf16.mxu0 0
        %1431 = vmatpush2.bf16.msra.mxu0 0
        %1432 = vmatprep.subr.bf16.mxu0 0
        %1433 = vmatpush2.bf16.msra.mxu0 0
        %1434 = vmatprep.subr.bf16.mxu0 0
        %1435 = vmatpush2.bf16.msra.mxu0 0
        %1436 = vmatprep.subr.bf16.mxu0 0
        %1437 = vmatpush2.bf16.msra.mxu0 0
        %1438 = vmatprep.mubr.bf16.mxu0 0
        %1439 = vmatmul.mubr.bf16.gmra.mxu0 %v1021
        %v1440 = vpop.f32.mrf.mxu0
        %v1441 = vadd.f32 0.0, %v1440
        %v1442 = vpop.f32.mrf.mxu0
        %v1443 = vadd.f32 0.0, %v1442
        %v1444 = vpop.f32.mrf.mxu0
        %v1445 = vpop.f32.mrf.mxu0
        %1446 = vdwg.mxu0
        %v1479 = vunpack.c.l.b16 %v1141
        %v1480 = vunpack.c.h.b16 %v1141
        %v1481 = vunpack.c.l.b16 %v1142
        %v1482 = vunpack.c.h.b16 %v1142
        %v1483 = vunpack.c.l.b16 %v1143
        %v1484 = vunpack.c.h.b16 %v1143
        %v1485 = vunpack.c.l.b16 %v1144
        %v1486 = vunpack.c.h.b16 %v1144
        %v1487 = vunpack.c.l.b16 %v1145
        %v1488 = vunpack.c.h.b16 %v1145
        %v1489 = vunpack.c.l.b16 %v1146
        %v1490 = vunpack.c.h.b16 %v1146
        %v1491 = vunpack.c.l.b16 %v1147
        %v1492 = vunpack.c.h.b16 %v1147
        %v1493 = vunpack.c.l.b16 %v1148
        %v1494 = vunpack.c.h.b16 %v1148
        %v1495 = vunpack.c.l.b16 %v1149
        %v1496 = vunpack.c.h.b16 %v1149
        %v1497 = vunpack.c.l.b16 %v1150
        %v1498 = vunpack.c.h.b16 %v1150
        %v1499 = vunpack.c.l.b16 %v1151
        %v1500 = vunpack.c.h.b16 %v1151
        %v1501 = vunpack.c.l.b16 %v1152
        %v1502 = vunpack.c.h.b16 %v1152
        %v1503 = vunpack.c.l.b16 %v1153
        %v1504 = vunpack.c.h.b16 %v1153
        %v1505 = vunpack.c.l.b16 %v1154
        %v1506 = vunpack.c.h.b16 %v1154
        %v1507 = vunpack.c.l.b16 %v1155
        %v1508 = vunpack.c.h.b16 %v1155
        %v1509 = vunpack.c.l.b16 %v1156
        %v1510 = vunpack.c.h.b16 %v1156
        %v1511 = vunpack.c.l.b16 %v1157
        %v1512 = vunpack.c.h.b16 %v1157
        %v1513 = vunpack.c.l.b16 %v1158
        %v1514 = vunpack.c.h.b16 %v1158
        %v1515 = vunpack.c.l.b16 %v1159
        %v1516 = vunpack.c.h.b16 %v1159
        %v1517 = vunpack.c.l.b16 %v1160
        %v1518 = vunpack.c.h.b16 %v1160
        %v1519 = vunpack.c.l.b16 %v1161
        %v1520 = vunpack.c.h.b16 %v1161
        %v1521 = vunpack.c.l.b16 %v1162
        %v1522 = vunpack.c.h.b16 %v1162
        %v1523 = vunpack.c.l.b16 %v1163
        %v1524 = vunpack.c.h.b16 %v1163
        %v1525 = vunpack.c.l.b16 %v1164
        %v1526 = vunpack.c.h.b16 %v1164
        %v1527 = vunpack.c.l.b16 %v1165
        %v1528 = vunpack.c.h.b16 %v1165
        %v1529 = vunpack.c.l.b16 %v1166
        %v1530 = vunpack.c.h.b16 %v1166
        %v1531 = vunpack.c.l.b16 %v1167
        %v1532 = vunpack.c.h.b16 %v1167
        %v1533 = vunpack.c.l.b16 %v1168
        %v1534 = vunpack.c.h.b16 %v1168
        %v1535 = vunpack.c.l.b16 %v1169
        %v1536 = vunpack.c.h.b16 %v1169
        %v1537 = vunpack.c.l.b16 %v1170
        %v1538 = vunpack.c.h.b16 %v1170
        %v1539 = vunpack.c.l.b16 %v1171
        %v1540 = vunpack.c.h.b16 %v1171
        %v1541 = vunpack.c.l.b16 %v1172
        %v1542 = vunpack.c.h.b16 %v1172
        %v1543 = vpack.c.b16 %v1483, %v1479
        %v1544 = vpack.c.b16 %v1484, %v1480
        %v1545 = vpack.c.b16 %v1485, %v1481
        %v1546 = vpack.c.b16 %v1486, %v1482
        %v1547 = vpack.c.b16 %v1491, %v1487
        %v1548 = vpack.c.b16 %v1492, %v1488
        %v1549 = vpack.c.b16 %v1493, %v1489
        %v1550 = vpack.c.b16 %v1494, %v1490
        %v1551 = vpack.c.b16 %v1499, %v1495
        %v1552 = vpack.c.b16 %v1500, %v1496
        %v1553 = vpack.c.b16 %v1501, %v1497
        %v1554 = vpack.c.b16 %v1502, %v1498
        %v1555 = vpack.c.b16 %v1507, %v1503
        %v1556 = vpack.c.b16 %v1508, %v1504
        %v1557 = vpack.c.b16 %v1509, %v1505
        %v1558 = vpack.c.b16 %v1510, %v1506
        %v1559 = vpack.c.b16 %v1515, %v1511
        %v1560 = vpack.c.b16 %v1516, %v1512
        %v1561 = vpack.c.b16 %v1517, %v1513
        %v1562 = vpack.c.b16 %v1518, %v1514
        %v1563 = vpack.c.b16 %v1523, %v1519
        %v1564 = vpack.c.b16 %v1524, %v1520
        %v1565 = vpack.c.b16 %v1525, %v1521
        %v1566 = vpack.c.b16 %v1526, %v1522
        %v1567 = vpack.c.b16 %v1531, %v1527
        %v1568 = vpack.c.b16 %v1532, %v1528
        %v1569 = vpack.c.b16 %v1533, %v1529
        %v1570 = vpack.c.b16 %v1534, %v1530
        %v1571 = vpack.c.b16 %v1539, %v1535
        %v1572 = vpack.c.b16 %v1540, %v1536
        %v1573 = vpack.c.b16 %v1541, %v1537
        %v1574 = vpack.c.b16 %v1542, %v1538
        %1607 = vmatprep.subr.bf16.mxu0 %v1572
        %1608 = vmatpush1.bf16.msra.mxu0 %v1571
        %1609 = vmatprep.subr.bf16.mxu0 %v1568
        %1610 = vmatpush1.bf16.msra.mxu0 %v1567
        %1611 = vmatprep.subr.bf16.mxu0 %v1564
        %1612 = vmatpush1.bf16.msra.mxu0 %v1563
        %1613 = vmatprep.subr.bf16.mxu0 %v1560
        %1614 = vmatpush1.bf16.msra.mxu0 %v1559
        %1615 = vmatprep.subr.bf16.mxu0 %v1556
        %1616 = vmatpush1.bf16.msra.mxu0 %v1555
        %1617 = vmatprep.subr.bf16.mxu0 %v1552
        %1618 = vmatpush1.bf16.msra.mxu0 %v1551
        %1619 = vmatprep.subr.bf16.mxu0 %v1548
        %1620 = vmatpush1.bf16.msra.mxu0 %v1547
        %1621 = vmatprep.subr.bf16.mxu0 %v1544
        %1622 = vmatpush1.bf16.msra.mxu0 %v1543
        %1623 = vmatprep.subr.bf16.mxu0 0
        %1624 = vmatpush2.bf16.msra.mxu0 0
        %1625 = vmatprep.subr.bf16.mxu0 0
        %1626 = vmatpush2.bf16.msra.mxu0 0
        %1627 = vmatprep.subr.bf16.mxu0 0
        %1628 = vmatpush2.bf16.msra.mxu0 0
        %1629 = vmatprep.subr.bf16.mxu0 0
        %1630 = vmatpush2.bf16.msra.mxu0 0
        %1631 = vmatprep.subr.bf16.mxu0 0
        %1632 = vmatpush2.bf16.msra.mxu0 0
        %1633 = vmatprep.subr.bf16.mxu0 0
        %1634 = vmatpush2.bf16.msra.mxu0 0
        %1635 = vmatprep.subr.bf16.mxu0 0
        %1636 = vmatpush2.bf16.msra.mxu0 0
        %1637 = vmatprep.subr.bf16.mxu0 0
        %1638 = vmatpush2.bf16.msra.mxu0 0
        %1639 = vmatprep.mubr.bf16.mxu0 0
        %1640 = vmatmul.mubr.bf16.gmra.mxu0 %v1140
        %v1641 = vpop.f32.mrf.mxu0
        %v1642 = vadd.f32 %v1400, %v1641
        %v1643 = vpop.f32.mrf.mxu0
        %v1644 = vadd.f32 %v1402, %v1643
        %v1645 = vpop.f32.mrf.mxu0
        %v1646 = vpop.f32.mrf.mxu0
        %1647 = vdwg.mxu0
        %1648 = vmatprep.subr.bf16.mxu0 %v1574
        %1649 = vmatpush1.bf16.msra.mxu0 %v1573
        %1650 = vmatprep.subr.bf16.mxu0 %v1570
        %1651 = vmatpush1.bf16.msra.mxu0 %v1569
        %1652 = vmatprep.subr.bf16.mxu0 %v1566
        %1653 = vmatpush1.bf16.msra.mxu0 %v1565
        %1654 = vmatprep.subr.bf16.mxu0 %v1562
        %1655 = vmatpush1.bf16.msra.mxu0 %v1561
        %1656 = vmatprep.subr.bf16.mxu0 %v1558
        %1657 = vmatpush1.bf16.msra.mxu0 %v1557
        %1658 = vmatprep.subr.bf16.mxu0 %v1554
        %1659 = vmatpush1.bf16.msra.mxu0 %v1553
        %1660 = vmatprep.subr.bf16.mxu0 %v1550
        %1661 = vmatpush1.bf16.msra.mxu0 %v1549
        %1662 = vmatprep.subr.bf16.mxu0 %v1546
        %1663 = vmatpush1.bf16.msra.mxu0 %v1545
        %1664 = vmatprep.subr.bf16.mxu0 0
        %1665 = vmatpush2.bf16.msra.mxu0 0
        %1666 = vmatprep.subr.bf16.mxu0 0
        %1667 = vmatpush2.bf16.msra.mxu0 0
        %1668 = vmatprep.subr.bf16.mxu0 0
        %1669 = vmatpush2.bf16.msra.mxu0 0
        %1670 = vmatprep.subr.bf16.mxu0 0
        %1671 = vmatpush2.bf16.msra.mxu0 0
        %1672 = vmatprep.subr.bf16.mxu0 0
        %1673 = vmatpush2.bf16.msra.mxu0 0
        %1674 = vmatprep.subr.bf16.mxu0 0
        %1675 = vmatpush2.bf16.msra.mxu0 0
        %1676 = vmatprep.subr.bf16.mxu0 0
        %1677 = vmatpush2.bf16.msra.mxu0 0
        %1678 = vmatprep.subr.bf16.mxu0 0
        %1679 = vmatpush2.bf16.msra.mxu0 0
        %1680 = vmatprep.mubr.bf16.mxu0 0
        %1681 = vmatmul.mubr.bf16.gmra.mxu0 %v1140
        %v1682 = vpop.f32.mrf.mxu0
        %v1683 = vadd.f32 %v1441, %v1682
        %v1684 = vpop.f32.mrf.mxu0
        %v1685 = vadd.f32 %v1443, %v1684
        %v1686 = vpop.f32.mrf.mxu0
        %v1687 = vpop.f32.mrf.mxu0
        %1688 = vdwg.mxu0
        %v1689 = vadd.f32 %v1642, %v422
        %v1690 = vadd.f32 %v1644, %v426
        %v1691 = vadd.f32 %v1683, %v430
        %v1692 = vadd.f32 %v1685, %v434
        %v1693 = vxor.u32 %v1689, 2147483648
        %v1694 = vmul.f32 %v1693, 1.442695
        %v1695 = vpow.pop %v1694
        %v1696 = vadd.f32 %v1695, 1.0
        %v1697 = vrcp.pop %v1696
        %v1698 = vmul.f32 1.0, %v1697
        %v1699 = vxor.u32 %v1690, 2147483648
        %v1700 = vmul.f32 %v1699, 1.442695
        %v1701 = vpow.pop %v1700
        %v1702 = vadd.f32 %v1701, 1.0
        %v1703 = vrcp.pop %v1702
        %v1704 = vmul.f32 1.0, %v1703
        %v1705 = vmul.f32 %v1698, %v1692
        %v1706 = vadd.f32 %v1691, %v1705
        %v1707 = vtanh.pop %v1706
        %v1708 = vsub.f32 1.0, %v1704
        %v1709 = vmul.f32 %v1708, %v1707
        %v1710 = vmul.f32 %v1704, %v1020
        %v1711 = vadd.f32 %v1709, %v1710
        %v1712 = vpack.c.bf16 %v1711, %v1711
        %v1713 = vld [vmem:[#allocation11] sm:$0xf]
        %v1714 = vld [vmem:[#allocation11 + $0x4] sm:$0xf]
        %v1715 = vld [vmem:[#allocation11 + $0x8] sm:$0xf]
        %v1716 = vld [vmem:[#allocation11 + $0xc] sm:$0xf]
        %v1717 = vld [vmem:[#allocation11 + $0x10] sm:$0xf]
        %v1718 = vld [vmem:[#allocation11 + $0x14] sm:$0xf]
        %v1719 = vld [vmem:[#allocation11 + $0x18] sm:$0xf]
        %v1720 = vld [vmem:[#allocation11 + $0x1c] sm:$0xf]
        %v1721 = vld [vmem:[#allocation11 + $0x20] sm:$0xf]
        %v1722 = vld [vmem:[#allocation11 + $0x24] sm:$0xf]
        %v1723 = vld [vmem:[#allocation11 + $0x28] sm:$0xf]
        %v1724 = vld [vmem:[#allocation11 + $0x2c] sm:$0xf]
        %v1725 = vld [vmem:[#allocation11 + $0x30] sm:$0xf]
        %v1726 = vld [vmem:[#allocation11 + $0x34] sm:$0xf]
        %v1727 = vld [vmem:[#allocation11 + $0x38] sm:$0xf]
        %v1728 = vld [vmem:[#allocation11 + $0x3c] sm:$0xf]
        %v1745 = vunpack.c.l.b16 %v1713
        %v1746 = vunpack.c.l.b16 %v1714
        %v1747 = vunpack.c.l.b16 %v1715
        %v1748 = vunpack.c.l.b16 %v1716
        %v1749 = vunpack.c.l.b16 %v1717
        %v1750 = vunpack.c.l.b16 %v1718
        %v1751 = vunpack.c.l.b16 %v1719
        %v1752 = vunpack.c.l.b16 %v1720
        %v1753 = vunpack.c.l.b16 %v1721
        %v1754 = vunpack.c.l.b16 %v1722
        %v1755 = vunpack.c.l.b16 %v1723
        %v1756 = vunpack.c.l.b16 %v1724
        %v1757 = vunpack.c.l.b16 %v1725
        %v1758 = vunpack.c.l.b16 %v1726
        %v1759 = vunpack.c.l.b16 %v1727
        %v1760 = vunpack.c.l.b16 %v1728
        %v1761 = vpack.c.b16 %v1746, %v1745
        %v1762 = vpack.c.b16 %v1748, %v1747
        %v1763 = vpack.c.b16 %v1750, %v1749
        %v1764 = vpack.c.b16 %v1752, %v1751
        %v1765 = vpack.c.b16 %v1754, %v1753
        %v1766 = vpack.c.b16 %v1756, %v1755
        %v1767 = vpack.c.b16 %v1758, %v1757
        %v1768 = vpack.c.b16 %v1760, %v1759
        %1777 = vmatprep.subr.bf16.mxu0 0
        %1778 = vmatpush1.bf16.msra.mxu0 %v1768
        %1779 = vmatprep.subr.bf16.mxu0 0
        %1780 = vmatpush1.bf16.msra.mxu0 %v1767
        %1781 = vmatprep.subr.bf16.mxu0 0
        %1782 = vmatpush1.bf16.msra.mxu0 %v1766
        %1783 = vmatprep.subr.bf16.mxu0 0
        %1784 = vmatpush1.bf16.msra.mxu0 %v1765
        %1785 = vmatprep.subr.bf16.mxu0 0
        %1786 = vmatpush1.bf16.msra.mxu0 %v1764
        %1787 = vmatprep.subr.bf16.mxu0 0
        %1788 = vmatpush1.bf16.msra.mxu0 %v1763
        %1789 = vmatprep.subr.bf16.mxu0 0
        %1790 = vmatpush1.bf16.msra.mxu0 %v1762
        %1791 = vmatprep.subr.bf16.mxu0 0
        %1792 = vmatpush1.bf16.msra.mxu0 %v1761
        %1793 = vmatprep.subr.bf16.mxu0 0
        %1794 = vmatpush2.bf16.msra.mxu0 0
        %1795 = vmatprep.subr.bf16.mxu0 0
        %1796 = vmatpush2.bf16.msra.mxu0 0
        %1797 = vmatprep.subr.bf16.mxu0 0
        %1798 = vmatpush2.bf16.msra.mxu0 0
        %1799 = vmatprep.subr.bf16.mxu0 0
        %1800 = vmatpush2.bf16.msra.mxu0 0
        %1801 = vmatprep.subr.bf16.mxu0 0
        %1802 = vmatpush2.bf16.msra.mxu0 0
        %1803 = vmatprep.subr.bf16.mxu0 0
        %1804 = vmatpush2.bf16.msra.mxu0 0
        %1805 = vmatprep.subr.bf16.mxu0 0
        %1806 = vmatpush2.bf16.msra.mxu0 0
        %1807 = vmatprep.subr.bf16.mxu0 0
        %1808 = vmatpush2.bf16.msra.mxu0 0
        %1809 = vmatprep.mubr.bf16.mxu0 0
        %1810 = vmatmul.mubr.bf16.gmra.mxu0 %v1712
        %v1811 = vpop.f32.mrf.mxu0
        %v1812 = vadd.f32 %v444, %v1811
        %v1813 = vpop.f32.mrf.mxu0
        %v1814 = vpop.f32.mrf.mxu0
        %v1815 = vpop.f32.mrf.mxu0
        %1816 = vdwg.mxu0
        %1817 = vmax.xlane.f32.xlu0 %v1812
        %v1818 = vpop.xlane.xlu0 %1817
        %v1819 = vsub.f32 %v1812, %v1818
        %v1820 = vmul.f32 %v1819, 1.442695
        %v1821 = vpow.pop %v1820
        %1822 = vadd.xlane.f32.xlu0 %v1821
        %v1823 = vpop.xlane.xlu0 %1822
        %v1824 = vlog2.pop %v1823
        %v1825 = vmul.f32 %v1824, 0.6931472
        %v1826 = vadd.f32 %v1818, %v1825
        %v1827 = vsub.f32 %v1812, %v1826
        %s1828 = scalar_lea.vmem %s405, 8 [#allocation12]
        %1829 = vst [vmem:[%s1828] sm:$0xff] %v1827
        %s1830 = scalar_lea.vmem %s359, 8 [#allocation3]
        %v1831 = vld [vmem:[%s1830] sm:$0xf]
        %v1832 = vmax.bf16 %v1831, 0
        %v1833 = vld [vmem:[#allocation8] sm:$0xff]
        %v1834 = vld [vmem:[#allocation8 + $0x8] sm:$0xff]
        %v1835 = vld [vmem:[#allocation8 + $0x10] sm:$0xff]
        %v1836 = vld [vmem:[#allocation8 + $0x18] sm:$0xff]
        %v1837 = vld [vmem:[#allocation8 + $0x20] sm:$0xff]
        %v1838 = vld [vmem:[#allocation8 + $0x28] sm:$0xff]
        %v1839 = vld [vmem:[#allocation8 + $0x30] sm:$0xff]
        %v1840 = vld [vmem:[#allocation8 + $0x38] sm:$0xff]
        %v1841 = vld [vmem:[#allocation8 + $0x40] sm:$0xff]
        %v1842 = vld [vmem:[#allocation8 + $0x48] sm:$0xff]
        %v1843 = vld [vmem:[#allocation8 + $0x50] sm:$0xff]
        %v1844 = vld [vmem:[#allocation8 + $0x58] sm:$0xff]
        %v1845 = vld [vmem:[#allocation8 + $0x60] sm:$0xff]
        %v1846 = vld [vmem:[#allocation8 + $0x68] sm:$0xff]
        %v1847 = vld [vmem:[#allocation8 + $0x70] sm:$0xff]
        %v1848 = vld [vmem:[#allocation8 + $0x78] sm:$0xff]
        %v1849 = vld [vmem:[#allocation8 + $0x80] sm:$0xff]
        %v1850 = vld [vmem:[#allocation8 + $0x88] sm:$0xff]
        %v1851 = vld [vmem:[#allocation8 + $0x90] sm:$0xff]
        %v1852 = vld [vmem:[#allocation8 + $0x98] sm:$0xff]
        %v1853 = vld [vmem:[#allocation8 + $0xa0] sm:$0xff]
        %v1854 = vld [vmem:[#allocation8 + $0xa8] sm:$0xff]
        %v1855 = vld [vmem:[#allocation8 + $0xb0] sm:$0xff]
        %v1856 = vld [vmem:[#allocation8 + $0xb8] sm:$0xff]
        %v1857 = vld [vmem:[#allocation8 + $0xc0] sm:$0xff]
        %v1858 = vld [vmem:[#allocation8 + $0xc8] sm:$0xff]
        %v1859 = vld [vmem:[#allocation8 + $0xd0] sm:$0xff]
        %v1860 = vld [vmem:[#allocation8 + $0xd8] sm:$0xff]
        %v1861 = vld [vmem:[#allocation8 + $0xe0] sm:$0xff]
        %v1862 = vld [vmem:[#allocation8 + $0xe8] sm:$0xff]
        %v1863 = vld [vmem:[#allocation8 + $0xf0] sm:$0xff]
        %v1864 = vld [vmem:[#allocation8 + $0xf8] sm:$0xff]
        %v1865 = vld [vmem:[#allocation9] sm:$0xff]
        %v1866 = vld [vmem:[#allocation9 + $0x8] sm:$0xff]
        %v1867 = vld [vmem:[#allocation9 + $0x10] sm:$0xff]
        %v1868 = vld [vmem:[#allocation9 + $0x18] sm:$0xff]
        %v1869 = vld [vmem:[#allocation9 + $0x20] sm:$0xff]
        %v1870 = vld [vmem:[#allocation9 + $0x28] sm:$0xff]
        %v1871 = vld [vmem:[#allocation9 + $0x30] sm:$0xff]
        %v1872 = vld [vmem:[#allocation9 + $0x38] sm:$0xff]
        %v1873 = vld [vmem:[#allocation9 + $0x40] sm:$0xff]
        %v1874 = vld [vmem:[#allocation9 + $0x48] sm:$0xff]
        %v1875 = vld [vmem:[#allocation9 + $0x50] sm:$0xff]
        %v1876 = vld [vmem:[#allocation9 + $0x58] sm:$0xff]
        %v1877 = vld [vmem:[#allocation9 + $0x60] sm:$0xff]
        %v1878 = vld [vmem:[#allocation9 + $0x68] sm:$0xff]
        %v1879 = vld [vmem:[#allocation9 + $0x70] sm:$0xff]
        %v1880 = vld [vmem:[#allocation9 + $0x78] sm:$0xff]
        %v1881 = vld [vmem:[#allocation9 + $0x80] sm:$0xff]
        %v1882 = vld [vmem:[#allocation9 + $0x88] sm:$0xff]
        %v1883 = vld [vmem:[#allocation9 + $0x90] sm:$0xff]
        %v1884 = vld [vmem:[#allocation9 + $0x98] sm:$0xff]
        %v1885 = vld [vmem:[#allocation9 + $0xa0] sm:$0xff]
        %v1886 = vld [vmem:[#allocation9 + $0xa8] sm:$0xff]
        %v1887 = vld [vmem:[#allocation9 + $0xb0] sm:$0xff]
        %v1888 = vld [vmem:[#allocation9 + $0xb8] sm:$0xff]
        %v1889 = vld [vmem:[#allocation9 + $0xc0] sm:$0xff]
        %v1890 = vld [vmem:[#allocation9 + $0xc8] sm:$0xff]
        %v1891 = vld [vmem:[#allocation9 + $0xd0] sm:$0xff]
        %v1892 = vld [vmem:[#allocation9 + $0xd8] sm:$0xff]
        %v1893 = vld [vmem:[#allocation9 + $0xe0] sm:$0xff]
        %v1894 = vld [vmem:[#allocation9 + $0xe8] sm:$0xff]
        %v1895 = vld [vmem:[#allocation9 + $0xf0] sm:$0xff]
        %v1896 = vld [vmem:[#allocation9 + $0xf8] sm:$0xff]
        %v1929 = vunpack.c.l.b16 %v1865
        %v1930 = vunpack.c.h.b16 %v1865
        %v1931 = vunpack.c.l.b16 %v1866
        %v1932 = vunpack.c.h.b16 %v1866
        %v1933 = vunpack.c.l.b16 %v1867
        %v1934 = vunpack.c.h.b16 %v1867
        %v1935 = vunpack.c.l.b16 %v1868
        %v1936 = vunpack.c.h.b16 %v1868
        %v1937 = vunpack.c.l.b16 %v1869
        %v1938 = vunpack.c.h.b16 %v1869
        %v1939 = vunpack.c.l.b16 %v1870
        %v1940 = vunpack.c.h.b16 %v1870
        %v1941 = vunpack.c.l.b16 %v1871
        %v1942 = vunpack.c.h.b16 %v1871
        %v1943 = vunpack.c.l.b16 %v1872
        %v1944 = vunpack.c.h.b16 %v1872
        %v1945 = vunpack.c.l.b16 %v1873
        %v1946 = vunpack.c.h.b16 %v1873
        %v1947 = vunpack.c.l.b16 %v1874
        %v1948 = vunpack.c.h.b16 %v1874
        %v1949 = vunpack.c.l.b16 %v1875
        %v1950 = vunpack.c.h.b16 %v1875
        %v1951 = vunpack.c.l.b16 %v1876
        %v1952 = vunpack.c.h.b16 %v1876
        %v1953 = vunpack.c.l.b16 %v1877
        %v1954 = vunpack.c.h.b16 %v1877
        %v1955 = vunpack.c.l.b16 %v1878
        %v1956 = vunpack.c.h.b16 %v1878
        %v1957 = vunpack.c.l.b16 %v1879
        %v1958 = vunpack.c.h.b16 %v1879
        %v1959 = vunpack.c.l.b16 %v1880
        %v1960 = vunpack.c.h.b16 %v1880
        %v1961 = vunpack.c.l.b16 %v1881
        %v1962 = vunpack.c.h.b16 %v1881
        %v1963 = vunpack.c.l.b16 %v1882
        %v1964 = vunpack.c.h.b16 %v1882
        %v1965 = vunpack.c.l.b16 %v1883
        %v1966 = vunpack.c.h.b16 %v1883
        %v1967 = vunpack.c.l.b16 %v1884
        %v1968 = vunpack.c.h.b16 %v1884
        %v1969 = vunpack.c.l.b16 %v1885
        %v1970 = vunpack.c.h.b16 %v1885
        %v1971 = vunpack.c.l.b16 %v1886
        %v1972 = vunpack.c.h.b16 %v1886
        %v1973 = vunpack.c.l.b16 %v1887
        %v1974 = vunpack.c.h.b16 %v1887
        %v1975 = vunpack.c.l.b16 %v1888
        %v1976 = vunpack.c.h.b16 %v1888
        %v1977 = vunpack.c.l.b16 %v1889
        %v1978 = vunpack.c.h.b16 %v1889
        %v1979 = vunpack.c.l.b16 %v1890
        %v1980 = vunpack.c.h.b16 %v1890
        %v1981 = vunpack.c.l.b16 %v1891
        %v1982 = vunpack.c.h.b16 %v1891
        %v1983 = vunpack.c.l.b16 %v1892
        %v1984 = vunpack.c.h.b16 %v1892
        %v1985 = vunpack.c.l.b16 %v1893
        %v1986 = vunpack.c.h.b16 %v1893
        %v1987 = vunpack.c.l.b16 %v1894
        %v1988 = vunpack.c.h.b16 %v1894
        %v1989 = vunpack.c.l.b16 %v1895
        %v1990 = vunpack.c.h.b16 %v1895
        %v1991 = vunpack.c.l.b16 %v1896
        %v1992 = vunpack.c.h.b16 %v1896
        %v1993 = vpack.c.b16 %v1933, %v1929
        %v1994 = vpack.c.b16 %v1934, %v1930
        %v1995 = vpack.c.b16 %v1935, %v1931
        %v1996 = vpack.c.b16 %v1936, %v1932
        %v1997 = vpack.c.b16 %v1941, %v1937
        %v1998 = vpack.c.b16 %v1942, %v1938
        %v1999 = vpack.c.b16 %v1943, %v1939
        %v2000 = vpack.c.b16 %v1944, %v1940
        %v2001 = vpack.c.b16 %v1949, %v1945
        %v2002 = vpack.c.b16 %v1950, %v1946
        %v2003 = vpack.c.b16 %v1951, %v1947
        %v2004 = vpack.c.b16 %v1952, %v1948
        %v2005 = vpack.c.b16 %v1957, %v1953
        %v2006 = vpack.c.b16 %v1958, %v1954
        %v2007 = vpack.c.b16 %v1959, %v1955
        %v2008 = vpack.c.b16 %v1960, %v1956
        %v2009 = vpack.c.b16 %v1965, %v1961
        %v2010 = vpack.c.b16 %v1966, %v1962
        %v2011 = vpack.c.b16 %v1967, %v1963
        %v2012 = vpack.c.b16 %v1968, %v1964
        %v2013 = vpack.c.b16 %v1973, %v1969
        %v2014 = vpack.c.b16 %v1974, %v1970
        %v2015 = vpack.c.b16 %v1975, %v1971
        %v2016 = vpack.c.b16 %v1976, %v1972
        %v2017 = vpack.c.b16 %v1981, %v1977
        %v2018 = vpack.c.b16 %v1982, %v1978
        %v2019 = vpack.c.b16 %v1983, %v1979
        %v2020 = vpack.c.b16 %v1984, %v1980
        %v2021 = vpack.c.b16 %v1989, %v1985
        %v2022 = vpack.c.b16 %v1990, %v1986
        %v2023 = vpack.c.b16 %v1991, %v1987
        %v2024 = vpack.c.b16 %v1992, %v1988
        %2057 = vmatprep.subr.bf16.mxu0 %v2022
        %2058 = vmatpush1.bf16.msra.mxu0 %v2021
        %2059 = vmatprep.subr.bf16.mxu0 %v2018
        %2060 = vmatpush1.bf16.msra.mxu0 %v2017
        %2061 = vmatprep.subr.bf16.mxu0 %v2014
        %2062 = vmatpush1.bf16.msra.mxu0 %v2013
        %2063 = vmatprep.subr.bf16.mxu0 %v2010
        %2064 = vmatpush1.bf16.msra.mxu0 %v2009
        %2065 = vmatprep.subr.bf16.mxu0 %v2006
        %2066 = vmatpush1.bf16.msra.mxu0 %v2005
        %2067 = vmatprep.subr.bf16.mxu0 %v2002
        %2068 = vmatpush1.bf16.msra.mxu0 %v2001
        %2069 = vmatprep.subr.bf16.mxu0 %v1998
        %2070 = vmatpush1.bf16.msra.mxu0 %v1997
        %2071 = vmatprep.subr.bf16.mxu0 %v1994
        %2072 = vmatpush1.bf16.msra.mxu0 %v1993
        %2073 = vmatprep.subr.bf16.mxu0 0
        %2074 = vmatpush2.bf16.msra.mxu0 0
        %2075 = vmatprep.subr.bf16.mxu0 0
        %2076 = vmatpush2.bf16.msra.mxu0 0
        %2077 = vmatprep.subr.bf16.mxu0 0
        %2078 = vmatpush2.bf16.msra.mxu0 0
        %2079 = vmatprep.subr.bf16.mxu0 0
        %2080 = vmatpush2.bf16.msra.mxu0 0
        %2081 = vmatprep.subr.bf16.mxu0 0
        %2082 = vmatpush2.bf16.msra.mxu0 0
        %2083 = vmatprep.subr.bf16.mxu0 0
        %2084 = vmatpush2.bf16.msra.mxu0 0
        %2085 = vmatprep.subr.bf16.mxu0 0
        %2086 = vmatpush2.bf16.msra.mxu0 0
        %2087 = vmatprep.subr.bf16.mxu0 0
        %2088 = vmatpush2.bf16.msra.mxu0 0
        %2089 = vmatprep.mubr.bf16.mxu0 0
        %2090 = vmatmul.mubr.bf16.gmra.mxu0 %v1712
        %v2091 = vpop.f32.mrf.mxu0
        %v2092 = vadd.f32 0.0, %v2091
        %v2093 = vpop.f32.mrf.mxu0
        %v2094 = vadd.f32 0.0, %v2093
        %v2095 = vpop.f32.mrf.mxu0
        %v2096 = vpop.f32.mrf.mxu0
        %2097 = vdwg.mxu0
        %2098 = vmatprep.subr.bf16.mxu0 %v2024
        %2099 = vmatpush1.bf16.msra.mxu0 %v2023
        %2100 = vmatprep.subr.bf16.mxu0 %v2020
        %2101 = vmatpush1.bf16.msra.mxu0 %v2019
        %2102 = vmatprep.subr.bf16.mxu0 %v2016
        %2103 = vmatpush1.bf16.msra.mxu0 %v2015
        %2104 = vmatprep.subr.bf16.mxu0 %v2012
        %2105 = vmatpush1.bf16.msra.mxu0 %v2011
        %2106 = vmatprep.subr.bf16.mxu0 %v2008
        %2107 = vmatpush1.bf16.msra.mxu0 %v2007
        %2108 = vmatprep.subr.bf16.mxu0 %v2004
        %2109 = vmatpush1.bf16.msra.mxu0 %v2003
        %2110 = vmatprep.subr.bf16.mxu0 %v2000
        %2111 = vmatpush1.bf16.msra.mxu0 %v1999
        %2112 = vmatprep.subr.bf16.mxu0 %v1996
        %2113 = vmatpush1.bf16.msra.mxu0 %v1995
        %2114 = vmatprep.subr.bf16.mxu0 0
        %2115 = vmatpush2.bf16.msra.mxu0 0
        %2116 = vmatprep.subr.bf16.mxu0 0
        %2117 = vmatpush2.bf16.msra.mxu0 0
        %2118 = vmatprep.subr.bf16.mxu0 0
        %2119 = vmatpush2.bf16.msra.mxu0 0
        %2120 = vmatprep.subr.bf16.mxu0 0
        %2121 = vmatpush2.bf16.msra.mxu0 0
        %2122 = vmatprep.subr.bf16.mxu0 0
        %2123 = vmatpush2.bf16.msra.mxu0 0
        %2124 = vmatprep.subr.bf16.mxu0 0
        %2125 = vmatpush2.bf16.msra.mxu0 0
        %2126 = vmatprep.subr.bf16.mxu0 0
        %2127 = vmatpush2.bf16.msra.mxu0 0
        %2128 = vmatprep.subr.bf16.mxu0 0
        %2129 = vmatpush2.bf16.msra.mxu0 0
        %2130 = vmatprep.mubr.bf16.mxu0 0
        %2131 = vmatmul.mubr.bf16.gmra.mxu0 %v1712
        %v2132 = vpop.f32.mrf.mxu0
        %v2133 = vadd.f32 0.0, %v2132
        %v2134 = vpop.f32.mrf.mxu0
        %v2135 = vadd.f32 0.0, %v2134
        %v2136 = vpop.f32.mrf.mxu0
        %v2137 = vpop.f32.mrf.mxu0
        %2138 = vdwg.mxu0
        %v2171 = vunpack.c.l.b16 %v1833
        %v2172 = vunpack.c.h.b16 %v1833
        %v2173 = vunpack.c.l.b16 %v1834
        %v2174 = vunpack.c.h.b16 %v1834
        %v2175 = vunpack.c.l.b16 %v1835
        %v2176 = vunpack.c.h.b16 %v1835
        %v2177 = vunpack.c.l.b16 %v1836
        %v2178 = vunpack.c.h.b16 %v1836
        %v2179 = vunpack.c.l.b16 %v1837
        %v2180 = vunpack.c.h.b16 %v1837
        %v2181 = vunpack.c.l.b16 %v1838
        %v2182 = vunpack.c.h.b16 %v1838
        %v2183 = vunpack.c.l.b16 %v1839
        %v2184 = vunpack.c.h.b16 %v1839
        %v2185 = vunpack.c.l.b16 %v1840
        %v2186 = vunpack.c.h.b16 %v1840
        %v2187 = vunpack.c.l.b16 %v1841
        %v2188 = vunpack.c.h.b16 %v1841
        %v2189 = vunpack.c.l.b16 %v1842
        %v2190 = vunpack.c.h.b16 %v1842
        %v2191 = vunpack.c.l.b16 %v1843
        %v2192 = vunpack.c.h.b16 %v1843
        %v2193 = vunpack.c.l.b16 %v1844
        %v2194 = vunpack.c.h.b16 %v1844
        %v2195 = vunpack.c.l.b16 %v1845
        %v2196 = vunpack.c.h.b16 %v1845
        %v2197 = vunpack.c.l.b16 %v1846
        %v2198 = vunpack.c.h.b16 %v1846
        %v2199 = vunpack.c.l.b16 %v1847
        %v2200 = vunpack.c.h.b16 %v1847
        %v2201 = vunpack.c.l.b16 %v1848
        %v2202 = vunpack.c.h.b16 %v1848
        %v2203 = vunpack.c.l.b16 %v1849
        %v2204 = vunpack.c.h.b16 %v1849
        %v2205 = vunpack.c.l.b16 %v1850
        %v2206 = vunpack.c.h.b16 %v1850
        %v2207 = vunpack.c.l.b16 %v1851
        %v2208 = vunpack.c.h.b16 %v1851
        %v2209 = vunpack.c.l.b16 %v1852
        %v2210 = vunpack.c.h.b16 %v1852
        %v2211 = vunpack.c.l.b16 %v1853
        %v2212 = vunpack.c.h.b16 %v1853
        %v2213 = vunpack.c.l.b16 %v1854
        %v2214 = vunpack.c.h.b16 %v1854
        %v2215 = vunpack.c.l.b16 %v1855
        %v2216 = vunpack.c.h.b16 %v1855
        %v2217 = vunpack.c.l.b16 %v1856
        %v2218 = vunpack.c.h.b16 %v1856
        %v2219 = vunpack.c.l.b16 %v1857
        %v2220 = vunpack.c.h.b16 %v1857
        %v2221 = vunpack.c.l.b16 %v1858
        %v2222 = vunpack.c.h.b16 %v1858
        %v2223 = vunpack.c.l.b16 %v1859
        %v2224 = vunpack.c.h.b16 %v1859
        %v2225 = vunpack.c.l.b16 %v1860
        %v2226 = vunpack.c.h.b16 %v1860
        %v2227 = vunpack.c.l.b16 %v1861
        %v2228 = vunpack.c.h.b16 %v1861
        %v2229 = vunpack.c.l.b16 %v1862
        %v2230 = vunpack.c.h.b16 %v1862
        %v2231 = vunpack.c.l.b16 %v1863
        %v2232 = vunpack.c.h.b16 %v1863
        %v2233 = vunpack.c.l.b16 %v1864
        %v2234 = vunpack.c.h.b16 %v1864
        %v2235 = vpack.c.b16 %v2175, %v2171
        %v2236 = vpack.c.b16 %v2176, %v2172
        %v2237 = vpack.c.b16 %v2177, %v2173
        %v2238 = vpack.c.b16 %v2178, %v2174
        %v2239 = vpack.c.b16 %v2183, %v2179
        %v2240 = vpack.c.b16 %v2184, %v2180
        %v2241 = vpack.c.b16 %v2185, %v2181
        %v2242 = vpack.c.b16 %v2186, %v2182
        %v2243 = vpack.c.b16 %v2191, %v2187
        %v2244 = vpack.c.b16 %v2192, %v2188
        %v2245 = vpack.c.b16 %v2193, %v2189
        %v2246 = vpack.c.b16 %v2194, %v2190
        %v2247 = vpack.c.b16 %v2199, %v2195
        %v2248 = vpack.c.b16 %v2200, %v2196
        %v2249 = vpack.c.b16 %v2201, %v2197
        %v2250 = vpack.c.b16 %v2202, %v2198
        %v2251 = vpack.c.b16 %v2207, %v2203
        %v2252 = vpack.c.b16 %v2208, %v2204
        %v2253 = vpack.c.b16 %v2209, %v2205
        %v2254 = vpack.c.b16 %v2210, %v2206
        %v2255 = vpack.c.b16 %v2215, %v2211
        %v2256 = vpack.c.b16 %v2216, %v2212
        %v2257 = vpack.c.b16 %v2217, %v2213
        %v2258 = vpack.c.b16 %v2218, %v2214
        %v2259 = vpack.c.b16 %v2223, %v2219
        %v2260 = vpack.c.b16 %v2224, %v2220
        %v2261 = vpack.c.b16 %v2225, %v2221
        %v2262 = vpack.c.b16 %v2226, %v2222
        %v2263 = vpack.c.b16 %v2231, %v2227
        %v2264 = vpack.c.b16 %v2232, %v2228
        %v2265 = vpack.c.b16 %v2233, %v2229
        %v2266 = vpack.c.b16 %v2234, %v2230
        %2299 = vmatprep.subr.bf16.mxu0 %v2264
        %2300 = vmatpush1.bf16.msra.mxu0 %v2263
        %2301 = vmatprep.subr.bf16.mxu0 %v2260
        %2302 = vmatpush1.bf16.msra.mxu0 %v2259
        %2303 = vmatprep.subr.bf16.mxu0 %v2256
        %2304 = vmatpush1.bf16.msra.mxu0 %v2255
        %2305 = vmatprep.subr.bf16.mxu0 %v2252
        %2306 = vmatpush1.bf16.msra.mxu0 %v2251
        %2307 = vmatprep.subr.bf16.mxu0 %v2248
        %2308 = vmatpush1.bf16.msra.mxu0 %v2247
        %2309 = vmatprep.subr.bf16.mxu0 %v2244
        %2310 = vmatpush1.bf16.msra.mxu0 %v2243
        %2311 = vmatprep.subr.bf16.mxu0 %v2240
        %2312 = vmatpush1.bf16.msra.mxu0 %v2239
        %2313 = vmatprep.subr.bf16.mxu0 %v2236
        %2314 = vmatpush1.bf16.msra.mxu0 %v2235
        %2315 = vmatprep.subr.bf16.mxu0 0
        %2316 = vmatpush2.bf16.msra.mxu0 0
        %2317 = vmatprep.subr.bf16.mxu0 0
        %2318 = vmatpush2.bf16.msra.mxu0 0
        %2319 = vmatprep.subr.bf16.mxu0 0
        %2320 = vmatpush2.bf16.msra.mxu0 0
        %2321 = vmatprep.subr.bf16.mxu0 0
        %2322 = vmatpush2.bf16.msra.mxu0 0
        %2323 = vmatprep.subr.bf16.mxu0 0
        %2324 = vmatpush2.bf16.msra.mxu0 0
        %2325 = vmatprep.subr.bf16.mxu0 0
        %2326 = vmatpush2.bf16.msra.mxu0 0
        %2327 = vmatprep.subr.bf16.mxu0 0
        %2328 = vmatpush2.bf16.msra.mxu0 0
        %2329 = vmatprep.subr.bf16.mxu0 0
        %2330 = vmatpush2.bf16.msra.mxu0 0
        %2331 = vmatprep.mubr.bf16.mxu0 0
        %2332 = vmatmul.mubr.bf16.gmra.mxu0 %v1832
        %v2333 = vpop.f32.mrf.mxu0
        %v2334 = vadd.f32 %v2092, %v2333
        %v2335 = vpop.f32.mrf.mxu0
        %v2336 = vadd.f32 %v2094, %v2335
        %v2337 = vpop.f32.mrf.mxu0
        %v2338 = vpop.f32.mrf.mxu0
        %2339 = vdwg.mxu0
        %2340 = vmatprep.subr.bf16.mxu0 %v2266
        %2341 = vmatpush1.bf16.msra.mxu0 %v2265
        %2342 = vmatprep.subr.bf16.mxu0 %v2262
        %2343 = vmatpush1.bf16.msra.mxu0 %v2261
        %2344 = vmatprep.subr.bf16.mxu0 %v2258
        %2345 = vmatpush1.bf16.msra.mxu0 %v2257
        %2346 = vmatprep.subr.bf16.mxu0 %v2254
        %2347 = vmatpush1.bf16.msra.mxu0 %v2253
        %2348 = vmatprep.subr.bf16.mxu0 %v2250
        %2349 = vmatpush1.bf16.msra.mxu0 %v2249
        %2350 = vmatprep.subr.bf16.mxu0 %v2246
        %2351 = vmatpush1.bf16.msra.mxu0 %v2245
        %2352 = vmatprep.subr.bf16.mxu0 %v2242
        %2353 = vmatpush1.bf16.msra.mxu0 %v2241
        %2354 = vmatprep.subr.bf16.mxu0 %v2238
        %2355 = vmatpush1.bf16.msra.mxu0 %v2237
        %2356 = vmatprep.subr.bf16.mxu0 0
        %2357 = vmatpush2.bf16.msra.mxu0 0
        %2358 = vmatprep.subr.bf16.mxu0 0
        %2359 = vmatpush2.bf16.msra.mxu0 0
        %2360 = vmatprep.subr.bf16.mxu0 0
        %2361 = vmatpush2.bf16.msra.mxu0 0
        %2362 = vmatprep.subr.bf16.mxu0 0
        %2363 = vmatpush2.bf16.msra.mxu0 0
        %2364 = vmatprep.subr.bf16.mxu0 0
        %2365 = vmatpush2.bf16.msra.mxu0 0
        %2366 = vmatprep.subr.bf16.mxu0 0
        %2367 = vmatpush2.bf16.msra.mxu0 0
        %2368 = vmatprep.subr.bf16.mxu0 0
        %2369 = vmatpush2.bf16.msra.mxu0 0
        %2370 = vmatprep.subr.bf16.mxu0 0
        %2371 = vmatpush2.bf16.msra.mxu0 0
        %2372 = vmatprep.mubr.bf16.mxu0 0
        %2373 = vmatmul.mubr.bf16.gmra.mxu0 %v1832
        %v2374 = vpop.f32.mrf.mxu0
        %v2375 = vadd.f32 %v2133, %v2374
        %v2376 = vpop.f32.mrf.mxu0
        %v2377 = vadd.f32 %v2135, %v2376
        %v2378 = vpop.f32.mrf.mxu0
        %v2379 = vpop.f32.mrf.mxu0
        %2380 = vdwg.mxu0
        %v2381 = vadd.f32 %v2334, %v422
        %v2382 = vadd.f32 %v2336, %v426
        %v2383 = vadd.f32 %v2375, %v430
        %v2384 = vadd.f32 %v2377, %v434
        %v2385 = vxor.u32 %v2381, 2147483648
        %v2386 = vmul.f32 %v2385, 1.442695
        %v2387 = vpow.pop %v2386
        %v2388 = vadd.f32 %v2387, 1.0
        %v2389 = vrcp.pop %v2388
        %v2390 = vmul.f32 1.0, %v2389
        %v2391 = vxor.u32 %v2382, 2147483648
        %v2392 = vmul.f32 %v2391, 1.442695
        %v2393 = vpow.pop %v2392
        %v2394 = vadd.f32 %v2393, 1.0
        %v2395 = vrcp.pop %v2394
        %v2396 = vmul.f32 1.0, %v2395
        %v2397 = vmul.f32 %v2390, %v2384
        %v2398 = vadd.f32 %v2383, %v2397
        %v2399 = vtanh.pop %v2398
        %v2400 = vsub.f32 1.0, %v2396
        %v2401 = vmul.f32 %v2400, %v2399
        %v2402 = vmul.f32 %v2396, %v1711
        %v2403 = vadd.f32 %v2401, %v2402
        %v2404 = vpack.c.bf16 %v2403, %v2403
        %v2405 = vld [vmem:[#allocation11] sm:$0xf]
        %v2406 = vld [vmem:[#allocation11 + $0x4] sm:$0xf]
        %v2407 = vld [vmem:[#allocation11 + $0x8] sm:$0xf]
        %v2408 = vld [vmem:[#allocation11 + $0xc] sm:$0xf]
        %v2409 = vld [vmem:[#allocation11 + $0x10] sm:$0xf]
        %v2410 = vld [vmem:[#allocation11 + $0x14] sm:$0xf]
        %v2411 = vld [vmem:[#allocation11 + $0x18] sm:$0xf]
        %v2412 = vld [vmem:[#allocation11 + $0x1c] sm:$0xf]
        %v2413 = vld [vmem:[#allocation11 + $0x20] sm:$0xf]
        %v2414 = vld [vmem:[#allocation11 + $0x24] sm:$0xf]
        %v2415 = vld [vmem:[#allocation11 + $0x28] sm:$0xf]
        %v2416 = vld [vmem:[#allocation11 + $0x2c] sm:$0xf]
        %v2417 = vld [vmem:[#allocation11 + $0x30] sm:$0xf]
        %v2418 = vld [vmem:[#allocation11 + $0x34] sm:$0xf]
        %v2419 = vld [vmem:[#allocation11 + $0x38] sm:$0xf]
        %v2420 = vld [vmem:[#allocation11 + $0x3c] sm:$0xf]
        %v2437 = vunpack.c.l.b16 %v2405
        %v2438 = vunpack.c.l.b16 %v2406
        %v2439 = vunpack.c.l.b16 %v2407
        %v2440 = vunpack.c.l.b16 %v2408
        %v2441 = vunpack.c.l.b16 %v2409
        %v2442 = vunpack.c.l.b16 %v2410
        %v2443 = vunpack.c.l.b16 %v2411
        %v2444 = vunpack.c.l.b16 %v2412
        %v2445 = vunpack.c.l.b16 %v2413
        %v2446 = vunpack.c.l.b16 %v2414
        %v2447 = vunpack.c.l.b16 %v2415
        %v2448 = vunpack.c.l.b16 %v2416
        %v2449 = vunpack.c.l.b16 %v2417
        %v2450 = vunpack.c.l.b16 %v2418
        %v2451 = vunpack.c.l.b16 %v2419
        %v2452 = vunpack.c.l.b16 %v2420
        %v2453 = vpack.c.b16 %v2438, %v2437
        %v2454 = vpack.c.b16 %v2440, %v2439
        %v2455 = vpack.c.b16 %v2442, %v2441
        %v2456 = vpack.c.b16 %v2444, %v2443
        %v2457 = vpack.c.b16 %v2446, %v2445
        %v2458 = vpack.c.b16 %v2448, %v2447
        %v2459 = vpack.c.b16 %v2450, %v2449
        %v2460 = vpack.c.b16 %v2452, %v2451
        %2469 = vmatprep.subr.bf16.mxu0 0
        %2470 = vmatpush1.bf16.msra.mxu0 %v2460
        %2471 = vmatprep.subr.bf16.mxu0 0
        %2472 = vmatpush1.bf16.msra.mxu0 %v2459
        %2473 = vmatprep.subr.bf16.mxu0 0
        %2474 = vmatpush1.bf16.msra.mxu0 %v2458
        %2475 = vmatprep.subr.bf16.mxu0 0
        %2476 = vmatpush1.bf16.msra.mxu0 %v2457
        %2477 = vmatprep.subr.bf16.mxu0 0
        %2478 = vmatpush1.bf16.msra.mxu0 %v2456
        %2479 = vmatprep.subr.bf16.mxu0 0
        %2480 = vmatpush1.bf16.msra.mxu0 %v2455
        %2481 = vmatprep.subr.bf16.mxu0 0
        %2482 = vmatpush1.bf16.msra.mxu0 %v2454
        %2483 = vmatprep.subr.bf16.mxu0 0
        %2484 = vmatpush1.bf16.msra.mxu0 %v2453
        %2485 = vmatprep.subr.bf16.mxu0 0
        %2486 = vmatpush2.bf16.msra.mxu0 0
        %2487 = vmatprep.subr.bf16.mxu0 0
        %2488 = vmatpush2.bf16.msra.mxu0 0
        %2489 = vmatprep.subr.bf16.mxu0 0
        %2490 = vmatpush2.bf16.msra.mxu0 0
        %2491 = vmatprep.subr.bf16.mxu0 0
        %2492 = vmatpush2.bf16.msra.mxu0 0
        %2493 = vmatprep.subr.bf16.mxu0 0
        %2494 = vmatpush2.bf16.msra.mxu0 0
        %2495 = vmatprep.subr.bf16.mxu0 0
        %2496 = vmatpush2.bf16.msra.mxu0 0
        %2497 = vmatprep.subr.bf16.mxu0 0
        %2498 = vmatpush2.bf16.msra.mxu0 0
        %2499 = vmatprep.subr.bf16.mxu0 0
        %2500 = vmatpush2.bf16.msra.mxu0 0
        %2501 = vmatprep.mubr.bf16.mxu0 0
        %2502 = vmatmul.mubr.bf16.gmra.mxu0 %v2404
        %v2503 = vpop.f32.mrf.mxu0
        %v2504 = vadd.f32 %v444, %v2503
        %v2505 = vpop.f32.mrf.mxu0
        %v2506 = vpop.f32.mrf.mxu0
        %v2507 = vpop.f32.mrf.mxu0
        %2508 = vdwg.mxu0
        %2509 = vmax.xlane.f32.xlu0 %v2504
        %v2510 = vpop.xlane.xlu0 %2509
        %v2511 = vsub.f32 %v2504, %v2510
        %v2512 = vmul.f32 %v2511, 1.442695
        %v2513 = vpow.pop %v2512
        %2514 = vadd.xlane.f32.xlu0 %v2513
        %v2515 = vpop.xlane.xlu0 %2514
        %v2516 = vlog2.pop %v2515
        %v2517 = vmul.f32 %v2516, 0.6931472
        %v2518 = vadd.f32 %v2510, %v2517
        %v2519 = vsub.f32 %v2504, %v2518
        %s2520 = scalar_lea.vmem %s405, 16 [#allocation12]
        %2521 = vst [vmem:[%s2520] sm:$0xff] %v2519
        %s2522 = scalar_lea.vmem %s359, 12 [#allocation3]
        %v2523 = vld [vmem:[%s2522] sm:$0xf]
        %v2524 = vmax.bf16 %v2523, 0
        %v2525 = vld [vmem:[#allocation8] sm:$0xff]
        %v2526 = vld [vmem:[#allocation8 + $0x8] sm:$0xff]
        %v2527 = vld [vmem:[#allocation8 + $0x10] sm:$0xff]
        %v2528 = vld [vmem:[#allocation8 + $0x18] sm:$0xff]
        %v2529 = vld [vmem:[#allocation8 + $0x20] sm:$0xff]
        %v2530 = vld [vmem:[#allocation8 + $0x28] sm:$0xff]
        %v2531 = vld [vmem:[#allocation8 + $0x30] sm:$0xff]
        %v2532 = vld [vmem:[#allocation8 + $0x38] sm:$0xff]
        %v2533 = vld [vmem:[#allocation8 + $0x40] sm:$0xff]
        %v2534 = vld [vmem:[#allocation8 + $0x48] sm:$0xff]
        %v2535 = vld [vmem:[#allocation8 + $0x50] sm:$0xff]
        %v2536 = vld [vmem:[#allocation8 + $0x58] sm:$0xff]
        %v2537 = vld [vmem:[#allocation8 + $0x60] sm:$0xff]
        %v2538 = vld [vmem:[#allocation8 + $0x68] sm:$0xff]
        %v2539 = vld [vmem:[#allocation8 + $0x70] sm:$0xff]
        %v2540 = vld [vmem:[#allocation8 + $0x78] sm:$0xff]
        %v2541 = vld [vmem:[#allocation8 + $0x80] sm:$0xff]
        %v2542 = vld [vmem:[#allocation8 + $0x88] sm:$0xff]
        %v2543 = vld [vmem:[#allocation8 + $0x90] sm:$0xff]
        %v2544 = vld [vmem:[#allocation8 + $0x98] sm:$0xff]
        %v2545 = vld [vmem:[#allocation8 + $0xa0] sm:$0xff]
        %v2546 = vld [vmem:[#allocation8 + $0xa8] sm:$0xff]
        %v2547 = vld [vmem:[#allocation8 + $0xb0] sm:$0xff]
        %v2548 = vld [vmem:[#allocation8 + $0xb8] sm:$0xff]
        %v2549 = vld [vmem:[#allocation8 + $0xc0] sm:$0xff]
        %v2550 = vld [vmem:[#allocation8 + $0xc8] sm:$0xff]
        %v2551 = vld [vmem:[#allocation8 + $0xd0] sm:$0xff]
        %v2552 = vld [vmem:[#allocation8 + $0xd8] sm:$0xff]
        %v2553 = vld [vmem:[#allocation8 + $0xe0] sm:$0xff]
        %v2554 = vld [vmem:[#allocation8 + $0xe8] sm:$0xff]
        %v2555 = vld [vmem:[#allocation8 + $0xf0] sm:$0xff]
        %v2556 = vld [vmem:[#allocation8 + $0xf8] sm:$0xff]
        %v2557 = vld [vmem:[#allocation9] sm:$0xff]
        %v2558 = vld [vmem:[#allocation9 + $0x8] sm:$0xff]
        %v2559 = vld [vmem:[#allocation9 + $0x10] sm:$0xff]
        %v2560 = vld [vmem:[#allocation9 + $0x18] sm:$0xff]
        %v2561 = vld [vmem:[#allocation9 + $0x20] sm:$0xff]
        %v2562 = vld [vmem:[#allocation9 + $0x28] sm:$0xff]
        %v2563 = vld [vmem:[#allocation9 + $0x30] sm:$0xff]
        %v2564 = vld [vmem:[#allocation9 + $0x38] sm:$0xff]
        %v2565 = vld [vmem:[#allocation9 + $0x40] sm:$0xff]
        %v2566 = vld [vmem:[#allocation9 + $0x48] sm:$0xff]
        %v2567 = vld [vmem:[#allocation9 + $0x50] sm:$0xff]
        %v2568 = vld [vmem:[#allocation9 + $0x58] sm:$0xff]
        %v2569 = vld [vmem:[#allocation9 + $0x60] sm:$0xff]
        %v2570 = vld [vmem:[#allocation9 + $0x68] sm:$0xff]
        %v2571 = vld [vmem:[#allocation9 + $0x70] sm:$0xff]
        %v2572 = vld [vmem:[#allocation9 + $0x78] sm:$0xff]
        %v2573 = vld [vmem:[#allocation9 + $0x80] sm:$0xff]
        %v2574 = vld [vmem:[#allocation9 + $0x88] sm:$0xff]
        %v2575 = vld [vmem:[#allocation9 + $0x90] sm:$0xff]
        %v2576 = vld [vmem:[#allocation9 + $0x98] sm:$0xff]
        %v2577 = vld [vmem:[#allocation9 + $0xa0] sm:$0xff]
        %v2578 = vld [vmem:[#allocation9 + $0xa8] sm:$0xff]
        %v2579 = vld [vmem:[#allocation9 + $0xb0] sm:$0xff]
        %v2580 = vld [vmem:[#allocation9 + $0xb8] sm:$0xff]
        %v2581 = vld [vmem:[#allocation9 + $0xc0] sm:$0xff]
        %v2582 = vld [vmem:[#allocation9 + $0xc8] sm:$0xff]
        %v2583 = vld [vmem:[#allocation9 + $0xd0] sm:$0xff]
        %v2584 = vld [vmem:[#allocation9 + $0xd8] sm:$0xff]
        %v2585 = vld [vmem:[#allocation9 + $0xe0] sm:$0xff]
        %v2586 = vld [vmem:[#allocation9 + $0xe8] sm:$0xff]
        %v2587 = vld [vmem:[#allocation9 + $0xf0] sm:$0xff]
        %v2588 = vld [vmem:[#allocation9 + $0xf8] sm:$0xff]
        %v2621 = vunpack.c.l.b16 %v2557
        %v2622 = vunpack.c.h.b16 %v2557
        %v2623 = vunpack.c.l.b16 %v2558
        %v2624 = vunpack.c.h.b16 %v2558
        %v2625 = vunpack.c.l.b16 %v2559
        %v2626 = vunpack.c.h.b16 %v2559
        %v2627 = vunpack.c.l.b16 %v2560
        %v2628 = vunpack.c.h.b16 %v2560
        %v2629 = vunpack.c.l.b16 %v2561
        %v2630 = vunpack.c.h.b16 %v2561
        %v2631 = vunpack.c.l.b16 %v2562
        %v2632 = vunpack.c.h.b16 %v2562
        %v2633 = vunpack.c.l.b16 %v2563
        %v2634 = vunpack.c.h.b16 %v2563
        %v2635 = vunpack.c.l.b16 %v2564
        %v2636 = vunpack.c.h.b16 %v2564
        %v2637 = vunpack.c.l.b16 %v2565
        %v2638 = vunpack.c.h.b16 %v2565
        %v2639 = vunpack.c.l.b16 %v2566
        %v2640 = vunpack.c.h.b16 %v2566
        %v2641 = vunpack.c.l.b16 %v2567
        %v2642 = vunpack.c.h.b16 %v2567
        %v2643 = vunpack.c.l.b16 %v2568
        %v2644 = vunpack.c.h.b16 %v2568
        %v2645 = vunpack.c.l.b16 %v2569
        %v2646 = vunpack.c.h.b16 %v2569
        %v2647 = vunpack.c.l.b16 %v2570
        %v2648 = vunpack.c.h.b16 %v2570
        %v2649 = vunpack.c.l.b16 %v2571
        %v2650 = vunpack.c.h.b16 %v2571
        %v2651 = vunpack.c.l.b16 %v2572
        %v2652 = vunpack.c.h.b16 %v2572
        %v2653 = vunpack.c.l.b16 %v2573
        %v2654 = vunpack.c.h.b16 %v2573
        %v2655 = vunpack.c.l.b16 %v2574
        %v2656 = vunpack.c.h.b16 %v2574
        %v2657 = vunpack.c.l.b16 %v2575
        %v2658 = vunpack.c.h.b16 %v2575
        %v2659 = vunpack.c.l.b16 %v2576
        %v2660 = vunpack.c.h.b16 %v2576
        %v2661 = vunpack.c.l.b16 %v2577
        %v2662 = vunpack.c.h.b16 %v2577
        %v2663 = vunpack.c.l.b16 %v2578
        %v2664 = vunpack.c.h.b16 %v2578
        %v2665 = vunpack.c.l.b16 %v2579
        %v2666 = vunpack.c.h.b16 %v2579
        %v2667 = vunpack.c.l.b16 %v2580
        %v2668 = vunpack.c.h.b16 %v2580
        %v2669 = vunpack.c.l.b16 %v2581
        %v2670 = vunpack.c.h.b16 %v2581
        %v2671 = vunpack.c.l.b16 %v2582
        %v2672 = vunpack.c.h.b16 %v2582
        %v2673 = vunpack.c.l.b16 %v2583
        %v2674 = vunpack.c.h.b16 %v2583
        %v2675 = vunpack.c.l.b16 %v2584
        %v2676 = vunpack.c.h.b16 %v2584
        %v2677 = vunpack.c.l.b16 %v2585
        %v2678 = vunpack.c.h.b16 %v2585
        %v2679 = vunpack.c.l.b16 %v2586
        %v2680 = vunpack.c.h.b16 %v2586
        %v2681 = vunpack.c.l.b16 %v2587
        %v2682 = vunpack.c.h.b16 %v2587
        %v2683 = vunpack.c.l.b16 %v2588
        %v2684 = vunpack.c.h.b16 %v2588
        %v2685 = vpack.c.b16 %v2625, %v2621
        %v2686 = vpack.c.b16 %v2626, %v2622
        %v2687 = vpack.c.b16 %v2627, %v2623
        %v2688 = vpack.c.b16 %v2628, %v2624
        %v2689 = vpack.c.b16 %v2633, %v2629
        %v2690 = vpack.c.b16 %v2634, %v2630
        %v2691 = vpack.c.b16 %v2635, %v2631
        %v2692 = vpack.c.b16 %v2636, %v2632
        %v2693 = vpack.c.b16 %v2641, %v2637
        %v2694 = vpack.c.b16 %v2642, %v2638
        %v2695 = vpack.c.b16 %v2643, %v2639
        %v2696 = vpack.c.b16 %v2644, %v2640
        %v2697 = vpack.c.b16 %v2649, %v2645
        %v2698 = vpack.c.b16 %v2650, %v2646
        %v2699 = vpack.c.b16 %v2651, %v2647
        %v2700 = vpack.c.b16 %v2652, %v2648
        %v2701 = vpack.c.b16 %v2657, %v2653
        %v2702 = vpack.c.b16 %v2658, %v2654
        %v2703 = vpack.c.b16 %v2659, %v2655
        %v2704 = vpack.c.b16 %v2660, %v2656
        %v2705 = vpack.c.b16 %v2665, %v2661
        %v2706 = vpack.c.b16 %v2666, %v2662
        %v2707 = vpack.c.b16 %v2667, %v2663
        %v2708 = vpack.c.b16 %v2668, %v2664
        %v2709 = vpack.c.b16 %v2673, %v2669
        %v2710 = vpack.c.b16 %v2674, %v2670
        %v2711 = vpack.c.b16 %v2675, %v2671
        %v2712 = vpack.c.b16 %v2676, %v2672
        %v2713 = vpack.c.b16 %v2681, %v2677
        %v2714 = vpack.c.b16 %v2682, %v2678
        %v2715 = vpack.c.b16 %v2683, %v2679
        %v2716 = vpack.c.b16 %v2684, %v2680
        %2749 = vmatprep.subr.bf16.mxu0 %v2714
        %2750 = vmatpush1.bf16.msra.mxu0 %v2713
        %2751 = vmatprep.subr.bf16.mxu0 %v2710
        %2752 = vmatpush1.bf16.msra.mxu0 %v2709
        %2753 = vmatprep.subr.bf16.mxu0 %v2706
        %2754 = vmatpush1.bf16.msra.mxu0 %v2705
        %2755 = vmatprep.subr.bf16.mxu0 %v2702
        %2756 = vmatpush1.bf16.msra.mxu0 %v2701
        %2757 = vmatprep.subr.bf16.mxu0 %v2698
        %2758 = vmatpush1.bf16.msra.mxu0 %v2697
        %2759 = vmatprep.subr.bf16.mxu0 %v2694
        %2760 = vmatpush1.bf16.msra.mxu0 %v2693
        %2761 = vmatprep.subr.bf16.mxu0 %v2690
        %2762 = vmatpush1.bf16.msra.mxu0 %v2689
        %2763 = vmatprep.subr.bf16.mxu0 %v2686
        %2764 = vmatpush1.bf16.msra.mxu0 %v2685
        %2765 = vmatprep.subr.bf16.mxu0 0
        %2766 = vmatpush2.bf16.msra.mxu0 0
        %2767 = vmatprep.subr.bf16.mxu0 0
        %2768 = vmatpush2.bf16.msra.mxu0 0
        %2769 = vmatprep.subr.bf16.mxu0 0
        %2770 = vmatpush2.bf16.msra.mxu0 0
        %2771 = vmatprep.subr.bf16.mxu0 0
        %2772 = vmatpush2.bf16.msra.mxu0 0
        %2773 = vmatprep.subr.bf16.mxu0 0
        %2774 = vmatpush2.bf16.msra.mxu0 0
        %2775 = vmatprep.subr.bf16.mxu0 0
        %2776 = vmatpush2.bf16.msra.mxu0 0
        %2777 = vmatprep.subr.bf16.mxu0 0
        %2778 = vmatpush2.bf16.msra.mxu0 0
        %2779 = vmatprep.subr.bf16.mxu0 0
        %2780 = vmatpush2.bf16.msra.mxu0 0
        %2781 = vmatprep.mubr.bf16.mxu0 0
        %2782 = vmatmul.mubr.bf16.gmra.mxu0 %v2404
        %v2783 = vpop.f32.mrf.mxu0
        %v2784 = vadd.f32 0.0, %v2783
        %v2785 = vpop.f32.mrf.mxu0
        %v2786 = vadd.f32 0.0, %v2785
        %v2787 = vpop.f32.mrf.mxu0
        %v2788 = vpop.f32.mrf.mxu0
        %2789 = vdwg.mxu0
        %2790 = vmatprep.subr.bf16.mxu0 %v2716
        %2791 = vmatpush1.bf16.msra.mxu0 %v2715
        %2792 = vmatprep.subr.bf16.mxu0 %v2712
        %2793 = vmatpush1.bf16.msra.mxu0 %v2711
        %2794 = vmatprep.subr.bf16.mxu0 %v2708
        %2795 = vmatpush1.bf16.msra.mxu0 %v2707
        %2796 = vmatprep.subr.bf16.mxu0 %v2704
        %2797 = vmatpush1.bf16.msra.mxu0 %v2703
        %2798 = vmatprep.subr.bf16.mxu0 %v2700
        %2799 = vmatpush1.bf16.msra.mxu0 %v2699
        %2800 = vmatprep.subr.bf16.mxu0 %v2696
        %2801 = vmatpush1.bf16.msra.mxu0 %v2695
        %2802 = vmatprep.subr.bf16.mxu0 %v2692
        %2803 = vmatpush1.bf16.msra.mxu0 %v2691
        %2804 = vmatprep.subr.bf16.mxu0 %v2688
        %2805 = vmatpush1.bf16.msra.mxu0 %v2687
        %2806 = vmatprep.subr.bf16.mxu0 0
        %2807 = vmatpush2.bf16.msra.mxu0 0
        %2808 = vmatprep.subr.bf16.mxu0 0
        %2809 = vmatpush2.bf16.msra.mxu0 0
        %2810 = vmatprep.subr.bf16.mxu0 0
        %2811 = vmatpush2.bf16.msra.mxu0 0
        %2812 = vmatprep.subr.bf16.mxu0 0
        %2813 = vmatpush2.bf16.msra.mxu0 0
        %2814 = vmatprep.subr.bf16.mxu0 0
        %2815 = vmatpush2.bf16.msra.mxu0 0
        %2816 = vmatprep.subr.bf16.mxu0 0
        %2817 = vmatpush2.bf16.msra.mxu0 0
        %2818 = vmatprep.subr.bf16.mxu0 0
        %2819 = vmatpush2.bf16.msra.mxu0 0
        %2820 = vmatprep.subr.bf16.mxu0 0
        %2821 = vmatpush2.bf16.msra.mxu0 0
        %2822 = vmatprep.mubr.bf16.mxu0 0
        %2823 = vmatmul.mubr.bf16.gmra.mxu0 %v2404
        %v2824 = vpop.f32.mrf.mxu0
        %v2825 = vadd.f32 0.0, %v2824
        %v2826 = vpop.f32.mrf.mxu0
        %v2827 = vadd.f32 0.0, %v2826
        %v2828 = vpop.f32.mrf.mxu0
        %v2829 = vpop.f32.mrf.mxu0
        %2830 = vdwg.mxu0
        %v2863 = vunpack.c.l.b16 %v2525
        %v2864 = vunpack.c.h.b16 %v2525
        %v2865 = vunpack.c.l.b16 %v2526
        %v2866 = vunpack.c.h.b16 %v2526
        %v2867 = vunpack.c.l.b16 %v2527
        %v2868 = vunpack.c.h.b16 %v2527
        %v2869 = vunpack.c.l.b16 %v2528
        %v2870 = vunpack.c.h.b16 %v2528
        %v2871 = vunpack.c.l.b16 %v2529
        %v2872 = vunpack.c.h.b16 %v2529
        %v2873 = vunpack.c.l.b16 %v2530
        %v2874 = vunpack.c.h.b16 %v2530
        %v2875 = vunpack.c.l.b16 %v2531
        %v2876 = vunpack.c.h.b16 %v2531
        %v2877 = vunpack.c.l.b16 %v2532
        %v2878 = vunpack.c.h.b16 %v2532
        %v2879 = vunpack.c.l.b16 %v2533
        %v2880 = vunpack.c.h.b16 %v2533
        %v2881 = vunpack.c.l.b16 %v2534
        %v2882 = vunpack.c.h.b16 %v2534
        %v2883 = vunpack.c.l.b16 %v2535
        %v2884 = vunpack.c.h.b16 %v2535
        %v2885 = vunpack.c.l.b16 %v2536
        %v2886 = vunpack.c.h.b16 %v2536
        %v2887 = vunpack.c.l.b16 %v2537
        %v2888 = vunpack.c.h.b16 %v2537
        %v2889 = vunpack.c.l.b16 %v2538
        %v2890 = vunpack.c.h.b16 %v2538
        %v2891 = vunpack.c.l.b16 %v2539
        %v2892 = vunpack.c.h.b16 %v2539
        %v2893 = vunpack.c.l.b16 %v2540
        %v2894 = vunpack.c.h.b16 %v2540
        %v2895 = vunpack.c.l.b16 %v2541
        %v2896 = vunpack.c.h.b16 %v2541
        %v2897 = vunpack.c.l.b16 %v2542
        %v2898 = vunpack.c.h.b16 %v2542
        %v2899 = vunpack.c.l.b16 %v2543
        %v2900 = vunpack.c.h.b16 %v2543
        %v2901 = vunpack.c.l.b16 %v2544
        %v2902 = vunpack.c.h.b16 %v2544
        %v2903 = vunpack.c.l.b16 %v2545
        %v2904 = vunpack.c.h.b16 %v2545
        %v2905 = vunpack.c.l.b16 %v2546
        %v2906 = vunpack.c.h.b16 %v2546
        %v2907 = vunpack.c.l.b16 %v2547
        %v2908 = vunpack.c.h.b16 %v2547
        %v2909 = vunpack.c.l.b16 %v2548
        %v2910 = vunpack.c.h.b16 %v2548
        %v2911 = vunpack.c.l.b16 %v2549
        %v2912 = vunpack.c.h.b16 %v2549
        %v2913 = vunpack.c.l.b16 %v2550
        %v2914 = vunpack.c.h.b16 %v2550
        %v2915 = vunpack.c.l.b16 %v2551
        %v2916 = vunpack.c.h.b16 %v2551
        %v2917 = vunpack.c.l.b16 %v2552
        %v2918 = vunpack.c.h.b16 %v2552
        %v2919 = vunpack.c.l.b16 %v2553
        %v2920 = vunpack.c.h.b16 %v2553
        %v2921 = vunpack.c.l.b16 %v2554
        %v2922 = vunpack.c.h.b16 %v2554
        %v2923 = vunpack.c.l.b16 %v2555
        %v2924 = vunpack.c.h.b16 %v2555
        %v2925 = vunpack.c.l.b16 %v2556
        %v2926 = vunpack.c.h.b16 %v2556
        %v2927 = vpack.c.b16 %v2867, %v2863
        %v2928 = vpack.c.b16 %v2868, %v2864
        %v2929 = vpack.c.b16 %v2869, %v2865
        %v2930 = vpack.c.b16 %v2870, %v2866
        %v2931 = vpack.c.b16 %v2875, %v2871
        %v2932 = vpack.c.b16 %v2876, %v2872
        %v2933 = vpack.c.b16 %v2877, %v2873
        %v2934 = vpack.c.b16 %v2878, %v2874
        %v2935 = vpack.c.b16 %v2883, %v2879
        %v2936 = vpack.c.b16 %v2884, %v2880
        %v2937 = vpack.c.b16 %v2885, %v2881
        %v2938 = vpack.c.b16 %v2886, %v2882
        %v2939 = vpack.c.b16 %v2891, %v2887
        %v2940 = vpack.c.b16 %v2892, %v2888
        %v2941 = vpack.c.b16 %v2893, %v2889
        %v2942 = vpack.c.b16 %v2894, %v2890
        %v2943 = vpack.c.b16 %v2899, %v2895
        %v2944 = vpack.c.b16 %v2900, %v2896
        %v2945 = vpack.c.b16 %v2901, %v2897
        %v2946 = vpack.c.b16 %v2902, %v2898
        %v2947 = vpack.c.b16 %v2907, %v2903
        %v2948 = vpack.c.b16 %v2908, %v2904
        %v2949 = vpack.c.b16 %v2909, %v2905
        %v2950 = vpack.c.b16 %v2910, %v2906
        %v2951 = vpack.c.b16 %v2915, %v2911
        %v2952 = vpack.c.b16 %v2916, %v2912
        %v2953 = vpack.c.b16 %v2917, %v2913
        %v2954 = vpack.c.b16 %v2918, %v2914
        %v2955 = vpack.c.b16 %v2923, %v2919
        %v2956 = vpack.c.b16 %v2924, %v2920
        %v2957 = vpack.c.b16 %v2925, %v2921
        %v2958 = vpack.c.b16 %v2926, %v2922
        %2991 = vmatprep.subr.bf16.mxu0 %v2956
        %2992 = vmatpush1.bf16.msra.mxu0 %v2955
        %2993 = vmatprep.subr.bf16.mxu0 %v2952
        %2994 = vmatpush1.bf16.msra.mxu0 %v2951
        %2995 = vmatprep.subr.bf16.mxu0 %v2948
        %2996 = vmatpush1.bf16.msra.mxu0 %v2947
        %2997 = vmatprep.subr.bf16.mxu0 %v2944
        %2998 = vmatpush1.bf16.msra.mxu0 %v2943
        %2999 = vmatprep.subr.bf16.mxu0 %v2940
        %3000 = vmatpush1.bf16.msra.mxu0 %v2939
        %3001 = vmatprep.subr.bf16.mxu0 %v2936
        %3002 = vmatpush1.bf16.msra.mxu0 %v2935
        %3003 = vmatprep.subr.bf16.mxu0 %v2932
        %3004 = vmatpush1.bf16.msra.mxu0 %v2931
        %3005 = vmatprep.subr.bf16.mxu0 %v2928
        %3006 = vmatpush1.bf16.msra.mxu0 %v2927
        %3007 = vmatprep.subr.bf16.mxu0 0
        %3008 = vmatpush2.bf16.msra.mxu0 0
        %3009 = vmatprep.subr.bf16.mxu0 0
        %3010 = vmatpush2.bf16.msra.mxu0 0
        %3011 = vmatprep.subr.bf16.mxu0 0
        %3012 = vmatpush2.bf16.msra.mxu0 0
        %3013 = vmatprep.subr.bf16.mxu0 0
        %3014 = vmatpush2.bf16.msra.mxu0 0
        %3015 = vmatprep.subr.bf16.mxu0 0
        %3016 = vmatpush2.bf16.msra.mxu0 0
        %3017 = vmatprep.subr.bf16.mxu0 0
        %3018 = vmatpush2.bf16.msra.mxu0 0
        %3019 = vmatprep.subr.bf16.mxu0 0
        %3020 = vmatpush2.bf16.msra.mxu0 0
        %3021 = vmatprep.subr.bf16.mxu0 0
        %3022 = vmatpush2.bf16.msra.mxu0 0
        %3023 = vmatprep.mubr.bf16.mxu0 0
        %3024 = vmatmul.mubr.bf16.gmra.mxu0 %v2524
        %v3025 = vpop.f32.mrf.mxu0
        %v3026 = vadd.f32 %v2784, %v3025
        %v3027 = vpop.f32.mrf.mxu0
        %v3028 = vadd.f32 %v2786, %v3027
        %v3029 = vpop.f32.mrf.mxu0
        %v3030 = vpop.f32.mrf.mxu0
        %3031 = vdwg.mxu0
        %3032 = vmatprep.subr.bf16.mxu0 %v2958
        %3033 = vmatpush1.bf16.msra.mxu0 %v2957
        %3034 = vmatprep.subr.bf16.mxu0 %v2954
        %3035 = vmatpush1.bf16.msra.mxu0 %v2953
        %3036 = vmatprep.subr.bf16.mxu0 %v2950
        %3037 = vmatpush1.bf16.msra.mxu0 %v2949
        %3038 = vmatprep.subr.bf16.mxu0 %v2946
        %3039 = vmatpush1.bf16.msra.mxu0 %v2945
        %3040 = vmatprep.subr.bf16.mxu0 %v2942
        %3041 = vmatpush1.bf16.msra.mxu0 %v2941
        %3042 = vmatprep.subr.bf16.mxu0 %v2938
        %3043 = vmatpush1.bf16.msra.mxu0 %v2937
        %3044 = vmatprep.subr.bf16.mxu0 %v2934
        %3045 = vmatpush1.bf16.msra.mxu0 %v2933
        %3046 = vmatprep.subr.bf16.mxu0 %v2930
        %3047 = vmatpush1.bf16.msra.mxu0 %v2929
        %3048 = vmatprep.subr.bf16.mxu0 0
        %3049 = vmatpush2.bf16.msra.mxu0 0
        %3050 = vmatprep.subr.bf16.mxu0 0
        %3051 = vmatpush2.bf16.msra.mxu0 0
        %3052 = vmatprep.subr.bf16.mxu0 0
        %3053 = vmatpush2.bf16.msra.mxu0 0
        %3054 = vmatprep.subr.bf16.mxu0 0
        %3055 = vmatpush2.bf16.msra.mxu0 0
        %3056 = vmatprep.subr.bf16.mxu0 0
        %3057 = vmatpush2.bf16.msra.mxu0 0
        %3058 = vmatprep.subr.bf16.mxu0 0
        %3059 = vmatpush2.bf16.msra.mxu0 0
        %3060 = vmatprep.subr.bf16.mxu0 0
        %3061 = vmatpush2.bf16.msra.mxu0 0
        %3062 = vmatprep.subr.bf16.mxu0 0
        %3063 = vmatpush2.bf16.msra.mxu0 0
        %3064 = vmatprep.mubr.bf16.mxu0 0
        %3065 = vmatmul.mubr.bf16.gmra.mxu0 %v2524
        %v3066 = vpop.f32.mrf.mxu0
        %v3067 = vadd.f32 %v2825, %v3066
        %v3068 = vpop.f32.mrf.mxu0
        %v3069 = vadd.f32 %v2827, %v3068
        %v3070 = vpop.f32.mrf.mxu0
        %v3071 = vpop.f32.mrf.mxu0
        %3072 = vdwg.mxu0
        %v3073 = vadd.f32 %v3026, %v422
        %v3074 = vadd.f32 %v3028, %v426
        %v3075 = vadd.f32 %v3067, %v430
        %v3076 = vadd.f32 %v3069, %v434
        %v3077 = vxor.u32 %v3073, 2147483648
        %v3078 = vmul.f32 %v3077, 1.442695
        %v3079 = vpow.pop %v3078
        %v3080 = vadd.f32 %v3079, 1.0
        %v3081 = vrcp.pop %v3080
        %v3082 = vmul.f32 1.0, %v3081
        %v3083 = vxor.u32 %v3074, 2147483648
        %v3084 = vmul.f32 %v3083, 1.442695
        %v3085 = vpow.pop %v3084
        %v3086 = vadd.f32 %v3085, 1.0
        %v3087 = vrcp.pop %v3086
        %v3088 = vmul.f32 1.0, %v3087
        %v3089 = vmul.f32 %v3082, %v3076
        %v3090 = vadd.f32 %v3075, %v3089
        %v3091 = vtanh.pop %v3090
        %v3092 = vsub.f32 1.0, %v3088
        %v3093 = vmul.f32 %v3092, %v3091
        %v3094 = vmul.f32 %v3088, %v2403
        %v3095 = vadd.f32 %v3093, %v3094
        %v3096 = vpack.c.bf16 %v3095, %v3095
        %v3097 = vld [vmem:[#allocation11] sm:$0xf]
        %v3098 = vld [vmem:[#allocation11 + $0x4] sm:$0xf]
        %v3099 = vld [vmem:[#allocation11 + $0x8] sm:$0xf]
        %v3100 = vld [vmem:[#allocation11 + $0xc] sm:$0xf]
        %v3101 = vld [vmem:[#allocation11 + $0x10] sm:$0xf]
        %v3102 = vld [vmem:[#allocation11 + $0x14] sm:$0xf]
        %v3103 = vld [vmem:[#allocation11 + $0x18] sm:$0xf]
        %v3104 = vld [vmem:[#allocation11 + $0x1c] sm:$0xf]
        %v3105 = vld [vmem:[#allocation11 + $0x20] sm:$0xf]
        %v3106 = vld [vmem:[#allocation11 + $0x24] sm:$0xf]
        %v3107 = vld [vmem:[#allocation11 + $0x28] sm:$0xf]
        %v3108 = vld [vmem:[#allocation11 + $0x2c] sm:$0xf]
        %v3109 = vld [vmem:[#allocation11 + $0x30] sm:$0xf]
        %v3110 = vld [vmem:[#allocation11 + $0x34] sm:$0xf]
        %v3111 = vld [vmem:[#allocation11 + $0x38] sm:$0xf]
        %v3112 = vld [vmem:[#allocation11 + $0x3c] sm:$0xf]
        %v3129 = vunpack.c.l.b16 %v3097
        %v3130 = vunpack.c.l.b16 %v3098
        %v3131 = vunpack.c.l.b16 %v3099
        %v3132 = vunpack.c.l.b16 %v3100
        %v3133 = vunpack.c.l.b16 %v3101
        %v3134 = vunpack.c.l.b16 %v3102
        %v3135 = vunpack.c.l.b16 %v3103
        %v3136 = vunpack.c.l.b16 %v3104
        %v3137 = vunpack.c.l.b16 %v3105
        %v3138 = vunpack.c.l.b16 %v3106
        %v3139 = vunpack.c.l.b16 %v3107
        %v3140 = vunpack.c.l.b16 %v3108
        %v3141 = vunpack.c.l.b16 %v3109
        %v3142 = vunpack.c.l.b16 %v3110
        %v3143 = vunpack.c.l.b16 %v3111
        %v3144 = vunpack.c.l.b16 %v3112
        %v3145 = vpack.c.b16 %v3130, %v3129
        %v3146 = vpack.c.b16 %v3132, %v3131
        %v3147 = vpack.c.b16 %v3134, %v3133
        %v3148 = vpack.c.b16 %v3136, %v3135
        %v3149 = vpack.c.b16 %v3138, %v3137
        %v3150 = vpack.c.b16 %v3140, %v3139
        %v3151 = vpack.c.b16 %v3142, %v3141
        %v3152 = vpack.c.b16 %v3144, %v3143
        %3161 = vmatprep.subr.bf16.mxu0 0
        %3162 = vmatpush1.bf16.msra.mxu0 %v3152
        %3163 = vmatprep.subr.bf16.mxu0 0
        %3164 = vmatpush1.bf16.msra.mxu0 %v3151
        %3165 = vmatprep.subr.bf16.mxu0 0
        %3166 = vmatpush1.bf16.msra.mxu0 %v3150
        %3167 = vmatprep.subr.bf16.mxu0 0
        %3168 = vmatpush1.bf16.msra.mxu0 %v3149
        %3169 = vmatprep.subr.bf16.mxu0 0
        %3170 = vmatpush1.bf16.msra.mxu0 %v3148
        %3171 = vmatprep.subr.bf16.mxu0 0
        %3172 = vmatpush1.bf16.msra.mxu0 %v3147
        %3173 = vmatprep.subr.bf16.mxu0 0
        %3174 = vmatpush1.bf16.msra.mxu0 %v3146
        %3175 = vmatprep.subr.bf16.mxu0 0
        %3176 = vmatpush1.bf16.msra.mxu0 %v3145
        %3177 = vmatprep.subr.bf16.mxu0 0
        %3178 = vmatpush2.bf16.msra.mxu0 0
        %3179 = vmatprep.subr.bf16.mxu0 0
        %3180 = vmatpush2.bf16.msra.mxu0 0
        %3181 = vmatprep.subr.bf16.mxu0 0
        %3182 = vmatpush2.bf16.msra.mxu0 0
        %3183 = vmatprep.subr.bf16.mxu0 0
        %3184 = vmatpush2.bf16.msra.mxu0 0
        %3185 = vmatprep.subr.bf16.mxu0 0
        %3186 = vmatpush2.bf16.msra.mxu0 0
        %3187 = vmatprep.subr.bf16.mxu0 0
        %3188 = vmatpush2.bf16.msra.mxu0 0
        %3189 = vmatprep.subr.bf16.mxu0 0
        %3190 = vmatpush2.bf16.msra.mxu0 0
        %3191 = vmatprep.subr.bf16.mxu0 0
        %3192 = vmatpush2.bf16.msra.mxu0 0
        %3193 = vmatprep.mubr.bf16.mxu0 0
        %3194 = vmatmul.mubr.bf16.gmra.mxu0 %v3096
        %v3195 = vpop.f32.mrf.mxu0
        %v3196 = vadd.f32 %v444, %v3195
        %v3197 = vpop.f32.mrf.mxu0
        %v3198 = vpop.f32.mrf.mxu0
        %v3199 = vpop.f32.mrf.mxu0
        %3200 = vdwg.mxu0
        %3201 = vmax.xlane.f32.xlu0 %v3196
        %v3202 = vpop.xlane.xlu0 %3201
        %v3203 = vsub.f32 %v3196, %v3202
        %v3204 = vmul.f32 %v3203, 1.442695
        %v3205 = vpow.pop %v3204
        %3206 = vadd.xlane.f32.xlu0 %v3205
        %v3207 = vpop.xlane.xlu0 %3206
        %v3208 = vlog2.pop %v3207
        %v3209 = vmul.f32 %v3208, 0.6931472
        %v3210 = vadd.f32 %v3202, %v3209
        %v3211 = vsub.f32 %v3196, %v3210
        %s3212 = scalar_lea.vmem %s405, 24 [#allocation12]
        %3213 = vst [vmem:[%s3212] sm:$0xff] %v3211
        %s3214 = scalar_lea.vmem %s359, 16 [#allocation3]
        %v3215 = vld [vmem:[%s3214] sm:$0xf]
        %v3216 = vmax.bf16 %v3215, 0
        %v3217 = vld [vmem:[#allocation8] sm:$0xff]
        %v3218 = vld [vmem:[#allocation8 + $0x8] sm:$0xff]
        %v3219 = vld [vmem:[#allocation8 + $0x10] sm:$0xff]
        %v3220 = vld [vmem:[#allocation8 + $0x18] sm:$0xff]
        %v3221 = vld [vmem:[#allocation8 + $0x20] sm:$0xff]
        %v3222 = vld [vmem:[#allocation8 + $0x28] sm:$0xff]
        %v3223 = vld [vmem:[#allocation8 + $0x30] sm:$0xff]
        %v3224 = vld [vmem:[#allocation8 + $0x38] sm:$0xff]
        %v3225 = vld [vmem:[#allocation8 + $0x40] sm:$0xff]
        %v3226 = vld [vmem:[#allocation8 + $0x48] sm:$0xff]
        %v3227 = vld [vmem:[#allocation8 + $0x50] sm:$0xff]
        %v3228 = vld [vmem:[#allocation8 + $0x58] sm:$0xff]
        %v3229 = vld [vmem:[#allocation8 + $0x60] sm:$0xff]
        %v3230 = vld [vmem:[#allocation8 + $0x68] sm:$0xff]
        %v3231 = vld [vmem:[#allocation8 + $0x70] sm:$0xff]
        %v3232 = vld [vmem:[#allocation8 + $0x78] sm:$0xff]
        %v3233 = vld [vmem:[#allocation8 + $0x80] sm:$0xff]
        %v3234 = vld [vmem:[#allocation8 + $0x88] sm:$0xff]
        %v3235 = vld [vmem:[#allocation8 + $0x90] sm:$0xff]
        %v3236 = vld [vmem:[#allocation8 + $0x98] sm:$0xff]
        %v3237 = vld [vmem:[#allocation8 + $0xa0] sm:$0xff]
        %v3238 = vld [vmem:[#allocation8 + $0xa8] sm:$0xff]
        %v3239 = vld [vmem:[#allocation8 + $0xb0] sm:$0xff]
        %v3240 = vld [vmem:[#allocation8 + $0xb8] sm:$0xff]
        %v3241 = vld [vmem:[#allocation8 + $0xc0] sm:$0xff]
        %v3242 = vld [vmem:[#allocation8 + $0xc8] sm:$0xff]
        %v3243 = vld [vmem:[#allocation8 + $0xd0] sm:$0xff]
        %v3244 = vld [vmem:[#allocation8 + $0xd8] sm:$0xff]
        %v3245 = vld [vmem:[#allocation8 + $0xe0] sm:$0xff]
        %v3246 = vld [vmem:[#allocation8 + $0xe8] sm:$0xff]
        %v3247 = vld [vmem:[#allocation8 + $0xf0] sm:$0xff]
        %v3248 = vld [vmem:[#allocation8 + $0xf8] sm:$0xff]
        %v3249 = vld [vmem:[#allocation9] sm:$0xff]
        %v3250 = vld [vmem:[#allocation9 + $0x8] sm:$0xff]
        %v3251 = vld [vmem:[#allocation9 + $0x10] sm:$0xff]
        %v3252 = vld [vmem:[#allocation9 + $0x18] sm:$0xff]
        %v3253 = vld [vmem:[#allocation9 + $0x20] sm:$0xff]
        %v3254 = vld [vmem:[#allocation9 + $0x28] sm:$0xff]
        %v3255 = vld [vmem:[#allocation9 + $0x30] sm:$0xff]
        %v3256 = vld [vmem:[#allocation9 + $0x38] sm:$0xff]
        %v3257 = vld [vmem:[#allocation9 + $0x40] sm:$0xff]
        %v3258 = vld [vmem:[#allocation9 + $0x48] sm:$0xff]
        %v3259 = vld [vmem:[#allocation9 + $0x50] sm:$0xff]
        %v3260 = vld [vmem:[#allocation9 + $0x58] sm:$0xff]
        %v3261 = vld [vmem:[#allocation9 + $0x60] sm:$0xff]
        %v3262 = vld [vmem:[#allocation9 + $0x68] sm:$0xff]
        %v3263 = vld [vmem:[#allocation9 + $0x70] sm:$0xff]
        %v3264 = vld [vmem:[#allocation9 + $0x78] sm:$0xff]
        %v3265 = vld [vmem:[#allocation9 + $0x80] sm:$0xff]
        %v3266 = vld [vmem:[#allocation9 + $0x88] sm:$0xff]
        %v3267 = vld [vmem:[#allocation9 + $0x90] sm:$0xff]
        %v3268 = vld [vmem:[#allocation9 + $0x98] sm:$0xff]
        %v3269 = vld [vmem:[#allocation9 + $0xa0] sm:$0xff]
        %v3270 = vld [vmem:[#allocation9 + $0xa8] sm:$0xff]
        %v3271 = vld [vmem:[#allocation9 + $0xb0] sm:$0xff]
        %v3272 = vld [vmem:[#allocation9 + $0xb8] sm:$0xff]
        %v3273 = vld [vmem:[#allocation9 + $0xc0] sm:$0xff]
        %v3274 = vld [vmem:[#allocation9 + $0xc8] sm:$0xff]
        %v3275 = vld [vmem:[#allocation9 + $0xd0] sm:$0xff]
        %v3276 = vld [vmem:[#allocation9 + $0xd8] sm:$0xff]
        %v3277 = vld [vmem:[#allocation9 + $0xe0] sm:$0xff]
        %v3278 = vld [vmem:[#allocation9 + $0xe8] sm:$0xff]
        %v3279 = vld [vmem:[#allocation9 + $0xf0] sm:$0xff]
        %v3280 = vld [vmem:[#allocation9 + $0xf8] sm:$0xff]
        %v3313 = vunpack.c.l.b16 %v3249
        %v3314 = vunpack.c.h.b16 %v3249
        %v3315 = vunpack.c.l.b16 %v3250
        %v3316 = vunpack.c.h.b16 %v3250
        %v3317 = vunpack.c.l.b16 %v3251
        %v3318 = vunpack.c.h.b16 %v3251
        %v3319 = vunpack.c.l.b16 %v3252
        %v3320 = vunpack.c.h.b16 %v3252
        %v3321 = vunpack.c.l.b16 %v3253
        %v3322 = vunpack.c.h.b16 %v3253
        %v3323 = vunpack.c.l.b16 %v3254
        %v3324 = vunpack.c.h.b16 %v3254
        %v3325 = vunpack.c.l.b16 %v3255
        %v3326 = vunpack.c.h.b16 %v3255
        %v3327 = vunpack.c.l.b16 %v3256
        %v3328 = vunpack.c.h.b16 %v3256
        %v3329 = vunpack.c.l.b16 %v3257
        %v3330 = vunpack.c.h.b16 %v3257
        %v3331 = vunpack.c.l.b16 %v3258
        %v3332 = vunpack.c.h.b16 %v3258
        %v3333 = vunpack.c.l.b16 %v3259
        %v3334 = vunpack.c.h.b16 %v3259
        %v3335 = vunpack.c.l.b16 %v3260
        %v3336 = vunpack.c.h.b16 %v3260
        %v3337 = vunpack.c.l.b16 %v3261
        %v3338 = vunpack.c.h.b16 %v3261
        %v3339 = vunpack.c.l.b16 %v3262
        %v3340 = vunpack.c.h.b16 %v3262
        %v3341 = vunpack.c.l.b16 %v3263
        %v3342 = vunpack.c.h.b16 %v3263
        %v3343 = vunpack.c.l.b16 %v3264
        %v3344 = vunpack.c.h.b16 %v3264
        %v3345 = vunpack.c.l.b16 %v3265
        %v3346 = vunpack.c.h.b16 %v3265
        %v3347 = vunpack.c.l.b16 %v3266
        %v3348 = vunpack.c.h.b16 %v3266
        %v3349 = vunpack.c.l.b16 %v3267
        %v3350 = vunpack.c.h.b16 %v3267
        %v3351 = vunpack.c.l.b16 %v3268
        %v3352 = vunpack.c.h.b16 %v3268
        %v3353 = vunpack.c.l.b16 %v3269
        %v3354 = vunpack.c.h.b16 %v3269
        %v3355 = vunpack.c.l.b16 %v3270
        %v3356 = vunpack.c.h.b16 %v3270
        %v3357 = vunpack.c.l.b16 %v3271
        %v3358 = vunpack.c.h.b16 %v3271
        %v3359 = vunpack.c.l.b16 %v3272
        %v3360 = vunpack.c.h.b16 %v3272
        %v3361 = vunpack.c.l.b16 %v3273
        %v3362 = vunpack.c.h.b16 %v3273
        %v3363 = vunpack.c.l.b16 %v3274
        %v3364 = vunpack.c.h.b16 %v3274
        %v3365 = vunpack.c.l.b16 %v3275
        %v3366 = vunpack.c.h.b16 %v3275
        %v3367 = vunpack.c.l.b16 %v3276
        %v3368 = vunpack.c.h.b16 %v3276
        %v3369 = vunpack.c.l.b16 %v3277
        %v3370 = vunpack.c.h.b16 %v3277
        %v3371 = vunpack.c.l.b16 %v3278
        %v3372 = vunpack.c.h.b16 %v3278
        %v3373 = vunpack.c.l.b16 %v3279
        %v3374 = vunpack.c.h.b16 %v3279
        %v3375 = vunpack.c.l.b16 %v3280
        %v3376 = vunpack.c.h.b16 %v3280
        %v3377 = vpack.c.b16 %v3317, %v3313
        %v3378 = vpack.c.b16 %v3318, %v3314
        %v3379 = vpack.c.b16 %v3319, %v3315
        %v3380 = vpack.c.b16 %v3320, %v3316
        %v3381 = vpack.c.b16 %v3325, %v3321
        %v3382 = vpack.c.b16 %v3326, %v3322
        %v3383 = vpack.c.b16 %v3327, %v3323
        %v3384 = vpack.c.b16 %v3328, %v3324
        %v3385 = vpack.c.b16 %v3333, %v3329
        %v3386 = vpack.c.b16 %v3334, %v3330
        %v3387 = vpack.c.b16 %v3335, %v3331
        %v3388 = vpack.c.b16 %v3336, %v3332
        %v3389 = vpack.c.b16 %v3341, %v3337
        %v3390 = vpack.c.b16 %v3342, %v3338
        %v3391 = vpack.c.b16 %v3343, %v3339
        %v3392 = vpack.c.b16 %v3344, %v3340
        %v3393 = vpack.c.b16 %v3349, %v3345
        %v3394 = vpack.c.b16 %v3350, %v3346
        %v3395 = vpack.c.b16 %v3351, %v3347
        %v3396 = vpack.c.b16 %v3352, %v3348
        %v3397 = vpack.c.b16 %v3357, %v3353
        %v3398 = vpack.c.b16 %v3358, %v3354
        %v3399 = vpack.c.b16 %v3359, %v3355
        %v3400 = vpack.c.b16 %v3360, %v3356
        %v3401 = vpack.c.b16 %v3365, %v3361
        %v3402 = vpack.c.b16 %v3366, %v3362
        %v3403 = vpack.c.b16 %v3367, %v3363
        %v3404 = vpack.c.b16 %v3368, %v3364
        %v3405 = vpack.c.b16 %v3373, %v3369
        %v3406 = vpack.c.b16 %v3374, %v3370
        %v3407 = vpack.c.b16 %v3375, %v3371
        %v3408 = vpack.c.b16 %v3376, %v3372
        %3441 = vmatprep.subr.bf16.mxu0 %v3406
        %3442 = vmatpush1.bf16.msra.mxu0 %v3405
        %3443 = vmatprep.subr.bf16.mxu0 %v3402
        %3444 = vmatpush1.bf16.msra.mxu0 %v3401
        %3445 = vmatprep.subr.bf16.mxu0 %v3398
        %3446 = vmatpush1.bf16.msra.mxu0 %v3397
        %3447 = vmatprep.subr.bf16.mxu0 %v3394
        %3448 = vmatpush1.bf16.msra.mxu0 %v3393
        %3449 = vmatprep.subr.bf16.mxu0 %v3390
        %3450 = vmatpush1.bf16.msra.mxu0 %v3389
        %3451 = vmatprep.subr.bf16.mxu0 %v3386
        %3452 = vmatpush1.bf16.msra.mxu0 %v3385
        %3453 = vmatprep.subr.bf16.mxu0 %v3382
        %3454 = vmatpush1.bf16.msra.mxu0 %v3381
        %3455 = vmatprep.subr.bf16.mxu0 %v3378
        %3456 = vmatpush1.bf16.msra.mxu0 %v3377
        %3457 = vmatprep.subr.bf16.mxu0 0
        %3458 = vmatpush2.bf16.msra.mxu0 0
        %3459 = vmatprep.subr.bf16.mxu0 0
        %3460 = vmatpush2.bf16.msra.mxu0 0
        %3461 = vmatprep.subr.bf16.mxu0 0
        %3462 = vmatpush2.bf16.msra.mxu0 0
        %3463 = vmatprep.subr.bf16.mxu0 0
        %3464 = vmatpush2.bf16.msra.mxu0 0
        %3465 = vmatprep.subr.bf16.mxu0 0
        %3466 = vmatpush2.bf16.msra.mxu0 0
        %3467 = vmatprep.subr.bf16.mxu0 0
        %3468 = vmatpush2.bf16.msra.mxu0 0
        %3469 = vmatprep.subr.bf16.mxu0 0
        %3470 = vmatpush2.bf16.msra.mxu0 0
        %3471 = vmatprep.subr.bf16.mxu0 0
        %3472 = vmatpush2.bf16.msra.mxu0 0
        %3473 = vmatprep.mubr.bf16.mxu0 0
        %3474 = vmatmul.mubr.bf16.gmra.mxu0 %v3096
        %v3475 = vpop.f32.mrf.mxu0
        %v3476 = vadd.f32 0.0, %v3475
        %v3477 = vpop.f32.mrf.mxu0
        %v3478 = vadd.f32 0.0, %v3477
        %v3479 = vpop.f32.mrf.mxu0
        %v3480 = vpop.f32.mrf.mxu0
        %3481 = vdwg.mxu0
        %3482 = vmatprep.subr.bf16.mxu0 %v3408
        %3483 = vmatpush1.bf16.msra.mxu0 %v3407
        %3484 = vmatprep.subr.bf16.mxu0 %v3404
        %3485 = vmatpush1.bf16.msra.mxu0 %v3403
        %3486 = vmatprep.subr.bf16.mxu0 %v3400
        %3487 = vmatpush1.bf16.msra.mxu0 %v3399
        %3488 = vmatprep.subr.bf16.mxu0 %v3396
        %3489 = vmatpush1.bf16.msra.mxu0 %v3395
        %3490 = vmatprep.subr.bf16.mxu0 %v3392
        %3491 = vmatpush1.bf16.msra.mxu0 %v3391
        %3492 = vmatprep.subr.bf16.mxu0 %v3388
        %3493 = vmatpush1.bf16.msra.mxu0 %v3387
        %3494 = vmatprep.subr.bf16.mxu0 %v3384
        %3495 = vmatpush1.bf16.msra.mxu0 %v3383
        %3496 = vmatprep.subr.bf16.mxu0 %v3380
        %3497 = vmatpush1.bf16.msra.mxu0 %v3379
        %3498 = vmatprep.subr.bf16.mxu0 0
        %3499 = vmatpush2.bf16.msra.mxu0 0
        %3500 = vmatprep.subr.bf16.mxu0 0
        %3501 = vmatpush2.bf16.msra.mxu0 0
        %3502 = vmatprep.subr.bf16.mxu0 0
        %3503 = vmatpush2.bf16.msra.mxu0 0
        %3504 = vmatprep.subr.bf16.mxu0 0
        %3505 = vmatpush2.bf16.msra.mxu0 0
        %3506 = vmatprep.subr.bf16.mxu0 0
        %3507 = vmatpush2.bf16.msra.mxu0 0
        %3508 = vmatprep.subr.bf16.mxu0 0
        %3509 = vmatpush2.bf16.msra.mxu0 0
        %3510 = vmatprep.subr.bf16.mxu0 0
        %3511 = vmatpush2.bf16.msra.mxu0 0
        %3512 = vmatprep.subr.bf16.mxu0 0
        %3513 = vmatpush2.bf16.msra.mxu0 0
        %3514 = vmatprep.mubr.bf16.mxu0 0
        %3515 = vmatmul.mubr.bf16.gmra.mxu0 %v3096
        %v3516 = vpop.f32.mrf.mxu0
        %v3517 = vadd.f32 0.0, %v3516
        %v3518 = vpop.f32.mrf.mxu0
        %v3519 = vadd.f32 0.0, %v3518
        %v3520 = vpop.f32.mrf.mxu0
        %v3521 = vpop.f32.mrf.mxu0
        %3522 = vdwg.mxu0
        %v3555 = vunpack.c.l.b16 %v3217
        %v3556 = vunpack.c.h.b16 %v3217
        %v3557 = vunpack.c.l.b16 %v3218
        %v3558 = vunpack.c.h.b16 %v3218
        %v3559 = vunpack.c.l.b16 %v3219
        %v3560 = vunpack.c.h.b16 %v3219
        %v3561 = vunpack.c.l.b16 %v3220
        %v3562 = vunpack.c.h.b16 %v3220
        %v3563 = vunpack.c.l.b16 %v3221
        %v3564 = vunpack.c.h.b16 %v3221
        %v3565 = vunpack.c.l.b16 %v3222
        %v3566 = vunpack.c.h.b16 %v3222
        %v3567 = vunpack.c.l.b16 %v3223
        %v3568 = vunpack.c.h.b16 %v3223
        %v3569 = vunpack.c.l.b16 %v3224
        %v3570 = vunpack.c.h.b16 %v3224
        %v3571 = vunpack.c.l.b16 %v3225
        %v3572 = vunpack.c.h.b16 %v3225
        %v3573 = vunpack.c.l.b16 %v3226
        %v3574 = vunpack.c.h.b16 %v3226
        %v3575 = vunpack.c.l.b16 %v3227
        %v3576 = vunpack.c.h.b16 %v3227
        %v3577 = vunpack.c.l.b16 %v3228
        %v3578 = vunpack.c.h.b16 %v3228
        %v3579 = vunpack.c.l.b16 %v3229
        %v3580 = vunpack.c.h.b16 %v3229
        %v3581 = vunpack.c.l.b16 %v3230
        %v3582 = vunpack.c.h.b16 %v3230
        %v3583 = vunpack.c.l.b16 %v3231
        %v3584 = vunpack.c.h.b16 %v3231
        %v3585 = vunpack.c.l.b16 %v3232
        %v3586 = vunpack.c.h.b16 %v3232
        %v3587 = vunpack.c.l.b16 %v3233
        %v3588 = vunpack.c.h.b16 %v3233
        %v3589 = vunpack.c.l.b16 %v3234
        %v3590 = vunpack.c.h.b16 %v3234
        %v3591 = vunpack.c.l.b16 %v3235
        %v3592 = vunpack.c.h.b16 %v3235
        %v3593 = vunpack.c.l.b16 %v3236
        %v3594 = vunpack.c.h.b16 %v3236
        %v3595 = vunpack.c.l.b16 %v3237
        %v3596 = vunpack.c.h.b16 %v3237
        %v3597 = vunpack.c.l.b16 %v3238
        %v3598 = vunpack.c.h.b16 %v3238
        %v3599 = vunpack.c.l.b16 %v3239
        %v3600 = vunpack.c.h.b16 %v3239
        %v3601 = vunpack.c.l.b16 %v3240
        %v3602 = vunpack.c.h.b16 %v3240
        %v3603 = vunpack.c.l.b16 %v3241
        %v3604 = vunpack.c.h.b16 %v3241
        %v3605 = vunpack.c.l.b16 %v3242
        %v3606 = vunpack.c.h.b16 %v3242
        %v3607 = vunpack.c.l.b16 %v3243
        %v3608 = vunpack.c.h.b16 %v3243
        %v3609 = vunpack.c.l.b16 %v3244
        %v3610 = vunpack.c.h.b16 %v3244
        %v3611 = vunpack.c.l.b16 %v3245
        %v3612 = vunpack.c.h.b16 %v3245
        %v3613 = vunpack.c.l.b16 %v3246
        %v3614 = vunpack.c.h.b16 %v3246
        %v3615 = vunpack.c.l.b16 %v3247
        %v3616 = vunpack.c.h.b16 %v3247
        %v3617 = vunpack.c.l.b16 %v3248
        %v3618 = vunpack.c.h.b16 %v3248
        %v3619 = vpack.c.b16 %v3559, %v3555
        %v3620 = vpack.c.b16 %v3560, %v3556
        %v3621 = vpack.c.b16 %v3561, %v3557
        %v3622 = vpack.c.b16 %v3562, %v3558
        %v3623 = vpack.c.b16 %v3567, %v3563
        %v3624 = vpack.c.b16 %v3568, %v3564
        %v3625 = vpack.c.b16 %v3569, %v3565
        %v3626 = vpack.c.b16 %v3570, %v3566
        %v3627 = vpack.c.b16 %v3575, %v3571
        %v3628 = vpack.c.b16 %v3576, %v3572
        %v3629 = vpack.c.b16 %v3577, %v3573
        %v3630 = vpack.c.b16 %v3578, %v3574
        %v3631 = vpack.c.b16 %v3583, %v3579
        %v3632 = vpack.c.b16 %v3584, %v3580
        %v3633 = vpack.c.b16 %v3585, %v3581
        %v3634 = vpack.c.b16 %v3586, %v3582
        %v3635 = vpack.c.b16 %v3591, %v3587
        %v3636 = vpack.c.b16 %v3592, %v3588
        %v3637 = vpack.c.b16 %v3593, %v3589
        %v3638 = vpack.c.b16 %v3594, %v3590
        %v3639 = vpack.c.b16 %v3599, %v3595
        %v3640 = vpack.c.b16 %v3600, %v3596
        %v3641 = vpack.c.b16 %v3601, %v3597
        %v3642 = vpack.c.b16 %v3602, %v3598
        %v3643 = vpack.c.b16 %v3607, %v3603
        %v3644 = vpack.c.b16 %v3608, %v3604
        %v3645 = vpack.c.b16 %v3609, %v3605
        %v3646 = vpack.c.b16 %v3610, %v3606
        %v3647 = vpack.c.b16 %v3615, %v3611
        %v3648 = vpack.c.b16 %v3616, %v3612
        %v3649 = vpack.c.b16 %v3617, %v3613
        %v3650 = vpack.c.b16 %v3618, %v3614
        %3683 = vmatprep.subr.bf16.mxu0 %v3648
        %3684 = vmatpush1.bf16.msra.mxu0 %v3647
        %3685 = vmatprep.subr.bf16.mxu0 %v3644
        %3686 = vmatpush1.bf16.msra.mxu0 %v3643
        %3687 = vmatprep.subr.bf16.mxu0 %v3640
        %3688 = vmatpush1.bf16.msra.mxu0 %v3639
        %3689 = vmatprep.subr.bf16.mxu0 %v3636
        %3690 = vmatpush1.bf16.msra.mxu0 %v3635
        %3691 = vmatprep.subr.bf16.mxu0 %v3632
        %3692 = vmatpush1.bf16.msra.mxu0 %v3631
        %3693 = vmatprep.subr.bf16.mxu0 %v3628
        %3694 = vmatpush1.bf16.msra.mxu0 %v3627
        %3695 = vmatprep.subr.bf16.mxu0 %v3624
        %3696 = vmatpush1.bf16.msra.mxu0 %v3623
        %3697 = vmatprep.subr.bf16.mxu0 %v3620
        %3698 = vmatpush1.bf16.msra.mxu0 %v3619
        %3699 = vmatprep.subr.bf16.mxu0 0
        %3700 = vmatpush2.bf16.msra.mxu0 0
        %3701 = vmatprep.subr.bf16.mxu0 0
        %3702 = vmatpush2.bf16.msra.mxu0 0
        %3703 = vmatprep.subr.bf16.mxu0 0
        %3704 = vmatpush2.bf16.msra.mxu0 0
        %3705 = vmatprep.subr.bf16.mxu0 0
        %3706 = vmatpush2.bf16.msra.mxu0 0
        %3707 = vmatprep.subr.bf16.mxu0 0
        %3708 = vmatpush2.bf16.msra.mxu0 0
        %3709 = vmatprep.subr.bf16.mxu0 0
        %3710 = vmatpush2.bf16.msra.mxu0 0
        %3711 = vmatprep.subr.bf16.mxu0 0
        %3712 = vmatpush2.bf16.msra.mxu0 0
        %3713 = vmatprep.subr.bf16.mxu0 0
        %3714 = vmatpush2.bf16.msra.mxu0 0
        %3715 = vmatprep.mubr.bf16.mxu0 0
        %3716 = vmatmul.mubr.bf16.gmra.mxu0 %v3216
        %v3717 = vpop.f32.mrf.mxu0
        %v3718 = vadd.f32 %v3476, %v3717
        %v3719 = vpop.f32.mrf.mxu0
        %v3720 = vadd.f32 %v3478, %v3719
        %v3721 = vpop.f32.mrf.mxu0
        %v3722 = vpop.f32.mrf.mxu0
        %3723 = vdwg.mxu0
        %3724 = vmatprep.subr.bf16.mxu0 %v3650
        %3725 = vmatpush1.bf16.msra.mxu0 %v3649
        %3726 = vmatprep.subr.bf16.mxu0 %v3646
        %3727 = vmatpush1.bf16.msra.mxu0 %v3645
        %3728 = vmatprep.subr.bf16.mxu0 %v3642
        %3729 = vmatpush1.bf16.msra.mxu0 %v3641
        %3730 = vmatprep.subr.bf16.mxu0 %v3638
        %3731 = vmatpush1.bf16.msra.mxu0 %v3637
        %3732 = vmatprep.subr.bf16.mxu0 %v3634
        %3733 = vmatpush1.bf16.msra.mxu0 %v3633
        %3734 = vmatprep.subr.bf16.mxu0 %v3630
        %3735 = vmatpush1.bf16.msra.mxu0 %v3629
        %3736 = vmatprep.subr.bf16.mxu0 %v3626
        %3737 = vmatpush1.bf16.msra.mxu0 %v3625
        %3738 = vmatprep.subr.bf16.mxu0 %v3622
        %3739 = vmatpush1.bf16.msra.mxu0 %v3621
        %3740 = vmatprep.subr.bf16.mxu0 0
        %3741 = vmatpush2.bf16.msra.mxu0 0
        %3742 = vmatprep.subr.bf16.mxu0 0
        %3743 = vmatpush2.bf16.msra.mxu0 0
        %3744 = vmatprep.subr.bf16.mxu0 0
        %3745 = vmatpush2.bf16.msra.mxu0 0
        %3746 = vmatprep.subr.bf16.mxu0 0
        %3747 = vmatpush2.bf16.msra.mxu0 0
        %3748 = vmatprep.subr.bf16.mxu0 0
        %3749 = vmatpush2.bf16.msra.mxu0 0
        %3750 = vmatprep.subr.bf16.mxu0 0
        %3751 = vmatpush2.bf16.msra.mxu0 0
        %3752 = vmatprep.subr.bf16.mxu0 0
        %3753 = vmatpush2.bf16.msra.mxu0 0
        %3754 = vmatprep.subr.bf16.mxu0 0
        %3755 = vmatpush2.bf16.msra.mxu0 0
        %3756 = vmatprep.mubr.bf16.mxu0 0
        %3757 = vmatmul.mubr.bf16.gmra.mxu0 %v3216
        %v3758 = vpop.f32.mrf.mxu0
        %v3759 = vadd.f32 %v3517, %v3758
        %v3760 = vpop.f32.mrf.mxu0
        %v3761 = vadd.f32 %v3519, %v3760
        %v3762 = vpop.f32.mrf.mxu0
        %v3763 = vpop.f32.mrf.mxu0
        %3764 = vdwg.mxu0
        %v3765 = vadd.f32 %v3718, %v422
        %v3766 = vadd.f32 %v3720, %v426
        %v3767 = vadd.f32 %v3759, %v430
        %v3768 = vadd.f32 %v3761, %v434
        %v3769 = vxor.u32 %v3765, 2147483648
        %v3770 = vmul.f32 %v3769, 1.442695
        %v3771 = vpow.pop %v3770
        %v3772 = vadd.f32 %v3771, 1.0
        %v3773 = vrcp.pop %v3772
        %v3774 = vmul.f32 1.0, %v3773
        %v3775 = vxor.u32 %v3766, 2147483648
        %v3776 = vmul.f32 %v3775, 1.442695
        %v3777 = vpow.pop %v3776
        %v3778 = vadd.f32 %v3777, 1.0
        %v3779 = vrcp.pop %v3778
        %v3780 = vmul.f32 1.0, %v3779
        %v3781 = vmul.f32 %v3774, %v3768
        %v3782 = vadd.f32 %v3767, %v3781
        %v3783 = vtanh.pop %v3782
        %v3784 = vsub.f32 1.0, %v3780
        %v3785 = vmul.f32 %v3784, %v3783
        %v3786 = vmul.f32 %v3780, %v3095
        %v3787 = vadd.f32 %v3785, %v3786
        %v3788 = vpack.c.bf16 %v3787, %v3787
        %v3789 = vld [vmem:[#allocation11] sm:$0xf]
        %v3790 = vld [vmem:[#allocation11 + $0x4] sm:$0xf]
        %v3791 = vld [vmem:[#allocation11 + $0x8] sm:$0xf]
        %v3792 = vld [vmem:[#allocation11 + $0xc] sm:$0xf]
        %v3793 = vld [vmem:[#allocation11 + $0x10] sm:$0xf]
        %v3794 = vld [vmem:[#allocation11 + $0x14] sm:$0xf]
        %v3795 = vld [vmem:[#allocation11 + $0x18] sm:$0xf]
        %v3796 = vld [vmem:[#allocation11 + $0x1c] sm:$0xf]
        %v3797 = vld [vmem:[#allocation11 + $0x20] sm:$0xf]
        %v3798 = vld [vmem:[#allocation11 + $0x24] sm:$0xf]
        %v3799 = vld [vmem:[#allocation11 + $0x28] sm:$0xf]
        %v3800 = vld [vmem:[#allocation11 + $0x2c] sm:$0xf]
        %v3801 = vld [vmem:[#allocation11 + $0x30] sm:$0xf]
        %v3802 = vld [vmem:[#allocation11 + $0x34] sm:$0xf]
        %v3803 = vld [vmem:[#allocation11 + $0x38] sm:$0xf]
        %v3804 = vld [vmem:[#allocation11 + $0x3c] sm:$0xf]
        %v3821 = vunpack.c.l.b16 %v3789
        %v3822 = vunpack.c.l.b16 %v3790
        %v3823 = vunpack.c.l.b16 %v3791
        %v3824 = vunpack.c.l.b16 %v3792
        %v3825 = vunpack.c.l.b16 %v3793
        %v3826 = vunpack.c.l.b16 %v3794
        %v3827 = vunpack.c.l.b16 %v3795
        %v3828 = vunpack.c.l.b16 %v3796
        %v3829 = vunpack.c.l.b16 %v3797
        %v3830 = vunpack.c.l.b16 %v3798
        %v3831 = vunpack.c.l.b16 %v3799
        %v3832 = vunpack.c.l.b16 %v3800
        %v3833 = vunpack.c.l.b16 %v3801
        %v3834 = vunpack.c.l.b16 %v3802
        %v3835 = vunpack.c.l.b16 %v3803
        %v3836 = vunpack.c.l.b16 %v3804
        %v3837 = vpack.c.b16 %v3822, %v3821
        %v3838 = vpack.c.b16 %v3824, %v3823
        %v3839 = vpack.c.b16 %v3826, %v3825
        %v3840 = vpack.c.b16 %v3828, %v3827
        %v3841 = vpack.c.b16 %v3830, %v3829
        %v3842 = vpack.c.b16 %v3832, %v3831
        %v3843 = vpack.c.b16 %v3834, %v3833
        %v3844 = vpack.c.b16 %v3836, %v3835
        %3853 = vmatprep.subr.bf16.mxu0 0
        %3854 = vmatpush1.bf16.msra.mxu0 %v3844
        %3855 = vmatprep.subr.bf16.mxu0 0
        %3856 = vmatpush1.bf16.msra.mxu0 %v3843
        %3857 = vmatprep.subr.bf16.mxu0 0
        %3858 = vmatpush1.bf16.msra.mxu0 %v3842
        %3859 = vmatprep.subr.bf16.mxu0 0
        %3860 = vmatpush1.bf16.msra.mxu0 %v3841
        %3861 = vmatprep.subr.bf16.mxu0 0
        %3862 = vmatpush1.bf16.msra.mxu0 %v3840
        %3863 = vmatprep.subr.bf16.mxu0 0
        %3864 = vmatpush1.bf16.msra.mxu0 %v3839
        %3865 = vmatprep.subr.bf16.mxu0 0
        %3866 = vmatpush1.bf16.msra.mxu0 %v3838
        %3867 = vmatprep.subr.bf16.mxu0 0
        %3868 = vmatpush1.bf16.msra.mxu0 %v3837
        %3869 = vmatprep.subr.bf16.mxu0 0
        %3870 = vmatpush2.bf16.msra.mxu0 0
        %3871 = vmatprep.subr.bf16.mxu0 0
        %3872 = vmatpush2.bf16.msra.mxu0 0
        %3873 = vmatprep.subr.bf16.mxu0 0
        %3874 = vmatpush2.bf16.msra.mxu0 0
        %3875 = vmatprep.subr.bf16.mxu0 0
        %3876 = vmatpush2.bf16.msra.mxu0 0
        %3877 = vmatprep.subr.bf16.mxu0 0
        %3878 = vmatpush2.bf16.msra.mxu0 0
        %3879 = vmatprep.subr.bf16.mxu0 0
        %3880 = vmatpush2.bf16.msra.mxu0 0
        %3881 = vmatprep.subr.bf16.mxu0 0
        %3882 = vmatpush2.bf16.msra.mxu0 0
        %3883 = vmatprep.subr.bf16.mxu0 0
        %3884 = vmatpush2.bf16.msra.mxu0 0
        %3885 = vmatprep.mubr.bf16.mxu0 0
        %3886 = vmatmul.mubr.bf16.gmra.mxu0 %v3788
        %v3887 = vpop.f32.mrf.mxu0
        %v3888 = vadd.f32 %v444, %v3887
        %v3889 = vpop.f32.mrf.mxu0
        %v3890 = vpop.f32.mrf.mxu0
        %v3891 = vpop.f32.mrf.mxu0
        %3892 = vdwg.mxu0
        %3893 = vmax.xlane.f32.xlu0 %v3888
        %v3894 = vpop.xlane.xlu0 %3893
        %v3895 = vsub.f32 %v3888, %v3894
        %v3896 = vmul.f32 %v3895, 1.442695
        %v3897 = vpow.pop %v3896
        %3898 = vadd.xlane.f32.xlu0 %v3897
        %v3899 = vpop.xlane.xlu0 %3898
        %v3900 = vlog2.pop %v3899
        %v3901 = vmul.f32 %v3900, 0.6931472
        %v3902 = vadd.f32 %v3894, %v3901
        %v3903 = vsub.f32 %v3888, %v3902
        %s3904 = scalar_lea.vmem %s405, 32 [#allocation12]
        %3905 = vst [vmem:[%s3904] sm:$0xff] %v3903
        %s3906 = scalar_lea.vmem %s359, 20 [#allocation3]
        %v3907 = vld [vmem:[%s3906] sm:$0xf]
        %v3908 = vmax.bf16 %v3907, 0
        %v3909 = vld [vmem:[#allocation8] sm:$0xff]
        %v3910 = vld [vmem:[#allocation8 + $0x8] sm:$0xff]
        %v3911 = vld [vmem:[#allocation8 + $0x10] sm:$0xff]
        %v3912 = vld [vmem:[#allocation8 + $0x18] sm:$0xff]
        %v3913 = vld [vmem:[#allocation8 + $0x20] sm:$0xff]
        %v3914 = vld [vmem:[#allocation8 + $0x28] sm:$0xff]
        %v3915 = vld [vmem:[#allocation8 + $0x30] sm:$0xff]
        %v3916 = vld [vmem:[#allocation8 + $0x38] sm:$0xff]
        %v3917 = vld [vmem:[#allocation8 + $0x40] sm:$0xff]
        %v3918 = vld [vmem:[#allocation8 + $0x48] sm:$0xff]
        %v3919 = vld [vmem:[#allocation8 + $0x50] sm:$0xff]
        %v3920 = vld [vmem:[#allocation8 + $0x58] sm:$0xff]
        %v3921 = vld [vmem:[#allocation8 + $0x60] sm:$0xff]
        %v3922 = vld [vmem:[#allocation8 + $0x68] sm:$0xff]
        %v3923 = vld [vmem:[#allocation8 + $0x70] sm:$0xff]
        %v3924 = vld [vmem:[#allocation8 + $0x78] sm:$0xff]
        %v3925 = vld [vmem:[#allocation8 + $0x80] sm:$0xff]
        %v3926 = vld [vmem:[#allocation8 + $0x88] sm:$0xff]
        %v3927 = vld [vmem:[#allocation8 + $0x90] sm:$0xff]
        %v3928 = vld [vmem:[#allocation8 + $0x98] sm:$0xff]
        %v3929 = vld [vmem:[#allocation8 + $0xa0] sm:$0xff]
        %v3930 = vld [vmem:[#allocation8 + $0xa8] sm:$0xff]
        %v3931 = vld [vmem:[#allocation8 + $0xb0] sm:$0xff]
        %v3932 = vld [vmem:[#allocation8 + $0xb8] sm:$0xff]
        %v3933 = vld [vmem:[#allocation8 + $0xc0] sm:$0xff]
        %v3934 = vld [vmem:[#allocation8 + $0xc8] sm:$0xff]
        %v3935 = vld [vmem:[#allocation8 + $0xd0] sm:$0xff]
        %v3936 = vld [vmem:[#allocation8 + $0xd8] sm:$0xff]
        %v3937 = vld [vmem:[#allocation8 + $0xe0] sm:$0xff]
        %v3938 = vld [vmem:[#allocation8 + $0xe8] sm:$0xff]
        %v3939 = vld [vmem:[#allocation8 + $0xf0] sm:$0xff]
        %v3940 = vld [vmem:[#allocation8 + $0xf8] sm:$0xff]
        %v3941 = vld [vmem:[#allocation9] sm:$0xff]
        %v3942 = vld [vmem:[#allocation9 + $0x8] sm:$0xff]
        %v3943 = vld [vmem:[#allocation9 + $0x10] sm:$0xff]
        %v3944 = vld [vmem:[#allocation9 + $0x18] sm:$0xff]
        %v3945 = vld [vmem:[#allocation9 + $0x20] sm:$0xff]
        %v3946 = vld [vmem:[#allocation9 + $0x28] sm:$0xff]
        %v3947 = vld [vmem:[#allocation9 + $0x30] sm:$0xff]
        %v3948 = vld [vmem:[#allocation9 + $0x38] sm:$0xff]
        %v3949 = vld [vmem:[#allocation9 + $0x40] sm:$0xff]
        %v3950 = vld [vmem:[#allocation9 + $0x48] sm:$0xff]
        %v3951 = vld [vmem:[#allocation9 + $0x50] sm:$0xff]
        %v3952 = vld [vmem:[#allocation9 + $0x58] sm:$0xff]
        %v3953 = vld [vmem:[#allocation9 + $0x60] sm:$0xff]
        %v3954 = vld [vmem:[#allocation9 + $0x68] sm:$0xff]
        %v3955 = vld [vmem:[#allocation9 + $0x70] sm:$0xff]
        %v3956 = vld [vmem:[#allocation9 + $0x78] sm:$0xff]
        %v3957 = vld [vmem:[#allocation9 + $0x80] sm:$0xff]
        %v3958 = vld [vmem:[#allocation9 + $0x88] sm:$0xff]
        %v3959 = vld [vmem:[#allocation9 + $0x90] sm:$0xff]
        %v3960 = vld [vmem:[#allocation9 + $0x98] sm:$0xff]
        %v3961 = vld [vmem:[#allocation9 + $0xa0] sm:$0xff]
        %v3962 = vld [vmem:[#allocation9 + $0xa8] sm:$0xff]
        %v3963 = vld [vmem:[#allocation9 + $0xb0] sm:$0xff]
        %v3964 = vld [vmem:[#allocation9 + $0xb8] sm:$0xff]
        %v3965 = vld [vmem:[#allocation9 + $0xc0] sm:$0xff]
        %v3966 = vld [vmem:[#allocation9 + $0xc8] sm:$0xff]
        %v3967 = vld [vmem:[#allocation9 + $0xd0] sm:$0xff]
        %v3968 = vld [vmem:[#allocation9 + $0xd8] sm:$0xff]
        %v3969 = vld [vmem:[#allocation9 + $0xe0] sm:$0xff]
        %v3970 = vld [vmem:[#allocation9 + $0xe8] sm:$0xff]
        %v3971 = vld [vmem:[#allocation9 + $0xf0] sm:$0xff]
        %v3972 = vld [vmem:[#allocation9 + $0xf8] sm:$0xff]
        %v4005 = vunpack.c.l.b16 %v3941
        %v4006 = vunpack.c.h.b16 %v3941
        %v4007 = vunpack.c.l.b16 %v3942
        %v4008 = vunpack.c.h.b16 %v3942
        %v4009 = vunpack.c.l.b16 %v3943
        %v4010 = vunpack.c.h.b16 %v3943
        %v4011 = vunpack.c.l.b16 %v3944
        %v4012 = vunpack.c.h.b16 %v3944
        %v4013 = vunpack.c.l.b16 %v3945
        %v4014 = vunpack.c.h.b16 %v3945
        %v4015 = vunpack.c.l.b16 %v3946
        %v4016 = vunpack.c.h.b16 %v3946
        %v4017 = vunpack.c.l.b16 %v3947
        %v4018 = vunpack.c.h.b16 %v3947
        %v4019 = vunpack.c.l.b16 %v3948
        %v4020 = vunpack.c.h.b16 %v3948
        %v4021 = vunpack.c.l.b16 %v3949
        %v4022 = vunpack.c.h.b16 %v3949
        %v4023 = vunpack.c.l.b16 %v3950
        %v4024 = vunpack.c.h.b16 %v3950
        %v4025 = vunpack.c.l.b16 %v3951
        %v4026 = vunpack.c.h.b16 %v3951
        %v4027 = vunpack.c.l.b16 %v3952
        %v4028 = vunpack.c.h.b16 %v3952
        %v4029 = vunpack.c.l.b16 %v3953
        %v4030 = vunpack.c.h.b16 %v3953
        %v4031 = vunpack.c.l.b16 %v3954
        %v4032 = vunpack.c.h.b16 %v3954
        %v4033 = vunpack.c.l.b16 %v3955
        %v4034 = vunpack.c.h.b16 %v3955
        %v4035 = vunpack.c.l.b16 %v3956
        %v4036 = vunpack.c.h.b16 %v3956
        %v4037 = vunpack.c.l.b16 %v3957
        %v4038 = vunpack.c.h.b16 %v3957
        %v4039 = vunpack.c.l.b16 %v3958
        %v4040 = vunpack.c.h.b16 %v3958
        %v4041 = vunpack.c.l.b16 %v3959
        %v4042 = vunpack.c.h.b16 %v3959
        %v4043 = vunpack.c.l.b16 %v3960
        %v4044 = vunpack.c.h.b16 %v3960
        %v4045 = vunpack.c.l.b16 %v3961
        %v4046 = vunpack.c.h.b16 %v3961
        %v4047 = vunpack.c.l.b16 %v3962
        %v4048 = vunpack.c.h.b16 %v3962
        %v4049 = vunpack.c.l.b16 %v3963
        %v4050 = vunpack.c.h.b16 %v3963
        %v4051 = vunpack.c.l.b16 %v3964
        %v4052 = vunpack.c.h.b16 %v3964
        %v4053 = vunpack.c.l.b16 %v3965
        %v4054 = vunpack.c.h.b16 %v3965
        %v4055 = vunpack.c.l.b16 %v3966
        %v4056 = vunpack.c.h.b16 %v3966
        %v4057 = vunpack.c.l.b16 %v3967
        %v4058 = vunpack.c.h.b16 %v3967
        %v4059 = vunpack.c.l.b16 %v3968
        %v4060 = vunpack.c.h.b16 %v3968
        %v4061 = vunpack.c.l.b16 %v3969
        %v4062 = vunpack.c.h.b16 %v3969
        %v4063 = vunpack.c.l.b16 %v3970
        %v4064 = vunpack.c.h.b16 %v3970
        %v4065 = vunpack.c.l.b16 %v3971
        %v4066 = vunpack.c.h.b16 %v3971
        %v4067 = vunpack.c.l.b16 %v3972
        %v4068 = vunpack.c.h.b16 %v3972
        %v4069 = vpack.c.b16 %v4009, %v4005
        %v4070 = vpack.c.b16 %v4010, %v4006
        %v4071 = vpack.c.b16 %v4011, %v4007
        %v4072 = vpack.c.b16 %v4012, %v4008
        %v4073 = vpack.c.b16 %v4017, %v4013
        %v4074 = vpack.c.b16 %v4018, %v4014
        %v4075 = vpack.c.b16 %v4019, %v4015
        %v4076 = vpack.c.b16 %v4020, %v4016
        %v4077 = vpack.c.b16 %v4025, %v4021
        %v4078 = vpack.c.b16 %v4026, %v4022
        %v4079 = vpack.c.b16 %v4027, %v4023
        %v4080 = vpack.c.b16 %v4028, %v4024
        %v4081 = vpack.c.b16 %v4033, %v4029
        %v4082 = vpack.c.b16 %v4034, %v4030
        %v4083 = vpack.c.b16 %v4035, %v4031
        %v4084 = vpack.c.b16 %v4036, %v4032
        %v4085 = vpack.c.b16 %v4041, %v4037
        %v4086 = vpack.c.b16 %v4042, %v4038
        %v4087 = vpack.c.b16 %v4043, %v4039
        %v4088 = vpack.c.b16 %v4044, %v4040
        %v4089 = vpack.c.b16 %v4049, %v4045
        %v4090 = vpack.c.b16 %v4050, %v4046
        %v4091 = vpack.c.b16 %v4051, %v4047
        %v4092 = vpack.c.b16 %v4052, %v4048
        %v4093 = vpack.c.b16 %v4057, %v4053
        %v4094 = vpack.c.b16 %v4058, %v4054
        %v4095 = vpack.c.b16 %v4059, %v4055
        %v4096 = vpack.c.b16 %v4060, %v4056
        %v4097 = vpack.c.b16 %v4065, %v4061
        %v4098 = vpack.c.b16 %v4066, %v4062
        %v4099 = vpack.c.b16 %v4067, %v4063
        %v4100 = vpack.c.b16 %v4068, %v4064
        %4133 = vmatprep.subr.bf16.mxu0 %v4098
        %4134 = vmatpush1.bf16.msra.mxu0 %v4097
        %4135 = vmatprep.subr.bf16.mxu0 %v4094
        %4136 = vmatpush1.bf16.msra.mxu0 %v4093
        %4137 = vmatprep.subr.bf16.mxu0 %v4090
        %4138 = vmatpush1.bf16.msra.mxu0 %v4089
        %4139 = vmatprep.subr.bf16.mxu0 %v4086
        %4140 = vmatpush1.bf16.msra.mxu0 %v4085
        %4141 = vmatprep.subr.bf16.mxu0 %v4082
        %4142 = vmatpush1.bf16.msra.mxu0 %v4081
        %4143 = vmatprep.subr.bf16.mxu0 %v4078
        %4144 = vmatpush1.bf16.msra.mxu0 %v4077
        %4145 = vmatprep.subr.bf16.mxu0 %v4074
        %4146 = vmatpush1.bf16.msra.mxu0 %v4073
        %4147 = vmatprep.subr.bf16.mxu0 %v4070
        %4148 = vmatpush1.bf16.msra.mxu0 %v4069
        %4149 = vmatprep.subr.bf16.mxu0 0
        %4150 = vmatpush2.bf16.msra.mxu0 0
        %4151 = vmatprep.subr.bf16.mxu0 0
        %4152 = vmatpush2.bf16.msra.mxu0 0
        %4153 = vmatprep.subr.bf16.mxu0 0
        %4154 = vmatpush2.bf16.msra.mxu0 0
        %4155 = vmatprep.subr.bf16.mxu0 0
        %4156 = vmatpush2.bf16.msra.mxu0 0
        %4157 = vmatprep.subr.bf16.mxu0 0
        %4158 = vmatpush2.bf16.msra.mxu0 0
        %4159 = vmatprep.subr.bf16.mxu0 0
        %4160 = vmatpush2.bf16.msra.mxu0 0
        %4161 = vmatprep.subr.bf16.mxu0 0
        %4162 = vmatpush2.bf16.msra.mxu0 0
        %4163 = vmatprep.subr.bf16.mxu0 0
        %4164 = vmatpush2.bf16.msra.mxu0 0
        %4165 = vmatprep.mubr.bf16.mxu0 0
        %4166 = vmatmul.mubr.bf16.gmra.mxu0 %v3788
        %v4167 = vpop.f32.mrf.mxu0
        %v4168 = vadd.f32 0.0, %v4167
        %v4169 = vpop.f32.mrf.mxu0
        %v4170 = vadd.f32 0.0, %v4169
        %v4171 = vpop.f32.mrf.mxu0
        %v4172 = vpop.f32.mrf.mxu0
        %4173 = vdwg.mxu0
        %4174 = vmatprep.subr.bf16.mxu0 %v4100
        %4175 = vmatpush1.bf16.msra.mxu0 %v4099
        %4176 = vmatprep.subr.bf16.mxu0 %v4096
        %4177 = vmatpush1.bf16.msra.mxu0 %v4095
        %4178 = vmatprep.subr.bf16.mxu0 %v4092
        %4179 = vmatpush1.bf16.msra.mxu0 %v4091
        %4180 = vmatprep.subr.bf16.mxu0 %v4088
        %4181 = vmatpush1.bf16.msra.mxu0 %v4087
        %4182 = vmatprep.subr.bf16.mxu0 %v4084
        %4183 = vmatpush1.bf16.msra.mxu0 %v4083
        %4184 = vmatprep.subr.bf16.mxu0 %v4080
        %4185 = vmatpush1.bf16.msra.mxu0 %v4079
        %4186 = vmatprep.subr.bf16.mxu0 %v4076
        %4187 = vmatpush1.bf16.msra.mxu0 %v4075
        %4188 = vmatprep.subr.bf16.mxu0 %v4072
        %4189 = vmatpush1.bf16.msra.mxu0 %v4071
        %4190 = vmatprep.subr.bf16.mxu0 0
        %4191 = vmatpush2.bf16.msra.mxu0 0
        %4192 = vmatprep.subr.bf16.mxu0 0
        %4193 = vmatpush2.bf16.msra.mxu0 0
        %4194 = vmatprep.subr.bf16.mxu0 0
        %4195 = vmatpush2.bf16.msra.mxu0 0
        %4196 = vmatprep.subr.bf16.mxu0 0
        %4197 = vmatpush2.bf16.msra.mxu0 0
        %4198 = vmatprep.subr.bf16.mxu0 0
        %4199 = vmatpush2.bf16.msra.mxu0 0
        %4200 = vmatprep.subr.bf16.mxu0 0
        %4201 = vmatpush2.bf16.msra.mxu0 0
        %4202 = vmatprep.subr.bf16.mxu0 0
        %4203 = vmatpush2.bf16.msra.mxu0 0
        %4204 = vmatprep.subr.bf16.mxu0 0
        %4205 = vmatpush2.bf16.msra.mxu0 0
        %4206 = vmatprep.mubr.bf16.mxu0 0
        %4207 = vmatmul.mubr.bf16.gmra.mxu0 %v3788
        %v4208 = vpop.f32.mrf.mxu0
        %v4209 = vadd.f32 0.0, %v4208
        %v4210 = vpop.f32.mrf.mxu0
        %v4211 = vadd.f32 0.0, %v4210
        %v4212 = vpop.f32.mrf.mxu0
        %v4213 = vpop.f32.mrf.mxu0
        %4214 = vdwg.mxu0
        %v4247 = vunpack.c.l.b16 %v3909
        %v4248 = vunpack.c.h.b16 %v3909
        %v4249 = vunpack.c.l.b16 %v3910
        %v4250 = vunpack.c.h.b16 %v3910
        %v4251 = vunpack.c.l.b16 %v3911
        %v4252 = vunpack.c.h.b16 %v3911
        %v4253 = vunpack.c.l.b16 %v3912
        %v4254 = vunpack.c.h.b16 %v3912
        %v4255 = vunpack.c.l.b16 %v3913
        %v4256 = vunpack.c.h.b16 %v3913
        %v4257 = vunpack.c.l.b16 %v3914
        %v4258 = vunpack.c.h.b16 %v3914
        %v4259 = vunpack.c.l.b16 %v3915
        %v4260 = vunpack.c.h.b16 %v3915
        %v4261 = vunpack.c.l.b16 %v3916
        %v4262 = vunpack.c.h.b16 %v3916
        %v4263 = vunpack.c.l.b16 %v3917
        %v4264 = vunpack.c.h.b16 %v3917
        %v4265 = vunpack.c.l.b16 %v3918
        %v4266 = vunpack.c.h.b16 %v3918
        %v4267 = vunpack.c.l.b16 %v3919
        %v4268 = vunpack.c.h.b16 %v3919
        %v4269 = vunpack.c.l.b16 %v3920
        %v4270 = vunpack.c.h.b16 %v3920
        %v4271 = vunpack.c.l.b16 %v3921
        %v4272 = vunpack.c.h.b16 %v3921
        %v4273 = vunpack.c.l.b16 %v3922
        %v4274 = vunpack.c.h.b16 %v3922
        %v4275 = vunpack.c.l.b16 %v3923
        %v4276 = vunpack.c.h.b16 %v3923
        %v4277 = vunpack.c.l.b16 %v3924
        %v4278 = vunpack.c.h.b16 %v3924
        %v4279 = vunpack.c.l.b16 %v3925
        %v4280 = vunpack.c.h.b16 %v3925
        %v4281 = vunpack.c.l.b16 %v3926
        %v4282 = vunpack.c.h.b16 %v3926
        %v4283 = vunpack.c.l.b16 %v3927
        %v4284 = vunpack.c.h.b16 %v3927
        %v4285 = vunpack.c.l.b16 %v3928
        %v4286 = vunpack.c.h.b16 %v3928
        %v4287 = vunpack.c.l.b16 %v3929
        %v4288 = vunpack.c.h.b16 %v3929
        %v4289 = vunpack.c.l.b16 %v3930
        %v4290 = vunpack.c.h.b16 %v3930
        %v4291 = vunpack.c.l.b16 %v3931
        %v4292 = vunpack.c.h.b16 %v3931
        %v4293 = vunpack.c.l.b16 %v3932
        %v4294 = vunpack.c.h.b16 %v3932
        %v4295 = vunpack.c.l.b16 %v3933
        %v4296 = vunpack.c.h.b16 %v3933
        %v4297 = vunpack.c.l.b16 %v3934
        %v4298 = vunpack.c.h.b16 %v3934
        %v4299 = vunpack.c.l.b16 %v3935
        %v4300 = vunpack.c.h.b16 %v3935
        %v4301 = vunpack.c.l.b16 %v3936
        %v4302 = vunpack.c.h.b16 %v3936
        %v4303 = vunpack.c.l.b16 %v3937
        %v4304 = vunpack.c.h.b16 %v3937
        %v4305 = vunpack.c.l.b16 %v3938
        %v4306 = vunpack.c.h.b16 %v3938
        %v4307 = vunpack.c.l.b16 %v3939
        %v4308 = vunpack.c.h.b16 %v3939
        %v4309 = vunpack.c.l.b16 %v3940
        %v4310 = vunpack.c.h.b16 %v3940
        %v4311 = vpack.c.b16 %v4251, %v4247
        %v4312 = vpack.c.b16 %v4252, %v4248
        %v4313 = vpack.c.b16 %v4253, %v4249
        %v4314 = vpack.c.b16 %v4254, %v4250
        %v4315 = vpack.c.b16 %v4259, %v4255
        %v4316 = vpack.c.b16 %v4260, %v4256
        %v4317 = vpack.c.b16 %v4261, %v4257
        %v4318 = vpack.c.b16 %v4262, %v4258
        %v4319 = vpack.c.b16 %v4267, %v4263
        %v4320 = vpack.c.b16 %v4268, %v4264
        %v4321 = vpack.c.b16 %v4269, %v4265
        %v4322 = vpack.c.b16 %v4270, %v4266
        %v4323 = vpack.c.b16 %v4275, %v4271
        %v4324 = vpack.c.b16 %v4276, %v4272
        %v4325 = vpack.c.b16 %v4277, %v4273
        %v4326 = vpack.c.b16 %v4278, %v4274
        %v4327 = vpack.c.b16 %v4283, %v4279
        %v4328 = vpack.c.b16 %v4284, %v4280
        %v4329 = vpack.c.b16 %v4285, %v4281
        %v4330 = vpack.c.b16 %v4286, %v4282
        %v4331 = vpack.c.b16 %v4291, %v4287
        %v4332 = vpack.c.b16 %v4292, %v4288
        %v4333 = vpack.c.b16 %v4293, %v4289
        %v4334 = vpack.c.b16 %v4294, %v4290
        %v4335 = vpack.c.b16 %v4299, %v4295
        %v4336 = vpack.c.b16 %v4300, %v4296
        %v4337 = vpack.c.b16 %v4301, %v4297
        %v4338 = vpack.c.b16 %v4302, %v4298
        %v4339 = vpack.c.b16 %v4307, %v4303
        %v4340 = vpack.c.b16 %v4308, %v4304
        %v4341 = vpack.c.b16 %v4309, %v4305
        %v4342 = vpack.c.b16 %v4310, %v4306
        %4375 = vmatprep.subr.bf16.mxu0 %v4340
        %4376 = vmatpush1.bf16.msra.mxu0 %v4339
        %4377 = vmatprep.subr.bf16.mxu0 %v4336
        %4378 = vmatpush1.bf16.msra.mxu0 %v4335
        %4379 = vmatprep.subr.bf16.mxu0 %v4332
        %4380 = vmatpush1.bf16.msra.mxu0 %v4331
        %4381 = vmatprep.subr.bf16.mxu0 %v4328
        %4382 = vmatpush1.bf16.msra.mxu0 %v4327
        %4383 = vmatprep.subr.bf16.mxu0 %v4324
        %4384 = vmatpush1.bf16.msra.mxu0 %v4323
        %4385 = vmatprep.subr.bf16.mxu0 %v4320
        %4386 = vmatpush1.bf16.msra.mxu0 %v4319
        %4387 = vmatprep.subr.bf16.mxu0 %v4316
        %4388 = vmatpush1.bf16.msra.mxu0 %v4315
        %4389 = vmatprep.subr.bf16.mxu0 %v4312
        %4390 = vmatpush1.bf16.msra.mxu0 %v4311
        %4391 = vmatprep.subr.bf16.mxu0 0
        %4392 = vmatpush2.bf16.msra.mxu0 0
        %4393 = vmatprep.subr.bf16.mxu0 0
        %4394 = vmatpush2.bf16.msra.mxu0 0
        %4395 = vmatprep.subr.bf16.mxu0 0
        %4396 = vmatpush2.bf16.msra.mxu0 0
        %4397 = vmatprep.subr.bf16.mxu0 0
        %4398 = vmatpush2.bf16.msra.mxu0 0
        %4399 = vmatprep.subr.bf16.mxu0 0
        %4400 = vmatpush2.bf16.msra.mxu0 0
        %4401 = vmatprep.subr.bf16.mxu0 0
        %4402 = vmatpush2.bf16.msra.mxu0 0
        %4403 = vmatprep.subr.bf16.mxu0 0
        %4404 = vmatpush2.bf16.msra.mxu0 0
        %4405 = vmatprep.subr.bf16.mxu0 0
        %4406 = vmatpush2.bf16.msra.mxu0 0
        %4407 = vmatprep.mubr.bf16.mxu0 0
        %4408 = vmatmul.mubr.bf16.gmra.mxu0 %v3908
        %v4409 = vpop.f32.mrf.mxu0
        %v4410 = vadd.f32 %v4168, %v4409
        %v4411 = vpop.f32.mrf.mxu0
        %v4412 = vadd.f32 %v4170, %v4411
        %v4413 = vpop.f32.mrf.mxu0
        %v4414 = vpop.f32.mrf.mxu0
        %4415 = vdwg.mxu0
        %4416 = vmatprep.subr.bf16.mxu0 %v4342
        %4417 = vmatpush1.bf16.msra.mxu0 %v4341
        %4418 = vmatprep.subr.bf16.mxu0 %v4338
        %4419 = vmatpush1.bf16.msra.mxu0 %v4337
        %4420 = vmatprep.subr.bf16.mxu0 %v4334
        %4421 = vmatpush1.bf16.msra.mxu0 %v4333
        %4422 = vmatprep.subr.bf16.mxu0 %v4330
        %4423 = vmatpush1.bf16.msra.mxu0 %v4329
        %4424 = vmatprep.subr.bf16.mxu0 %v4326
        %4425 = vmatpush1.bf16.msra.mxu0 %v4325
        %4426 = vmatprep.subr.bf16.mxu0 %v4322
        %4427 = vmatpush1.bf16.msra.mxu0 %v4321
        %4428 = vmatprep.subr.bf16.mxu0 %v4318
        %4429 = vmatpush1.bf16.msra.mxu0 %v4317
        %4430 = vmatprep.subr.bf16.mxu0 %v4314
        %4431 = vmatpush1.bf16.msra.mxu0 %v4313
        %4432 = vmatprep.subr.bf16.mxu0 0
        %4433 = vmatpush2.bf16.msra.mxu0 0
        %4434 = vmatprep.subr.bf16.mxu0 0
        %4435 = vmatpush2.bf16.msra.mxu0 0
        %4436 = vmatprep.subr.bf16.mxu0 0
        %4437 = vmatpush2.bf16.msra.mxu0 0
        %4438 = vmatprep.subr.bf16.mxu0 0
        %4439 = vmatpush2.bf16.msra.mxu0 0
        %4440 = vmatprep.subr.bf16.mxu0 0
        %4441 = vmatpush2.bf16.msra.mxu0 0
        %4442 = vmatprep.subr.bf16.mxu0 0
        %4443 = vmatpush2.bf16.msra.mxu0 0
        %4444 = vmatprep.subr.bf16.mxu0 0
        %4445 = vmatpush2.bf16.msra.mxu0 0
        %4446 = vmatprep.subr.bf16.mxu0 0
        %4447 = vmatpush2.bf16.msra.mxu0 0
        %4448 = vmatprep.mubr.bf16.mxu0 0
        %4449 = vmatmul.mubr.bf16.gmra.mxu0 %v3908
        %v4450 = vpop.f32.mrf.mxu0
        %v4451 = vadd.f32 %v4209, %v4450
        %v4452 = vpop.f32.mrf.mxu0
        %v4453 = vadd.f32 %v4211, %v4452
        %v4454 = vpop.f32.mrf.mxu0
        %v4455 = vpop.f32.mrf.mxu0
        %4456 = vdwg.mxu0
        %v4457 = vadd.f32 %v4410, %v422
        %v4458 = vadd.f32 %v4412, %v426
        %v4459 = vadd.f32 %v4451, %v430
        %v4460 = vadd.f32 %v4453, %v434
        %v4461 = vxor.u32 %v4457, 2147483648
        %v4462 = vmul.f32 %v4461, 1.442695
        %v4463 = vpow.pop %v4462
        %v4464 = vadd.f32 %v4463, 1.0
        %v4465 = vrcp.pop %v4464
        %v4466 = vmul.f32 1.0, %v4465
        %v4467 = vxor.u32 %v4458, 2147483648
        %v4468 = vmul.f32 %v4467, 1.442695
        %v4469 = vpow.pop %v4468
        %v4470 = vadd.f32 %v4469, 1.0
        %v4471 = vrcp.pop %v4470
        %v4472 = vmul.f32 1.0, %v4471
        %v4473 = vmul.f32 %v4466, %v4460
        %v4474 = vadd.f32 %v4459, %v4473
        %v4475 = vtanh.pop %v4474
        %v4476 = vsub.f32 1.0, %v4472
        %v4477 = vmul.f32 %v4476, %v4475
        %v4478 = vmul.f32 %v4472, %v3787
        %v4479 = vadd.f32 %v4477, %v4478
        %v4480 = vpack.c.bf16 %v4479, %v4479
        %v4481 = vld [vmem:[#allocation11] sm:$0xf]
        %v4482 = vld [vmem:[#allocation11 + $0x4] sm:$0xf]
        %v4483 = vld [vmem:[#allocation11 + $0x8] sm:$0xf]
        %v4484 = vld [vmem:[#allocation11 + $0xc] sm:$0xf]
        %v4485 = vld [vmem:[#allocation11 + $0x10] sm:$0xf]
        %v4486 = vld [vmem:[#allocation11 + $0x14] sm:$0xf]
        %v4487 = vld [vmem:[#allocation11 + $0x18] sm:$0xf]
        %v4488 = vld [vmem:[#allocation11 + $0x1c] sm:$0xf]
        %v4489 = vld [vmem:[#allocation11 + $0x20] sm:$0xf]
        %v4490 = vld [vmem:[#allocation11 + $0x24] sm:$0xf]
        %v4491 = vld [vmem:[#allocation11 + $0x28] sm:$0xf]
        %v4492 = vld [vmem:[#allocation11 + $0x2c] sm:$0xf]
        %v4493 = vld [vmem:[#allocation11 + $0x30] sm:$0xf]
        %v4494 = vld [vmem:[#allocation11 + $0x34] sm:$0xf]
        %v4495 = vld [vmem:[#allocation11 + $0x38] sm:$0xf]
        %v4496 = vld [vmem:[#allocation11 + $0x3c] sm:$0xf]
        %v4513 = vunpack.c.l.b16 %v4481
        %v4514 = vunpack.c.l.b16 %v4482
        %v4515 = vunpack.c.l.b16 %v4483
        %v4516 = vunpack.c.l.b16 %v4484
        %v4517 = vunpack.c.l.b16 %v4485
        %v4518 = vunpack.c.l.b16 %v4486
        %v4519 = vunpack.c.l.b16 %v4487
        %v4520 = vunpack.c.l.b16 %v4488
        %v4521 = vunpack.c.l.b16 %v4489
        %v4522 = vunpack.c.l.b16 %v4490
        %v4523 = vunpack.c.l.b16 %v4491
        %v4524 = vunpack.c.l.b16 %v4492
        %v4525 = vunpack.c.l.b16 %v4493
        %v4526 = vunpack.c.l.b16 %v4494
        %v4527 = vunpack.c.l.b16 %v4495
        %v4528 = vunpack.c.l.b16 %v4496
        %v4529 = vpack.c.b16 %v4514, %v4513
        %v4530 = vpack.c.b16 %v4516, %v4515
        %v4531 = vpack.c.b16 %v4518, %v4517
        %v4532 = vpack.c.b16 %v4520, %v4519
        %v4533 = vpack.c.b16 %v4522, %v4521
        %v4534 = vpack.c.b16 %v4524, %v4523
        %v4535 = vpack.c.b16 %v4526, %v4525
        %v4536 = vpack.c.b16 %v4528, %v4527
        %4545 = vmatprep.subr.bf16.mxu0 0
        %4546 = vmatpush1.bf16.msra.mxu0 %v4536
        %4547 = vmatprep.subr.bf16.mxu0 0
        %4548 = vmatpush1.bf16.msra.mxu0 %v4535
        %4549 = vmatprep.subr.bf16.mxu0 0
        %4550 = vmatpush1.bf16.msra.mxu0 %v4534
        %4551 = vmatprep.subr.bf16.mxu0 0
        %4552 = vmatpush1.bf16.msra.mxu0 %v4533
        %4553 = vmatprep.subr.bf16.mxu0 0
        %4554 = vmatpush1.bf16.msra.mxu0 %v4532
        %4555 = vmatprep.subr.bf16.mxu0 0
        %4556 = vmatpush1.bf16.msra.mxu0 %v4531
        %4557 = vmatprep.subr.bf16.mxu0 0
        %4558 = vmatpush1.bf16.msra.mxu0 %v4530
        %4559 = vmatprep.subr.bf16.mxu0 0
        %4560 = vmatpush1.bf16.msra.mxu0 %v4529
        %4561 = vmatprep.subr.bf16.mxu0 0
        %4562 = vmatpush2.bf16.msra.mxu0 0
        %4563 = vmatprep.subr.bf16.mxu0 0
        %4564 = vmatpush2.bf16.msra.mxu0 0
        %4565 = vmatprep.subr.bf16.mxu0 0
        %4566 = vmatpush2.bf16.msra.mxu0 0
        %4567 = vmatprep.subr.bf16.mxu0 0
        %4568 = vmatpush2.bf16.msra.mxu0 0
        %4569 = vmatprep.subr.bf16.mxu0 0
        %4570 = vmatpush2.bf16.msra.mxu0 0
        %4571 = vmatprep.subr.bf16.mxu0 0
        %4572 = vmatpush2.bf16.msra.mxu0 0
        %4573 = vmatprep.subr.bf16.mxu0 0
        %4574 = vmatpush2.bf16.msra.mxu0 0
        %4575 = vmatprep.subr.bf16.mxu0 0
        %4576 = vmatpush2.bf16.msra.mxu0 0
        %4577 = vmatprep.mubr.bf16.mxu0 0
        %4578 = vmatmul.mubr.bf16.gmra.mxu0 %v4480
        %v4579 = vpop.f32.mrf.mxu0
        %v4580 = vadd.f32 %v444, %v4579
        %v4581 = vpop.f32.mrf.mxu0
        %v4582 = vpop.f32.mrf.mxu0
        %v4583 = vpop.f32.mrf.mxu0
        %4584 = vdwg.mxu0
        %4585 = vmax.xlane.f32.xlu0 %v4580
        %v4586 = vpop.xlane.xlu0 %4585
        %v4587 = vsub.f32 %v4580, %v4586
        %v4588 = vmul.f32 %v4587, 1.442695
        %v4589 = vpow.pop %v4588
        %4590 = vadd.xlane.f32.xlu0 %v4589
        %v4591 = vpop.xlane.xlu0 %4590
        %v4592 = vlog2.pop %v4591
        %v4593 = vmul.f32 %v4592, 0.6931472
        %v4594 = vadd.f32 %v4586, %v4593
        %v4595 = vsub.f32 %v4580, %v4594
        %s4596 = scalar_lea.vmem %s405, 40 [#allocation12]
        %4597 = vst [vmem:[%s4596] sm:$0xff] %v4595
        %s4598 = scalar_lea.vmem %s359, 24 [#allocation3]
        %v4599 = vld [vmem:[%s4598] sm:$0xf]
        %v4600 = vmax.bf16 %v4599, 0
        %v4601 = vld [vmem:[#allocation8] sm:$0xff]
        %v4602 = vld [vmem:[#allocation8 + $0x8] sm:$0xff]
        %v4603 = vld [vmem:[#allocation8 + $0x10] sm:$0xff]
        %v4604 = vld [vmem:[#allocation8 + $0x18] sm:$0xff]
        %v4605 = vld [vmem:[#allocation8 + $0x20] sm:$0xff]
        %v4606 = vld [vmem:[#allocation8 + $0x28] sm:$0xff]
        %v4607 = vld [vmem:[#allocation8 + $0x30] sm:$0xff]
        %v4608 = vld [vmem:[#allocation8 + $0x38] sm:$0xff]
        %v4609 = vld [vmem:[#allocation8 + $0x40] sm:$0xff]
        %v4610 = vld [vmem:[#allocation8 + $0x48] sm:$0xff]
        %v4611 = vld [vmem:[#allocation8 + $0x50] sm:$0xff]
        %v4612 = vld [vmem:[#allocation8 + $0x58] sm:$0xff]
        %v4613 = vld [vmem:[#allocation8 + $0x60] sm:$0xff]
        %v4614 = vld [vmem:[#allocation8 + $0x68] sm:$0xff]
        %v4615 = vld [vmem:[#allocation8 + $0x70] sm:$0xff]
        %v4616 = vld [vmem:[#allocation8 + $0x78] sm:$0xff]
        %v4617 = vld [vmem:[#allocation8 + $0x80] sm:$0xff]
        %v4618 = vld [vmem:[#allocation8 + $0x88] sm:$0xff]
        %v4619 = vld [vmem:[#allocation8 + $0x90] sm:$0xff]
        %v4620 = vld [vmem:[#allocation8 + $0x98] sm:$0xff]
        %v4621 = vld [vmem:[#allocation8 + $0xa0] sm:$0xff]
        %v4622 = vld [vmem:[#allocation8 + $0xa8] sm:$0xff]
        %v4623 = vld [vmem:[#allocation8 + $0xb0] sm:$0xff]
        %v4624 = vld [vmem:[#allocation8 + $0xb8] sm:$0xff]
        %v4625 = vld [vmem:[#allocation8 + $0xc0] sm:$0xff]
        %v4626 = vld [vmem:[#allocation8 + $0xc8] sm:$0xff]
        %v4627 = vld [vmem:[#allocation8 + $0xd0] sm:$0xff]
        %v4628 = vld [vmem:[#allocation8 + $0xd8] sm:$0xff]
        %v4629 = vld [vmem:[#allocation8 + $0xe0] sm:$0xff]
        %v4630 = vld [vmem:[#allocation8 + $0xe8] sm:$0xff]
        %v4631 = vld [vmem:[#allocation8 + $0xf0] sm:$0xff]
        %v4632 = vld [vmem:[#allocation8 + $0xf8] sm:$0xff]
        %v4633 = vld [vmem:[#allocation9] sm:$0xff]
        %v4634 = vld [vmem:[#allocation9 + $0x8] sm:$0xff]
        %v4635 = vld [vmem:[#allocation9 + $0x10] sm:$0xff]
        %v4636 = vld [vmem:[#allocation9 + $0x18] sm:$0xff]
        %v4637 = vld [vmem:[#allocation9 + $0x20] sm:$0xff]
        %v4638 = vld [vmem:[#allocation9 + $0x28] sm:$0xff]
        %v4639 = vld [vmem:[#allocation9 + $0x30] sm:$0xff]
        %v4640 = vld [vmem:[#allocation9 + $0x38] sm:$0xff]
        %v4641 = vld [vmem:[#allocation9 + $0x40] sm:$0xff]
        %v4642 = vld [vmem:[#allocation9 + $0x48] sm:$0xff]
        %v4643 = vld [vmem:[#allocation9 + $0x50] sm:$0xff]
        %v4644 = vld [vmem:[#allocation9 + $0x58] sm:$0xff]
        %v4645 = vld [vmem:[#allocation9 + $0x60] sm:$0xff]
        %v4646 = vld [vmem:[#allocation9 + $0x68] sm:$0xff]
        %v4647 = vld [vmem:[#allocation9 + $0x70] sm:$0xff]
        %v4648 = vld [vmem:[#allocation9 + $0x78] sm:$0xff]
        %v4649 = vld [vmem:[#allocation9 + $0x80] sm:$0xff]
        %v4650 = vld [vmem:[#allocation9 + $0x88] sm:$0xff]
        %v4651 = vld [vmem:[#allocation9 + $0x90] sm:$0xff]
        %v4652 = vld [vmem:[#allocation9 + $0x98] sm:$0xff]
        %v4653 = vld [vmem:[#allocation9 + $0xa0] sm:$0xff]
        %v4654 = vld [vmem:[#allocation9 + $0xa8] sm:$0xff]
        %v4655 = vld [vmem:[#allocation9 + $0xb0] sm:$0xff]
        %v4656 = vld [vmem:[#allocation9 + $0xb8] sm:$0xff]
        %v4657 = vld [vmem:[#allocation9 + $0xc0] sm:$0xff]
        %v4658 = vld [vmem:[#allocation9 + $0xc8] sm:$0xff]
        %v4659 = vld [vmem:[#allocation9 + $0xd0] sm:$0xff]
        %v4660 = vld [vmem:[#allocation9 + $0xd8] sm:$0xff]
        %v4661 = vld [vmem:[#allocation9 + $0xe0] sm:$0xff]
        %v4662 = vld [vmem:[#allocation9 + $0xe8] sm:$0xff]
        %v4663 = vld [vmem:[#allocation9 + $0xf0] sm:$0xff]
        %v4664 = vld [vmem:[#allocation9 + $0xf8] sm:$0xff]
        %v4697 = vunpack.c.l.b16 %v4633
        %v4698 = vunpack.c.h.b16 %v4633
        %v4699 = vunpack.c.l.b16 %v4634
        %v4700 = vunpack.c.h.b16 %v4634
        %v4701 = vunpack.c.l.b16 %v4635
        %v4702 = vunpack.c.h.b16 %v4635
        %v4703 = vunpack.c.l.b16 %v4636
        %v4704 = vunpack.c.h.b16 %v4636
        %v4705 = vunpack.c.l.b16 %v4637
        %v4706 = vunpack.c.h.b16 %v4637
        %v4707 = vunpack.c.l.b16 %v4638
        %v4708 = vunpack.c.h.b16 %v4638
        %v4709 = vunpack.c.l.b16 %v4639
        %v4710 = vunpack.c.h.b16 %v4639
        %v4711 = vunpack.c.l.b16 %v4640
        %v4712 = vunpack.c.h.b16 %v4640
        %v4713 = vunpack.c.l.b16 %v4641
        %v4714 = vunpack.c.h.b16 %v4641
        %v4715 = vunpack.c.l.b16 %v4642
        %v4716 = vunpack.c.h.b16 %v4642
        %v4717 = vunpack.c.l.b16 %v4643
        %v4718 = vunpack.c.h.b16 %v4643
        %v4719 = vunpack.c.l.b16 %v4644
        %v4720 = vunpack.c.h.b16 %v4644
        %v4721 = vunpack.c.l.b16 %v4645
        %v4722 = vunpack.c.h.b16 %v4645
        %v4723 = vunpack.c.l.b16 %v4646
        %v4724 = vunpack.c.h.b16 %v4646
        %v4725 = vunpack.c.l.b16 %v4647
        %v4726 = vunpack.c.h.b16 %v4647
        %v4727 = vunpack.c.l.b16 %v4648
        %v4728 = vunpack.c.h.b16 %v4648
        %v4729 = vunpack.c.l.b16 %v4649
        %v4730 = vunpack.c.h.b16 %v4649
        %v4731 = vunpack.c.l.b16 %v4650
        %v4732 = vunpack.c.h.b16 %v4650
        %v4733 = vunpack.c.l.b16 %v4651
        %v4734 = vunpack.c.h.b16 %v4651
        %v4735 = vunpack.c.l.b16 %v4652
        %v4736 = vunpack.c.h.b16 %v4652
        %v4737 = vunpack.c.l.b16 %v4653
        %v4738 = vunpack.c.h.b16 %v4653
        %v4739 = vunpack.c.l.b16 %v4654
        %v4740 = vunpack.c.h.b16 %v4654
        %v4741 = vunpack.c.l.b16 %v4655
        %v4742 = vunpack.c.h.b16 %v4655
        %v4743 = vunpack.c.l.b16 %v4656
        %v4744 = vunpack.c.h.b16 %v4656
        %v4745 = vunpack.c.l.b16 %v4657
        %v4746 = vunpack.c.h.b16 %v4657
        %v4747 = vunpack.c.l.b16 %v4658
        %v4748 = vunpack.c.h.b16 %v4658
        %v4749 = vunpack.c.l.b16 %v4659
        %v4750 = vunpack.c.h.b16 %v4659
        %v4751 = vunpack.c.l.b16 %v4660
        %v4752 = vunpack.c.h.b16 %v4660
        %v4753 = vunpack.c.l.b16 %v4661
        %v4754 = vunpack.c.h.b16 %v4661
        %v4755 = vunpack.c.l.b16 %v4662
        %v4756 = vunpack.c.h.b16 %v4662
        %v4757 = vunpack.c.l.b16 %v4663
        %v4758 = vunpack.c.h.b16 %v4663
        %v4759 = vunpack.c.l.b16 %v4664
        %v4760 = vunpack.c.h.b16 %v4664
        %v4761 = vpack.c.b16 %v4701, %v4697
        %v4762 = vpack.c.b16 %v4702, %v4698
        %v4763 = vpack.c.b16 %v4703, %v4699
        %v4764 = vpack.c.b16 %v4704, %v4700
        %v4765 = vpack.c.b16 %v4709, %v4705
        %v4766 = vpack.c.b16 %v4710, %v4706
        %v4767 = vpack.c.b16 %v4711, %v4707
        %v4768 = vpack.c.b16 %v4712, %v4708
        %v4769 = vpack.c.b16 %v4717, %v4713
        %v4770 = vpack.c.b16 %v4718, %v4714
        %v4771 = vpack.c.b16 %v4719, %v4715
        %v4772 = vpack.c.b16 %v4720, %v4716
        %v4773 = vpack.c.b16 %v4725, %v4721
        %v4774 = vpack.c.b16 %v4726, %v4722
        %v4775 = vpack.c.b16 %v4727, %v4723
        %v4776 = vpack.c.b16 %v4728, %v4724
        %v4777 = vpack.c.b16 %v4733, %v4729
        %v4778 = vpack.c.b16 %v4734, %v4730
        %v4779 = vpack.c.b16 %v4735, %v4731
        %v4780 = vpack.c.b16 %v4736, %v4732
        %v4781 = vpack.c.b16 %v4741, %v4737
        %v4782 = vpack.c.b16 %v4742, %v4738
        %v4783 = vpack.c.b16 %v4743, %v4739
        %v4784 = vpack.c.b16 %v4744, %v4740
        %v4785 = vpack.c.b16 %v4749, %v4745
        %v4786 = vpack.c.b16 %v4750, %v4746
        %v4787 = vpack.c.b16 %v4751, %v4747
        %v4788 = vpack.c.b16 %v4752, %v4748
        %v4789 = vpack.c.b16 %v4757, %v4753
        %v4790 = vpack.c.b16 %v4758, %v4754
        %v4791 = vpack.c.b16 %v4759, %v4755
        %v4792 = vpack.c.b16 %v4760, %v4756
        %4825 = vmatprep.subr.bf16.mxu0 %v4790
        %4826 = vmatpush1.bf16.msra.mxu0 %v4789
        %4827 = vmatprep.subr.bf16.mxu0 %v4786
        %4828 = vmatpush1.bf16.msra.mxu0 %v4785
        %4829 = vmatprep.subr.bf16.mxu0 %v4782
        %4830 = vmatpush1.bf16.msra.mxu0 %v4781
        %4831 = vmatprep.subr.bf16.mxu0 %v4778
        %4832 = vmatpush1.bf16.msra.mxu0 %v4777
        %4833 = vmatprep.subr.bf16.mxu0 %v4774
        %4834 = vmatpush1.bf16.msra.mxu0 %v4773
        %4835 = vmatprep.subr.bf16.mxu0 %v4770
        %4836 = vmatpush1.bf16.msra.mxu0 %v4769
        %4837 = vmatprep.subr.bf16.mxu0 %v4766
        %4838 = vmatpush1.bf16.msra.mxu0 %v4765
        %4839 = vmatprep.subr.bf16.mxu0 %v4762
        %4840 = vmatpush1.bf16.msra.mxu0 %v4761
        %4841 = vmatprep.subr.bf16.mxu0 0
        %4842 = vmatpush2.bf16.msra.mxu0 0
        %4843 = vmatprep.subr.bf16.mxu0 0
        %4844 = vmatpush2.bf16.msra.mxu0 0
        %4845 = vmatprep.subr.bf16.mxu0 0
        %4846 = vmatpush2.bf16.msra.mxu0 0
        %4847 = vmatprep.subr.bf16.mxu0 0
        %4848 = vmatpush2.bf16.msra.mxu0 0
        %4849 = vmatprep.subr.bf16.mxu0 0
        %4850 = vmatpush2.bf16.msra.mxu0 0
        %4851 = vmatprep.subr.bf16.mxu0 0
        %4852 = vmatpush2.bf16.msra.mxu0 0
        %4853 = vmatprep.subr.bf16.mxu0 0
        %4854 = vmatpush2.bf16.msra.mxu0 0
        %4855 = vmatprep.subr.bf16.mxu0 0
        %4856 = vmatpush2.bf16.msra.mxu0 0
        %4857 = vmatprep.mubr.bf16.mxu0 0
        %4858 = vmatmul.mubr.bf16.gmra.mxu0 %v4480
        %v4859 = vpop.f32.mrf.mxu0
        %v4860 = vadd.f32 0.0, %v4859
        %v4861 = vpop.f32.mrf.mxu0
        %v4862 = vadd.f32 0.0, %v4861
        %v4863 = vpop.f32.mrf.mxu0
        %v4864 = vpop.f32.mrf.mxu0
        %4865 = vdwg.mxu0
        %4866 = vmatprep.subr.bf16.mxu0 %v4792
        %4867 = vmatpush1.bf16.msra.mxu0 %v4791
        %4868 = vmatprep.subr.bf16.mxu0 %v4788
        %4869 = vmatpush1.bf16.msra.mxu0 %v4787
        %4870 = vmatprep.subr.bf16.mxu0 %v4784
        %4871 = vmatpush1.bf16.msra.mxu0 %v4783
        %4872 = vmatprep.subr.bf16.mxu0 %v4780
        %4873 = vmatpush1.bf16.msra.mxu0 %v4779
        %4874 = vmatprep.subr.bf16.mxu0 %v4776
        %4875 = vmatpush1.bf16.msra.mxu0 %v4775
        %4876 = vmatprep.subr.bf16.mxu0 %v4772
        %4877 = vmatpush1.bf16.msra.mxu0 %v4771
        %4878 = vmatprep.subr.bf16.mxu0 %v4768
        %4879 = vmatpush1.bf16.msra.mxu0 %v4767
        %4880 = vmatprep.subr.bf16.mxu0 %v4764
        %4881 = vmatpush1.bf16.msra.mxu0 %v4763
        %4882 = vmatprep.subr.bf16.mxu0 0
        %4883 = vmatpush2.bf16.msra.mxu0 0
        %4884 = vmatprep.subr.bf16.mxu0 0
        %4885 = vmatpush2.bf16.msra.mxu0 0
        %4886 = vmatprep.subr.bf16.mxu0 0
        %4887 = vmatpush2.bf16.msra.mxu0 0
        %4888 = vmatprep.subr.bf16.mxu0 0
        %4889 = vmatpush2.bf16.msra.mxu0 0
        %4890 = vmatprep.subr.bf16.mxu0 0
        %4891 = vmatpush2.bf16.msra.mxu0 0
        %4892 = vmatprep.subr.bf16.mxu0 0
        %4893 = vmatpush2.bf16.msra.mxu0 0
        %4894 = vmatprep.subr.bf16.mxu0 0
        %4895 = vmatpush2.bf16.msra.mxu0 0
        %4896 = vmatprep.subr.bf16.mxu0 0
        %4897 = vmatpush2.bf16.msra.mxu0 0
        %4898 = vmatprep.mubr.bf16.mxu0 0
        %4899 = vmatmul.mubr.bf16.gmra.mxu0 %v4480
        %v4900 = vpop.f32.mrf.mxu0
        %v4901 = vadd.f32 0.0, %v4900
        %v4902 = vpop.f32.mrf.mxu0
        %v4903 = vadd.f32 0.0, %v4902
        %v4904 = vpop.f32.mrf.mxu0
        %v4905 = vpop.f32.mrf.mxu0
        %4906 = vdwg.mxu0
        %v4939 = vunpack.c.l.b16 %v4601
        %v4940 = vunpack.c.h.b16 %v4601
        %v4941 = vunpack.c.l.b16 %v4602
        %v4942 = vunpack.c.h.b16 %v4602
        %v4943 = vunpack.c.l.b16 %v4603
        %v4944 = vunpack.c.h.b16 %v4603
        %v4945 = vunpack.c.l.b16 %v4604
        %v4946 = vunpack.c.h.b16 %v4604
        %v4947 = vunpack.c.l.b16 %v4605
        %v4948 = vunpack.c.h.b16 %v4605
        %v4949 = vunpack.c.l.b16 %v4606
        %v4950 = vunpack.c.h.b16 %v4606
        %v4951 = vunpack.c.l.b16 %v4607
        %v4952 = vunpack.c.h.b16 %v4607
        %v4953 = vunpack.c.l.b16 %v4608
        %v4954 = vunpack.c.h.b16 %v4608
        %v4955 = vunpack.c.l.b16 %v4609
        %v4956 = vunpack.c.h.b16 %v4609
        %v4957 = vunpack.c.l.b16 %v4610
        %v4958 = vunpack.c.h.b16 %v4610
        %v4959 = vunpack.c.l.b16 %v4611
        %v4960 = vunpack.c.h.b16 %v4611
        %v4961 = vunpack.c.l.b16 %v4612
        %v4962 = vunpack.c.h.b16 %v4612
        %v4963 = vunpack.c.l.b16 %v4613
        %v4964 = vunpack.c.h.b16 %v4613
        %v4965 = vunpack.c.l.b16 %v4614
        %v4966 = vunpack.c.h.b16 %v4614
        %v4967 = vunpack.c.l.b16 %v4615
        %v4968 = vunpack.c.h.b16 %v4615
        %v4969 = vunpack.c.l.b16 %v4616
        %v4970 = vunpack.c.h.b16 %v4616
        %v4971 = vunpack.c.l.b16 %v4617
        %v4972 = vunpack.c.h.b16 %v4617
        %v4973 = vunpack.c.l.b16 %v4618
        %v4974 = vunpack.c.h.b16 %v4618
        %v4975 = vunpack.c.l.b16 %v4619
        %v4976 = vunpack.c.h.b16 %v4619
        %v4977 = vunpack.c.l.b16 %v4620
        %v4978 = vunpack.c.h.b16 %v4620
        %v4979 = vunpack.c.l.b16 %v4621
        %v4980 = vunpack.c.h.b16 %v4621
        %v4981 = vunpack.c.l.b16 %v4622
        %v4982 = vunpack.c.h.b16 %v4622
        %v4983 = vunpack.c.l.b16 %v4623
        %v4984 = vunpack.c.h.b16 %v4623
        %v4985 = vunpack.c.l.b16 %v4624
        %v4986 = vunpack.c.h.b16 %v4624
        %v4987 = vunpack.c.l.b16 %v4625
        %v4988 = vunpack.c.h.b16 %v4625
        %v4989 = vunpack.c.l.b16 %v4626
        %v4990 = vunpack.c.h.b16 %v4626
        %v4991 = vunpack.c.l.b16 %v4627
        %v4992 = vunpack.c.h.b16 %v4627
        %v4993 = vunpack.c.l.b16 %v4628
        %v4994 = vunpack.c.h.b16 %v4628
        %v4995 = vunpack.c.l.b16 %v4629
        %v4996 = vunpack.c.h.b16 %v4629
        %v4997 = vunpack.c.l.b16 %v4630
        %v4998 = vunpack.c.h.b16 %v4630
        %v4999 = vunpack.c.l.b16 %v4631
        %v5000 = vunpack.c.h.b16 %v4631
        %v5001 = vunpack.c.l.b16 %v4632
        %v5002 = vunpack.c.h.b16 %v4632
        %v5003 = vpack.c.b16 %v4943, %v4939
        %v5004 = vpack.c.b16 %v4944, %v4940
        %v5005 = vpack.c.b16 %v4945, %v4941
        %v5006 = vpack.c.b16 %v4946, %v4942
        %v5007 = vpack.c.b16 %v4951, %v4947
        %v5008 = vpack.c.b16 %v4952, %v4948
        %v5009 = vpack.c.b16 %v4953, %v4949
        %v5010 = vpack.c.b16 %v4954, %v4950
        %v5011 = vpack.c.b16 %v4959, %v4955
        %v5012 = vpack.c.b16 %v4960, %v4956
        %v5013 = vpack.c.b16 %v4961, %v4957
        %v5014 = vpack.c.b16 %v4962, %v4958
        %v5015 = vpack.c.b16 %v4967, %v4963
        %v5016 = vpack.c.b16 %v4968, %v4964
        %v5017 = vpack.c.b16 %v4969, %v4965
        %v5018 = vpack.c.b16 %v4970, %v4966
        %v5019 = vpack.c.b16 %v4975, %v4971
        %v5020 = vpack.c.b16 %v4976, %v4972
        %v5021 = vpack.c.b16 %v4977, %v4973
        %v5022 = vpack.c.b16 %v4978, %v4974
        %v5023 = vpack.c.b16 %v4983, %v4979
        %v5024 = vpack.c.b16 %v4984, %v4980
        %v5025 = vpack.c.b16 %v4985, %v4981
        %v5026 = vpack.c.b16 %v4986, %v4982
        %v5027 = vpack.c.b16 %v4991, %v4987
        %v5028 = vpack.c.b16 %v4992, %v4988
        %v5029 = vpack.c.b16 %v4993, %v4989
        %v5030 = vpack.c.b16 %v4994, %v4990
        %v5031 = vpack.c.b16 %v4999, %v4995
        %v5032 = vpack.c.b16 %v5000, %v4996
        %v5033 = vpack.c.b16 %v5001, %v4997
        %v5034 = vpack.c.b16 %v5002, %v4998
        %5067 = vmatprep.subr.bf16.mxu0 %v5032
        %5068 = vmatpush1.bf16.msra.mxu0 %v5031
        %5069 = vmatprep.subr.bf16.mxu0 %v5028
        %5070 = vmatpush1.bf16.msra.mxu0 %v5027
        %5071 = vmatprep.subr.bf16.mxu0 %v5024
        %5072 = vmatpush1.bf16.msra.mxu0 %v5023
        %5073 = vmatprep.subr.bf16.mxu0 %v5020
        %5074 = vmatpush1.bf16.msra.mxu0 %v5019
        %5075 = vmatprep.subr.bf16.mxu0 %v5016
        %5076 = vmatpush1.bf16.msra.mxu0 %v5015
        %5077 = vmatprep.subr.bf16.mxu0 %v5012
        %5078 = vmatpush1.bf16.msra.mxu0 %v5011
        %5079 = vmatprep.subr.bf16.mxu0 %v5008
        %5080 = vmatpush1.bf16.msra.mxu0 %v5007
        %5081 = vmatprep.subr.bf16.mxu0 %v5004
        %5082 = vmatpush1.bf16.msra.mxu0 %v5003
        %5083 = vmatprep.subr.bf16.mxu0 0
        %5084 = vmatpush2.bf16.msra.mxu0 0
        %5085 = vmatprep.subr.bf16.mxu0 0
        %5086 = vmatpush2.bf16.msra.mxu0 0
        %5087 = vmatprep.subr.bf16.mxu0 0
        %5088 = vmatpush2.bf16.msra.mxu0 0
        %5089 = vmatprep.subr.bf16.mxu0 0
        %5090 = vmatpush2.bf16.msra.mxu0 0
        %5091 = vmatprep.subr.bf16.mxu0 0
        %5092 = vmatpush2.bf16.msra.mxu0 0
        %5093 = vmatprep.subr.bf16.mxu0 0
        %5094 = vmatpush2.bf16.msra.mxu0 0
        %5095 = vmatprep.subr.bf16.mxu0 0
        %5096 = vmatpush2.bf16.msra.mxu0 0
        %5097 = vmatprep.subr.bf16.mxu0 0
        %5098 = vmatpush2.bf16.msra.mxu0 0
        %5099 = vmatprep.mubr.bf16.mxu0 0
        %5100 = vmatmul.mubr.bf16.gmra.mxu0 %v4600
        %v5101 = vpop.f32.mrf.mxu0
        %v5102 = vadd.f32 %v4860, %v5101
        %v5103 = vpop.f32.mrf.mxu0
        %v5104 = vadd.f32 %v4862, %v5103
        %v5105 = vpop.f32.mrf.mxu0
        %v5106 = vpop.f32.mrf.mxu0
        %5107 = vdwg.mxu0
        %5108 = vmatprep.subr.bf16.mxu0 %v5034
        %5109 = vmatpush1.bf16.msra.mxu0 %v5033
        %5110 = vmatprep.subr.bf16.mxu0 %v5030
        %5111 = vmatpush1.bf16.msra.mxu0 %v5029
        %5112 = vmatprep.subr.bf16.mxu0 %v5026
        %5113 = vmatpush1.bf16.msra.mxu0 %v5025
        %5114 = vmatprep.subr.bf16.mxu0 %v5022
        %5115 = vmatpush1.bf16.msra.mxu0 %v5021
        %5116 = vmatprep.subr.bf16.mxu0 %v5018
        %5117 = vmatpush1.bf16.msra.mxu0 %v5017
        %5118 = vmatprep.subr.bf16.mxu0 %v5014
        %5119 = vmatpush1.bf16.msra.mxu0 %v5013
        %5120 = vmatprep.subr.bf16.mxu0 %v5010
        %5121 = vmatpush1.bf16.msra.mxu0 %v5009
        %5122 = vmatprep.subr.bf16.mxu0 %v5006
        %5123 = vmatpush1.bf16.msra.mxu0 %v5005
        %5124 = vmatprep.subr.bf16.mxu0 0
        %5125 = vmatpush2.bf16.msra.mxu0 0
        %5126 = vmatprep.subr.bf16.mxu0 0
        %5127 = vmatpush2.bf16.msra.mxu0 0
        %5128 = vmatprep.subr.bf16.mxu0 0
        %5129 = vmatpush2.bf16.msra.mxu0 0
        %5130 = vmatprep.subr.bf16.mxu0 0
        %5131 = vmatpush2.bf16.msra.mxu0 0
        %5132 = vmatprep.subr.bf16.mxu0 0
        %5133 = vmatpush2.bf16.msra.mxu0 0
        %5134 = vmatprep.subr.bf16.mxu0 0
        %5135 = vmatpush2.bf16.msra.mxu0 0
        %5136 = vmatprep.subr.bf16.mxu0 0
        %5137 = vmatpush2.bf16.msra.mxu0 0
        %5138 = vmatprep.subr.bf16.mxu0 0
        %5139 = vmatpush2.bf16.msra.mxu0 0
        %5140 = vmatprep.mubr.bf16.mxu0 0
        %5141 = vmatmul.mubr.bf16.gmra.mxu0 %v4600
        %v5142 = vpop.f32.mrf.mxu0
        %v5143 = vadd.f32 %v4901, %v5142
        %v5144 = vpop.f32.mrf.mxu0
        %v5145 = vadd.f32 %v4903, %v5144
        %v5146 = vpop.f32.mrf.mxu0
        %v5147 = vpop.f32.mrf.mxu0
        %5148 = vdwg.mxu0
        %v5149 = vadd.f32 %v5102, %v422
        %v5150 = vadd.f32 %v5104, %v426
        %v5151 = vadd.f32 %v5143, %v430
        %v5152 = vadd.f32 %v5145, %v434
        %v5153 = vxor.u32 %v5149, 2147483648
        %v5154 = vmul.f32 %v5153, 1.442695
        %v5155 = vpow.pop %v5154
        %v5156 = vadd.f32 %v5155, 1.0
        %v5157 = vrcp.pop %v5156
        %v5158 = vmul.f32 1.0, %v5157
        %v5159 = vxor.u32 %v5150, 2147483648
        %v5160 = vmul.f32 %v5159, 1.442695
        %v5161 = vpow.pop %v5160
        %v5162 = vadd.f32 %v5161, 1.0
        %v5163 = vrcp.pop %v5162
        %v5164 = vmul.f32 1.0, %v5163
        %v5165 = vmul.f32 %v5158, %v5152
        %v5166 = vadd.f32 %v5151, %v5165
        %v5167 = vtanh.pop %v5166
        %v5168 = vsub.f32 1.0, %v5164
        %v5169 = vmul.f32 %v5168, %v5167
        %v5170 = vmul.f32 %v5164, %v4479
        %v5171 = vadd.f32 %v5169, %v5170
        %v5172 = vpack.c.bf16 %v5171, %v5171
        %v5173 = vld [vmem:[#allocation11] sm:$0xf]
        %v5174 = vld [vmem:[#allocation11 + $0x4] sm:$0xf]
        %v5175 = vld [vmem:[#allocation11 + $0x8] sm:$0xf]
        %v5176 = vld [vmem:[#allocation11 + $0xc] sm:$0xf]
        %v5177 = vld [vmem:[#allocation11 + $0x10] sm:$0xf]
        %v5178 = vld [vmem:[#allocation11 + $0x14] sm:$0xf]
        %v5179 = vld [vmem:[#allocation11 + $0x18] sm:$0xf]
        %v5180 = vld [vmem:[#allocation11 + $0x1c] sm:$0xf]
        %v5181 = vld [vmem:[#allocation11 + $0x20] sm:$0xf]
        %v5182 = vld [vmem:[#allocation11 + $0x24] sm:$0xf]
        %v5183 = vld [vmem:[#allocation11 + $0x28] sm:$0xf]
        %v5184 = vld [vmem:[#allocation11 + $0x2c] sm:$0xf]
        %v5185 = vld [vmem:[#allocation11 + $0x30] sm:$0xf]
        %v5186 = vld [vmem:[#allocation11 + $0x34] sm:$0xf]
        %v5187 = vld [vmem:[#allocation11 + $0x38] sm:$0xf]
        %v5188 = vld [vmem:[#allocation11 + $0x3c] sm:$0xf]
        %v5205 = vunpack.c.l.b16 %v5173
        %v5206 = vunpack.c.l.b16 %v5174
        %v5207 = vunpack.c.l.b16 %v5175
        %v5208 = vunpack.c.l.b16 %v5176
        %v5209 = vunpack.c.l.b16 %v5177
        %v5210 = vunpack.c.l.b16 %v5178
        %v5211 = vunpack.c.l.b16 %v5179
        %v5212 = vunpack.c.l.b16 %v5180
        %v5213 = vunpack.c.l.b16 %v5181
        %v5214 = vunpack.c.l.b16 %v5182
        %v5215 = vunpack.c.l.b16 %v5183
        %v5216 = vunpack.c.l.b16 %v5184
        %v5217 = vunpack.c.l.b16 %v5185
        %v5218 = vunpack.c.l.b16 %v5186
        %v5219 = vunpack.c.l.b16 %v5187
        %v5220 = vunpack.c.l.b16 %v5188
        %v5221 = vpack.c.b16 %v5206, %v5205
        %v5222 = vpack.c.b16 %v5208, %v5207
        %v5223 = vpack.c.b16 %v5210, %v5209
        %v5224 = vpack.c.b16 %v5212, %v5211
        %v5225 = vpack.c.b16 %v5214, %v5213
        %v5226 = vpack.c.b16 %v5216, %v5215
        %v5227 = vpack.c.b16 %v5218, %v5217
        %v5228 = vpack.c.b16 %v5220, %v5219
        %5237 = vmatprep.subr.bf16.mxu0 0
        %5238 = vmatpush1.bf16.msra.mxu0 %v5228
        %5239 = vmatprep.subr.bf16.mxu0 0
        %5240 = vmatpush1.bf16.msra.mxu0 %v5227
        %5241 = vmatprep.subr.bf16.mxu0 0
        %5242 = vmatpush1.bf16.msra.mxu0 %v5226
        %5243 = vmatprep.subr.bf16.mxu0 0
        %5244 = vmatpush1.bf16.msra.mxu0 %v5225
        %5245 = vmatprep.subr.bf16.mxu0 0
        %5246 = vmatpush1.bf16.msra.mxu0 %v5224
        %5247 = vmatprep.subr.bf16.mxu0 0
        %5248 = vmatpush1.bf16.msra.mxu0 %v5223
        %5249 = vmatprep.subr.bf16.mxu0 0
        %5250 = vmatpush1.bf16.msra.mxu0 %v5222
        %5251 = vmatprep.subr.bf16.mxu0 0
        %5252 = vmatpush1.bf16.msra.mxu0 %v5221
        %5253 = vmatprep.subr.bf16.mxu0 0
        %5254 = vmatpush2.bf16.msra.mxu0 0
        %5255 = vmatprep.subr.bf16.mxu0 0
        %5256 = vmatpush2.bf16.msra.mxu0 0
        %5257 = vmatprep.subr.bf16.mxu0 0
        %5258 = vmatpush2.bf16.msra.mxu0 0
        %5259 = vmatprep.subr.bf16.mxu0 0
        %5260 = vmatpush2.bf16.msra.mxu0 0
        %5261 = vmatprep.subr.bf16.mxu0 0
        %5262 = vmatpush2.bf16.msra.mxu0 0
        %5263 = vmatprep.subr.bf16.mxu0 0
        %5264 = vmatpush2.bf16.msra.mxu0 0
        %5265 = vmatprep.subr.bf16.mxu0 0
        %5266 = vmatpush2.bf16.msra.mxu0 0
        %5267 = vmatprep.subr.bf16.mxu0 0
        %5268 = vmatpush2.bf16.msra.mxu0 0
        %5269 = vmatprep.mubr.bf16.mxu0 0
        %5270 = vmatmul.mubr.bf16.gmra.mxu0 %v5172
        %v5271 = vpop.f32.mrf.mxu0
        %v5272 = vadd.f32 %v444, %v5271
        %v5273 = vpop.f32.mrf.mxu0
        %v5274 = vpop.f32.mrf.mxu0
        %v5275 = vpop.f32.mrf.mxu0
        %5276 = vdwg.mxu0
        %5277 = vmax.xlane.f32.xlu0 %v5272
        %v5278 = vpop.xlane.xlu0 %5277
        %v5279 = vsub.f32 %v5272, %v5278
        %v5280 = vmul.f32 %v5279, 1.442695
        %v5281 = vpow.pop %v5280
        %5282 = vadd.xlane.f32.xlu0 %v5281
        %v5283 = vpop.xlane.xlu0 %5282
        %v5284 = vlog2.pop %v5283
        %v5285 = vmul.f32 %v5284, 0.6931472
        %v5286 = vadd.f32 %v5278, %v5285
        %v5287 = vsub.f32 %v5272, %v5286
        %s5288 = scalar_lea.vmem %s405, 48 [#allocation12]
        %5289 = vst [vmem:[%s5288] sm:$0xff] %v5287
        %s5290 = scalar_lea.vmem %s359, 28 [#allocation3]
        %v5291 = vld [vmem:[%s5290] sm:$0xf]
        %v5292 = vmax.bf16 %v5291, 0
        %v5293 = vld [vmem:[#allocation8] sm:$0xff]
        %v5294 = vld [vmem:[#allocation8 + $0x8] sm:$0xff]
        %v5295 = vld [vmem:[#allocation8 + $0x10] sm:$0xff]
        %v5296 = vld [vmem:[#allocation8 + $0x18] sm:$0xff]
        %v5297 = vld [vmem:[#allocation8 + $0x20] sm:$0xff]
        %v5298 = vld [vmem:[#allocation8 + $0x28] sm:$0xff]
        %v5299 = vld [vmem:[#allocation8 + $0x30] sm:$0xff]
        %v5300 = vld [vmem:[#allocation8 + $0x38] sm:$0xff]
        %v5301 = vld [vmem:[#allocation8 + $0x40] sm:$0xff]
        %v5302 = vld [vmem:[#allocation8 + $0x48] sm:$0xff]
        %v5303 = vld [vmem:[#allocation8 + $0x50] sm:$0xff]
        %v5304 = vld [vmem:[#allocation8 + $0x58] sm:$0xff]
        %v5305 = vld [vmem:[#allocation8 + $0x60] sm:$0xff]
        %v5306 = vld [vmem:[#allocation8 + $0x68] sm:$0xff]
        %v5307 = vld [vmem:[#allocation8 + $0x70] sm:$0xff]
        %v5308 = vld [vmem:[#allocation8 + $0x78] sm:$0xff]
        %v5309 = vld [vmem:[#allocation8 + $0x80] sm:$0xff]
        %v5310 = vld [vmem:[#allocation8 + $0x88] sm:$0xff]
        %v5311 = vld [vmem:[#allocation8 + $0x90] sm:$0xff]
        %v5312 = vld [vmem:[#allocation8 + $0x98] sm:$0xff]
        %v5313 = vld [vmem:[#allocation8 + $0xa0] sm:$0xff]
        %v5314 = vld [vmem:[#allocation8 + $0xa8] sm:$0xff]
        %v5315 = vld [vmem:[#allocation8 + $0xb0] sm:$0xff]
        %v5316 = vld [vmem:[#allocation8 + $0xb8] sm:$0xff]
        %v5317 = vld [vmem:[#allocation8 + $0xc0] sm:$0xff]
        %v5318 = vld [vmem:[#allocation8 + $0xc8] sm:$0xff]
        %v5319 = vld [vmem:[#allocation8 + $0xd0] sm:$0xff]
        %v5320 = vld [vmem:[#allocation8 + $0xd8] sm:$0xff]
        %v5321 = vld [vmem:[#allocation8 + $0xe0] sm:$0xff]
        %v5322 = vld [vmem:[#allocation8 + $0xe8] sm:$0xff]
        %v5323 = vld [vmem:[#allocation8 + $0xf0] sm:$0xff]
        %v5324 = vld [vmem:[#allocation8 + $0xf8] sm:$0xff]
        %v5325 = vld [vmem:[#allocation9] sm:$0xff]
        %v5326 = vld [vmem:[#allocation9 + $0x8] sm:$0xff]
        %v5327 = vld [vmem:[#allocation9 + $0x10] sm:$0xff]
        %v5328 = vld [vmem:[#allocation9 + $0x18] sm:$0xff]
        %v5329 = vld [vmem:[#allocation9 + $0x20] sm:$0xff]
        %v5330 = vld [vmem:[#allocation9 + $0x28] sm:$0xff]
        %v5331 = vld [vmem:[#allocation9 + $0x30] sm:$0xff]
        %v5332 = vld [vmem:[#allocation9 + $0x38] sm:$0xff]
        %v5333 = vld [vmem:[#allocation9 + $0x40] sm:$0xff]
        %v5334 = vld [vmem:[#allocation9 + $0x48] sm:$0xff]
        %v5335 = vld [vmem:[#allocation9 + $0x50] sm:$0xff]
        %v5336 = vld [vmem:[#allocation9 + $0x58] sm:$0xff]
        %v5337 = vld [vmem:[#allocation9 + $0x60] sm:$0xff]
        %v5338 = vld [vmem:[#allocation9 + $0x68] sm:$0xff]
        %v5339 = vld [vmem:[#allocation9 + $0x70] sm:$0xff]
        %v5340 = vld [vmem:[#allocation9 + $0x78] sm:$0xff]
        %v5341 = vld [vmem:[#allocation9 + $0x80] sm:$0xff]
        %v5342 = vld [vmem:[#allocation9 + $0x88] sm:$0xff]
        %v5343 = vld [vmem:[#allocation9 + $0x90] sm:$0xff]
        %v5344 = vld [vmem:[#allocation9 + $0x98] sm:$0xff]
        %v5345 = vld [vmem:[#allocation9 + $0xa0] sm:$0xff]
        %v5346 = vld [vmem:[#allocation9 + $0xa8] sm:$0xff]
        %v5347 = vld [vmem:[#allocation9 + $0xb0] sm:$0xff]
        %v5348 = vld [vmem:[#allocation9 + $0xb8] sm:$0xff]
        %v5349 = vld [vmem:[#allocation9 + $0xc0] sm:$0xff]
        %v5350 = vld [vmem:[#allocation9 + $0xc8] sm:$0xff]
        %v5351 = vld [vmem:[#allocation9 + $0xd0] sm:$0xff]
        %v5352 = vld [vmem:[#allocation9 + $0xd8] sm:$0xff]
        %v5353 = vld [vmem:[#allocation9 + $0xe0] sm:$0xff]
        %v5354 = vld [vmem:[#allocation9 + $0xe8] sm:$0xff]
        %v5355 = vld [vmem:[#allocation9 + $0xf0] sm:$0xff]
        %v5356 = vld [vmem:[#allocation9 + $0xf8] sm:$0xff]
        %v5389 = vunpack.c.l.b16 %v5325
        %v5390 = vunpack.c.h.b16 %v5325
        %v5391 = vunpack.c.l.b16 %v5326
        %v5392 = vunpack.c.h.b16 %v5326
        %v5393 = vunpack.c.l.b16 %v5327
        %v5394 = vunpack.c.h.b16 %v5327
        %v5395 = vunpack.c.l.b16 %v5328
        %v5396 = vunpack.c.h.b16 %v5328
        %v5397 = vunpack.c.l.b16 %v5329
        %v5398 = vunpack.c.h.b16 %v5329
        %v5399 = vunpack.c.l.b16 %v5330
        %v5400 = vunpack.c.h.b16 %v5330
        %v5401 = vunpack.c.l.b16 %v5331
        %v5402 = vunpack.c.h.b16 %v5331
        %v5403 = vunpack.c.l.b16 %v5332
        %v5404 = vunpack.c.h.b16 %v5332
        %v5405 = vunpack.c.l.b16 %v5333
        %v5406 = vunpack.c.h.b16 %v5333
        %v5407 = vunpack.c.l.b16 %v5334
        %v5408 = vunpack.c.h.b16 %v5334
        %v5409 = vunpack.c.l.b16 %v5335
        %v5410 = vunpack.c.h.b16 %v5335
        %v5411 = vunpack.c.l.b16 %v5336
        %v5412 = vunpack.c.h.b16 %v5336
        %v5413 = vunpack.c.l.b16 %v5337
        %v5414 = vunpack.c.h.b16 %v5337
        %v5415 = vunpack.c.l.b16 %v5338
        %v5416 = vunpack.c.h.b16 %v5338
        %v5417 = vunpack.c.l.b16 %v5339
        %v5418 = vunpack.c.h.b16 %v5339
        %v5419 = vunpack.c.l.b16 %v5340
        %v5420 = vunpack.c.h.b16 %v5340
        %v5421 = vunpack.c.l.b16 %v5341
        %v5422 = vunpack.c.h.b16 %v5341
        %v5423 = vunpack.c.l.b16 %v5342
        %v5424 = vunpack.c.h.b16 %v5342
        %v5425 = vunpack.c.l.b16 %v5343
        %v5426 = vunpack.c.h.b16 %v5343
        %v5427 = vunpack.c.l.b16 %v5344
        %v5428 = vunpack.c.h.b16 %v5344
        %v5429 = vunpack.c.l.b16 %v5345
        %v5430 = vunpack.c.h.b16 %v5345
        %v5431 = vunpack.c.l.b16 %v5346
        %v5432 = vunpack.c.h.b16 %v5346
        %v5433 = vunpack.c.l.b16 %v5347
        %v5434 = vunpack.c.h.b16 %v5347
        %v5435 = vunpack.c.l.b16 %v5348
        %v5436 = vunpack.c.h.b16 %v5348
        %v5437 = vunpack.c.l.b16 %v5349
        %v5438 = vunpack.c.h.b16 %v5349
        %v5439 = vunpack.c.l.b16 %v5350
        %v5440 = vunpack.c.h.b16 %v5350
        %v5441 = vunpack.c.l.b16 %v5351
        %v5442 = vunpack.c.h.b16 %v5351
        %v5443 = vunpack.c.l.b16 %v5352
        %v5444 = vunpack.c.h.b16 %v5352
        %v5445 = vunpack.c.l.b16 %v5353
        %v5446 = vunpack.c.h.b16 %v5353
        %v5447 = vunpack.c.l.b16 %v5354
        %v5448 = vunpack.c.h.b16 %v5354
        %v5449 = vunpack.c.l.b16 %v5355
        %v5450 = vunpack.c.h.b16 %v5355
        %v5451 = vunpack.c.l.b16 %v5356
        %v5452 = vunpack.c.h.b16 %v5356
        %v5453 = vpack.c.b16 %v5393, %v5389
        %v5454 = vpack.c.b16 %v5394, %v5390
        %v5455 = vpack.c.b16 %v5395, %v5391
        %v5456 = vpack.c.b16 %v5396, %v5392
        %v5457 = vpack.c.b16 %v5401, %v5397
        %v5458 = vpack.c.b16 %v5402, %v5398
        %v5459 = vpack.c.b16 %v5403, %v5399
        %v5460 = vpack.c.b16 %v5404, %v5400
        %v5461 = vpack.c.b16 %v5409, %v5405
        %v5462 = vpack.c.b16 %v5410, %v5406
        %v5463 = vpack.c.b16 %v5411, %v5407
        %v5464 = vpack.c.b16 %v5412, %v5408
        %v5465 = vpack.c.b16 %v5417, %v5413
        %v5466 = vpack.c.b16 %v5418, %v5414
        %v5467 = vpack.c.b16 %v5419, %v5415
        %v5468 = vpack.c.b16 %v5420, %v5416
        %v5469 = vpack.c.b16 %v5425, %v5421
        %v5470 = vpack.c.b16 %v5426, %v5422
        %v5471 = vpack.c.b16 %v5427, %v5423
        %v5472 = vpack.c.b16 %v5428, %v5424
        %v5473 = vpack.c.b16 %v5433, %v5429
        %v5474 = vpack.c.b16 %v5434, %v5430
        %v5475 = vpack.c.b16 %v5435, %v5431
        %v5476 = vpack.c.b16 %v5436, %v5432
        %v5477 = vpack.c.b16 %v5441, %v5437
        %v5478 = vpack.c.b16 %v5442, %v5438
        %v5479 = vpack.c.b16 %v5443, %v5439
        %v5480 = vpack.c.b16 %v5444, %v5440
        %v5481 = vpack.c.b16 %v5449, %v5445
        %v5482 = vpack.c.b16 %v5450, %v5446
        %v5483 = vpack.c.b16 %v5451, %v5447
        %v5484 = vpack.c.b16 %v5452, %v5448
        %5517 = vmatprep.subr.bf16.mxu0 %v5482
        %5518 = vmatpush1.bf16.msra.mxu0 %v5481
        %5519 = vmatprep.subr.bf16.mxu0 %v5478
        %5520 = vmatpush1.bf16.msra.mxu0 %v5477
        %5521 = vmatprep.subr.bf16.mxu0 %v5474
        %5522 = vmatpush1.bf16.msra.mxu0 %v5473
        %5523 = vmatprep.subr.bf16.mxu0 %v5470
        %5524 = vmatpush1.bf16.msra.mxu0 %v5469
        %5525 = vmatprep.subr.bf16.mxu0 %v5466
        %5526 = vmatpush1.bf16.msra.mxu0 %v5465
        %5527 = vmatprep.subr.bf16.mxu0 %v5462
        %5528 = vmatpush1.bf16.msra.mxu0 %v5461
        %5529 = vmatprep.subr.bf16.mxu0 %v5458
        %5530 = vmatpush1.bf16.msra.mxu0 %v5457
        %5531 = vmatprep.subr.bf16.mxu0 %v5454
        %5532 = vmatpush1.bf16.msra.mxu0 %v5453
        %5533 = vmatprep.subr.bf16.mxu0 0
        %5534 = vmatpush2.bf16.msra.mxu0 0
        %5535 = vmatprep.subr.bf16.mxu0 0
        %5536 = vmatpush2.bf16.msra.mxu0 0
        %5537 = vmatprep.subr.bf16.mxu0 0
        %5538 = vmatpush2.bf16.msra.mxu0 0
        %5539 = vmatprep.subr.bf16.mxu0 0
        %5540 = vmatpush2.bf16.msra.mxu0 0
        %5541 = vmatprep.subr.bf16.mxu0 0
        %5542 = vmatpush2.bf16.msra.mxu0 0
        %5543 = vmatprep.subr.bf16.mxu0 0
        %5544 = vmatpush2.bf16.msra.mxu0 0
        %5545 = vmatprep.subr.bf16.mxu0 0
        %5546 = vmatpush2.bf16.msra.mxu0 0
        %5547 = vmatprep.subr.bf16.mxu0 0
        %5548 = vmatpush2.bf16.msra.mxu0 0
        %5549 = vmatprep.mubr.bf16.mxu0 0
        %5550 = vmatmul.mubr.bf16.gmra.mxu0 %v5172
        %v5551 = vpop.f32.mrf.mxu0
        %v5552 = vadd.f32 0.0, %v5551
        %v5553 = vpop.f32.mrf.mxu0
        %v5554 = vadd.f32 0.0, %v5553
        %v5555 = vpop.f32.mrf.mxu0
        %v5556 = vpop.f32.mrf.mxu0
        %5557 = vdwg.mxu0
        %5558 = vmatprep.subr.bf16.mxu0 %v5484
        %5559 = vmatpush1.bf16.msra.mxu0 %v5483
        %5560 = vmatprep.subr.bf16.mxu0 %v5480
        %5561 = vmatpush1.bf16.msra.mxu0 %v5479
        %5562 = vmatprep.subr.bf16.mxu0 %v5476
        %5563 = vmatpush1.bf16.msra.mxu0 %v5475
        %5564 = vmatprep.subr.bf16.mxu0 %v5472
        %5565 = vmatpush1.bf16.msra.mxu0 %v5471
        %5566 = vmatprep.subr.bf16.mxu0 %v5468
        %5567 = vmatpush1.bf16.msra.mxu0 %v5467
        %5568 = vmatprep.subr.bf16.mxu0 %v5464
        %5569 = vmatpush1.bf16.msra.mxu0 %v5463
        %5570 = vmatprep.subr.bf16.mxu0 %v5460
        %5571 = vmatpush1.bf16.msra.mxu0 %v5459
        %5572 = vmatprep.subr.bf16.mxu0 %v5456
        %5573 = vmatpush1.bf16.msra.mxu0 %v5455
        %5574 = vmatprep.subr.bf16.mxu0 0
        %5575 = vmatpush2.bf16.msra.mxu0 0
        %5576 = vmatprep.subr.bf16.mxu0 0
        %5577 = vmatpush2.bf16.msra.mxu0 0
        %5578 = vmatprep.subr.bf16.mxu0 0
        %5579 = vmatpush2.bf16.msra.mxu0 0
        %5580 = vmatprep.subr.bf16.mxu0 0
        %5581 = vmatpush2.bf16.msra.mxu0 0
        %5582 = vmatprep.subr.bf16.mxu0 0
        %5583 = vmatpush2.bf16.msra.mxu0 0
        %5584 = vmatprep.subr.bf16.mxu0 0
        %5585 = vmatpush2.bf16.msra.mxu0 0
        %5586 = vmatprep.subr.bf16.mxu0 0
        %5587 = vmatpush2.bf16.msra.mxu0 0
        %5588 = vmatprep.subr.bf16.mxu0 0
        %5589 = vmatpush2.bf16.msra.mxu0 0
        %5590 = vmatprep.mubr.bf16.mxu0 0
        %5591 = vmatmul.mubr.bf16.gmra.mxu0 %v5172
        %v5592 = vpop.f32.mrf.mxu0
        %v5593 = vadd.f32 0.0, %v5592
        %v5594 = vpop.f32.mrf.mxu0
        %v5595 = vadd.f32 0.0, %v5594
        %v5596 = vpop.f32.mrf.mxu0
        %v5597 = vpop.f32.mrf.mxu0
        %5598 = vdwg.mxu0
        %v5631 = vunpack.c.l.b16 %v5293
        %v5632 = vunpack.c.h.b16 %v5293
        %v5633 = vunpack.c.l.b16 %v5294
        %v5634 = vunpack.c.h.b16 %v5294
        %v5635 = vunpack.c.l.b16 %v5295
        %v5636 = vunpack.c.h.b16 %v5295
        %v5637 = vunpack.c.l.b16 %v5296
        %v5638 = vunpack.c.h.b16 %v5296
        %v5639 = vunpack.c.l.b16 %v5297
        %v5640 = vunpack.c.h.b16 %v5297
        %v5641 = vunpack.c.l.b16 %v5298
        %v5642 = vunpack.c.h.b16 %v5298
        %v5643 = vunpack.c.l.b16 %v5299
        %v5644 = vunpack.c.h.b16 %v5299
        %v5645 = vunpack.c.l.b16 %v5300
        %v5646 = vunpack.c.h.b16 %v5300
        %v5647 = vunpack.c.l.b16 %v5301
        %v5648 = vunpack.c.h.b16 %v5301
        %v5649 = vunpack.c.l.b16 %v5302
        %v5650 = vunpack.c.h.b16 %v5302
        %v5651 = vunpack.c.l.b16 %v5303
        %v5652 = vunpack.c.h.b16 %v5303
        %v5653 = vunpack.c.l.b16 %v5304
        %v5654 = vunpack.c.h.b16 %v5304
        %v5655 = vunpack.c.l.b16 %v5305
        %v5656 = vunpack.c.h.b16 %v5305
        %v5657 = vunpack.c.l.b16 %v5306
        %v5658 = vunpack.c.h.b16 %v5306
        %v5659 = vunpack.c.l.b16 %v5307
        %v5660 = vunpack.c.h.b16 %v5307
        %v5661 = vunpack.c.l.b16 %v5308
        %v5662 = vunpack.c.h.b16 %v5308
        %v5663 = vunpack.c.l.b16 %v5309
        %v5664 = vunpack.c.h.b16 %v5309
        %v5665 = vunpack.c.l.b16 %v5310
        %v5666 = vunpack.c.h.b16 %v5310
        %v5667 = vunpack.c.l.b16 %v5311
        %v5668 = vunpack.c.h.b16 %v5311
        %v5669 = vunpack.c.l.b16 %v5312
        %v5670 = vunpack.c.h.b16 %v5312
        %v5671 = vunpack.c.l.b16 %v5313
        %v5672 = vunpack.c.h.b16 %v5313
        %v5673 = vunpack.c.l.b16 %v5314
        %v5674 = vunpack.c.h.b16 %v5314
        %v5675 = vunpack.c.l.b16 %v5315
        %v5676 = vunpack.c.h.b16 %v5315
        %v5677 = vunpack.c.l.b16 %v5316
        %v5678 = vunpack.c.h.b16 %v5316
        %v5679 = vunpack.c.l.b16 %v5317
        %v5680 = vunpack.c.h.b16 %v5317
        %v5681 = vunpack.c.l.b16 %v5318
        %v5682 = vunpack.c.h.b16 %v5318
        %v5683 = vunpack.c.l.b16 %v5319
        %v5684 = vunpack.c.h.b16 %v5319
        %v5685 = vunpack.c.l.b16 %v5320
        %v5686 = vunpack.c.h.b16 %v5320
        %v5687 = vunpack.c.l.b16 %v5321
        %v5688 = vunpack.c.h.b16 %v5321
        %v5689 = vunpack.c.l.b16 %v5322
        %v5690 = vunpack.c.h.b16 %v5322
        %v5691 = vunpack.c.l.b16 %v5323
        %v5692 = vunpack.c.h.b16 %v5323
        %v5693 = vunpack.c.l.b16 %v5324
        %v5694 = vunpack.c.h.b16 %v5324
        %v5695 = vpack.c.b16 %v5635, %v5631
        %v5696 = vpack.c.b16 %v5636, %v5632
        %v5697 = vpack.c.b16 %v5637, %v5633
        %v5698 = vpack.c.b16 %v5638, %v5634
        %v5699 = vpack.c.b16 %v5643, %v5639
        %v5700 = vpack.c.b16 %v5644, %v5640
        %v5701 = vpack.c.b16 %v5645, %v5641
        %v5702 = vpack.c.b16 %v5646, %v5642
        %v5703 = vpack.c.b16 %v5651, %v5647
        %v5704 = vpack.c.b16 %v5652, %v5648
        %v5705 = vpack.c.b16 %v5653, %v5649
        %v5706 = vpack.c.b16 %v5654, %v5650
        %v5707 = vpack.c.b16 %v5659, %v5655
        %v5708 = vpack.c.b16 %v5660, %v5656
        %v5709 = vpack.c.b16 %v5661, %v5657
        %v5710 = vpack.c.b16 %v5662, %v5658
        %v5711 = vpack.c.b16 %v5667, %v5663
        %v5712 = vpack.c.b16 %v5668, %v5664
        %v5713 = vpack.c.b16 %v5669, %v5665
        %v5714 = vpack.c.b16 %v5670, %v5666
        %v5715 = vpack.c.b16 %v5675, %v5671
        %v5716 = vpack.c.b16 %v5676, %v5672
        %v5717 = vpack.c.b16 %v5677, %v5673
        %v5718 = vpack.c.b16 %v5678, %v5674
        %v5719 = vpack.c.b16 %v5683, %v5679
        %v5720 = vpack.c.b16 %v5684, %v5680
        %v5721 = vpack.c.b16 %v5685, %v5681
        %v5722 = vpack.c.b16 %v5686, %v5682
        %v5723 = vpack.c.b16 %v5691, %v5687
        %v5724 = vpack.c.b16 %v5692, %v5688
        %v5725 = vpack.c.b16 %v5693, %v5689
        %v5726 = vpack.c.b16 %v5694, %v5690
        %5759 = vmatprep.subr.bf16.mxu0 %v5724
        %5760 = vmatpush1.bf16.msra.mxu0 %v5723
        %5761 = vmatprep.subr.bf16.mxu0 %v5720
        %5762 = vmatpush1.bf16.msra.mxu0 %v5719
        %5763 = vmatprep.subr.bf16.mxu0 %v5716
        %5764 = vmatpush1.bf16.msra.mxu0 %v5715
        %5765 = vmatprep.subr.bf16.mxu0 %v5712
        %5766 = vmatpush1.bf16.msra.mxu0 %v5711
        %5767 = vmatprep.subr.bf16.mxu0 %v5708
        %5768 = vmatpush1.bf16.msra.mxu0 %v5707
        %5769 = vmatprep.subr.bf16.mxu0 %v5704
        %5770 = vmatpush1.bf16.msra.mxu0 %v5703
        %5771 = vmatprep.subr.bf16.mxu0 %v5700
        %5772 = vmatpush1.bf16.msra.mxu0 %v5699
        %5773 = vmatprep.subr.bf16.mxu0 %v5696
        %5774 = vmatpush1.bf16.msra.mxu0 %v5695
        %5775 = vmatprep.subr.bf16.mxu0 0
        %5776 = vmatpush2.bf16.msra.mxu0 0
        %5777 = vmatprep.subr.bf16.mxu0 0
        %5778 = vmatpush2.bf16.msra.mxu0 0
        %5779 = vmatprep.subr.bf16.mxu0 0
        %5780 = vmatpush2.bf16.msra.mxu0 0
        %5781 = vmatprep.subr.bf16.mxu0 0
        %5782 = vmatpush2.bf16.msra.mxu0 0
        %5783 = vmatprep.subr.bf16.mxu0 0
        %5784 = vmatpush2.bf16.msra.mxu0 0
        %5785 = vmatprep.subr.bf16.mxu0 0
        %5786 = vmatpush2.bf16.msra.mxu0 0
        %5787 = vmatprep.subr.bf16.mxu0 0
        %5788 = vmatpush2.bf16.msra.mxu0 0
        %5789 = vmatprep.subr.bf16.mxu0 0
        %5790 = vmatpush2.bf16.msra.mxu0 0
        %5791 = vmatprep.mubr.bf16.mxu0 0
        %5792 = vmatmul.mubr.bf16.gmra.mxu0 %v5292
        %v5793 = vpop.f32.mrf.mxu0
        %v5794 = vadd.f32 %v5552, %v5793
        %v5795 = vpop.f32.mrf.mxu0
        %v5796 = vadd.f32 %v5554, %v5795
        %v5797 = vpop.f32.mrf.mxu0
        %v5798 = vpop.f32.mrf.mxu0
        %5799 = vdwg.mxu0
        %5800 = vmatprep.subr.bf16.mxu0 %v5726
        %5801 = vmatpush1.bf16.msra.mxu0 %v5725
        %5802 = vmatprep.subr.bf16.mxu0 %v5722
        %5803 = vmatpush1.bf16.msra.mxu0 %v5721
        %5804 = vmatprep.subr.bf16.mxu0 %v5718
        %5805 = vmatpush1.bf16.msra.mxu0 %v5717
        %5806 = vmatprep.subr.bf16.mxu0 %v5714
        %5807 = vmatpush1.bf16.msra.mxu0 %v5713
        %5808 = vmatprep.subr.bf16.mxu0 %v5710
        %5809 = vmatpush1.bf16.msra.mxu0 %v5709
        %5810 = vmatprep.subr.bf16.mxu0 %v5706
        %5811 = vmatpush1.bf16.msra.mxu0 %v5705
        %5812 = vmatprep.subr.bf16.mxu0 %v5702
        %5813 = vmatpush1.bf16.msra.mxu0 %v5701
        %5814 = vmatprep.subr.bf16.mxu0 %v5698
        %5815 = vmatpush1.bf16.msra.mxu0 %v5697
        %5816 = vmatprep.subr.bf16.mxu0 0
        %5817 = vmatpush2.bf16.msra.mxu0 0
        %5818 = vmatprep.subr.bf16.mxu0 0
        %5819 = vmatpush2.bf16.msra.mxu0 0
        %5820 = vmatprep.subr.bf16.mxu0 0
        %5821 = vmatpush2.bf16.msra.mxu0 0
        %5822 = vmatprep.subr.bf16.mxu0 0
        %5823 = vmatpush2.bf16.msra.mxu0 0
        %5824 = vmatprep.subr.bf16.mxu0 0
        %5825 = vmatpush2.bf16.msra.mxu0 0
        %5826 = vmatprep.subr.bf16.mxu0 0
        %5827 = vmatpush2.bf16.msra.mxu0 0
        %5828 = vmatprep.subr.bf16.mxu0 0
        %5829 = vmatpush2.bf16.msra.mxu0 0
        %5830 = vmatprep.subr.bf16.mxu0 0
        %5831 = vmatpush2.bf16.msra.mxu0 0
        %5832 = vmatprep.mubr.bf16.mxu0 0
        %5833 = vmatmul.mubr.bf16.gmra.mxu0 %v5292
        %v5834 = vpop.f32.mrf.mxu0
        %v5835 = vadd.f32 %v5593, %v5834
        %v5836 = vpop.f32.mrf.mxu0
        %v5837 = vadd.f32 %v5595, %v5836
        %v5838 = vpop.f32.mrf.mxu0
        %v5839 = vpop.f32.mrf.mxu0
        %5840 = vdwg.mxu0
        %v5841 = vadd.f32 %v5794, %v422
        %v5842 = vadd.f32 %v5796, %v426
        %v5843 = vadd.f32 %v5835, %v430
        %v5844 = vadd.f32 %v5837, %v434
        %v5845 = vxor.u32 %v5841, 2147483648
        %v5846 = vmul.f32 %v5845, 1.442695
        %v5847 = vpow.pop %v5846
        %v5848 = vadd.f32 %v5847, 1.0
        %v5849 = vrcp.pop %v5848
        %v5850 = vmul.f32 1.0, %v5849
        %v5851 = vxor.u32 %v5842, 2147483648
        %v5852 = vmul.f32 %v5851, 1.442695
        %v5853 = vpow.pop %v5852
        %v5854 = vadd.f32 %v5853, 1.0
        %v5855 = vrcp.pop %v5854
        %v5856 = vmul.f32 1.0, %v5855
        %v5857 = vmul.f32 %v5850, %v5844
        %v5858 = vadd.f32 %v5843, %v5857
        %v5859 = vtanh.pop %v5858
        %v5860 = vsub.f32 1.0, %v5856
        %v5861 = vmul.f32 %v5860, %v5859
        %v5862 = vmul.f32 %v5856, %v5171
        %v5863 = vadd.f32 %v5861, %v5862
        %v5864 = vpack.c.bf16 %v5863, %v5863
        %v5865 = vld [vmem:[#allocation11] sm:$0xf]
        %v5866 = vld [vmem:[#allocation11 + $0x4] sm:$0xf]
        %v5867 = vld [vmem:[#allocation11 + $0x8] sm:$0xf]
        %v5868 = vld [vmem:[#allocation11 + $0xc] sm:$0xf]
        %v5869 = vld [vmem:[#allocation11 + $0x10] sm:$0xf]
        %v5870 = vld [vmem:[#allocation11 + $0x14] sm:$0xf]
        %v5871 = vld [vmem:[#allocation11 + $0x18] sm:$0xf]
        %v5872 = vld [vmem:[#allocation11 + $0x1c] sm:$0xf]
        %v5873 = vld [vmem:[#allocation11 + $0x20] sm:$0xf]
        %v5874 = vld [vmem:[#allocation11 + $0x24] sm:$0xf]
        %v5875 = vld [vmem:[#allocation11 + $0x28] sm:$0xf]
        %v5876 = vld [vmem:[#allocation11 + $0x2c] sm:$0xf]
        %v5877 = vld [vmem:[#allocation11 + $0x30] sm:$0xf]
        %v5878 = vld [vmem:[#allocation11 + $0x34] sm:$0xf]
        %v5879 = vld [vmem:[#allocation11 + $0x38] sm:$0xf]
        %v5880 = vld [vmem:[#allocation11 + $0x3c] sm:$0xf]
        %v5897 = vunpack.c.l.b16 %v5865
        %v5898 = vunpack.c.l.b16 %v5866
        %v5899 = vunpack.c.l.b16 %v5867
        %v5900 = vunpack.c.l.b16 %v5868
        %v5901 = vunpack.c.l.b16 %v5869
        %v5902 = vunpack.c.l.b16 %v5870
        %v5903 = vunpack.c.l.b16 %v5871
        %v5904 = vunpack.c.l.b16 %v5872
        %v5905 = vunpack.c.l.b16 %v5873
        %v5906 = vunpack.c.l.b16 %v5874
        %v5907 = vunpack.c.l.b16 %v5875
        %v5908 = vunpack.c.l.b16 %v5876
        %v5909 = vunpack.c.l.b16 %v5877
        %v5910 = vunpack.c.l.b16 %v5878
        %v5911 = vunpack.c.l.b16 %v5879
        %v5912 = vunpack.c.l.b16 %v5880
        %v5913 = vpack.c.b16 %v5898, %v5897
        %v5914 = vpack.c.b16 %v5900, %v5899
        %v5915 = vpack.c.b16 %v5902, %v5901
        %v5916 = vpack.c.b16 %v5904, %v5903
        %v5917 = vpack.c.b16 %v5906, %v5905
        %v5918 = vpack.c.b16 %v5908, %v5907
        %v5919 = vpack.c.b16 %v5910, %v5909
        %v5920 = vpack.c.b16 %v5912, %v5911
        %5929 = vmatprep.subr.bf16.mxu0 0
        %5930 = vmatpush1.bf16.msra.mxu0 %v5920
        %5931 = vmatprep.subr.bf16.mxu0 0
        %5932 = vmatpush1.bf16.msra.mxu0 %v5919
        %5933 = vmatprep.subr.bf16.mxu0 0
        %5934 = vmatpush1.bf16.msra.mxu0 %v5918
        %5935 = vmatprep.subr.bf16.mxu0 0
        %5936 = vmatpush1.bf16.msra.mxu0 %v5917
        %5937 = vmatprep.subr.bf16.mxu0 0
        %5938 = vmatpush1.bf16.msra.mxu0 %v5916
        %5939 = vmatprep.subr.bf16.mxu0 0
        %5940 = vmatpush1.bf16.msra.mxu0 %v5915
        %5941 = vmatprep.subr.bf16.mxu0 0
        %5942 = vmatpush1.bf16.msra.mxu0 %v5914
        %5943 = vmatprep.subr.bf16.mxu0 0
        %5944 = vmatpush1.bf16.msra.mxu0 %v5913
        %5945 = vmatprep.subr.bf16.mxu0 0
        %5946 = vmatpush2.bf16.msra.mxu0 0
        %5947 = vmatprep.subr.bf16.mxu0 0
        %5948 = vmatpush2.bf16.msra.mxu0 0
        %5949 = vmatprep.subr.bf16.mxu0 0
        %5950 = vmatpush2.bf16.msra.mxu0 0
        %5951 = vmatprep.subr.bf16.mxu0 0
        %5952 = vmatpush2.bf16.msra.mxu0 0
        %5953 = vmatprep.subr.bf16.mxu0 0
        %5954 = vmatpush2.bf16.msra.mxu0 0
        %5955 = vmatprep.subr.bf16.mxu0 0
        %5956 = vmatpush2.bf16.msra.mxu0 0
        %5957 = vmatprep.subr.bf16.mxu0 0
        %5958 = vmatpush2.bf16.msra.mxu0 0
        %5959 = vmatprep.subr.bf16.mxu0 0
        %5960 = vmatpush2.bf16.msra.mxu0 0
        %5961 = vmatprep.mubr.bf16.mxu0 0
        %5962 = vmatmul.mubr.bf16.gmra.mxu0 %v5864
        %v5963 = vpop.f32.mrf.mxu0
        %v5964 = vadd.f32 %v444, %v5963
        %v5965 = vpop.f32.mrf.mxu0
        %v5966 = vpop.f32.mrf.mxu0
        %v5967 = vpop.f32.mrf.mxu0
        %5968 = vdwg.mxu0
        %5969 = vmax.xlane.f32.xlu0 %v5964
        %v5970 = vpop.xlane.xlu0 %5969
        %v5971 = vsub.f32 %v5964, %v5970
        %v5972 = vmul.f32 %v5971, 1.442695
        %v5973 = vpow.pop %v5972
        %5974 = vadd.xlane.f32.xlu0 %v5973
        %v5975 = vpop.xlane.xlu0 %5974
        %v5976 = vlog2.pop %v5975
        %v5977 = vmul.f32 %v5976, 0.6931472
        %v5978 = vadd.f32 %v5970, %v5977
        %v5979 = vsub.f32 %v5964, %v5978
        %s5980 = scalar_lea.vmem %s405, 56 [#allocation12]
        %5981 = vst [vmem:[%s5980] sm:$0xff] %v5979
        %s5982 = smul.u32 %s34, 8
        %s5983 = sadd.s32 %s5982, 7
        %p5984 = scmp.eq.s32.totalorder %s5983, 15
        // Predicated region
        $region73: #{tpu_custom_call.1} parent=47 // pred_check
          %p5985 = pneg %p5984
        $region74: #{tpu_custom_call.1} parent=47 // pred_check_branch
          %5987 = sbr.rel (%p5985) target = $region76
        $region75: #{tpu_custom_call.1} parent=47 // pred_region
          %5988 = vst [vmem:[#allocation13] sm:$0xff] %v5863
        $region76: #{tpu_custom_call.1} parent=47 // pred_fallthru
          _
        %5989 = vst [vmem:[#allocation2] sm:$0xff] %v5863
        %s5990 = sand.u32 %s210, 1
        %s5991 = scalar_lea.sflag [#allocation5], %s5990
        %s5992 = sand.u32 %s210, 1
        %s5993 = smul.addr %s5992, 64
        %s5994 = scalar_lea.vmem [#allocation12], %s5993
        // Predicated region
        $region77: #{tpu_custom_call.1} parent=47 // pred_check
          %p5995 = pneg %p220
        $region78: #{tpu_custom_call.1} parent=47 // pred_check_branch
          %5997 = sbr.rel (%p5995) target = $region80
        $region79: #{tpu_custom_call.1} parent=47 // pred_region
          %s5998 = smul.u32 8, %s34
          %s6000 = ssub.s32 1024, 1024
          %6001 = vsyncadd %s5991, %s6000
          %s6002 = sadd.s32 %s33, %s5998
          %s6003 = smul.addr %s6002, 128
          %s6004 = scalar_lea.hbm %s7, %s6003
          %s6005 = sshll.u32 %s5994, 4
          %s6006 = int_to_ptr.vmem [resolvable:$true] %s6005
          %6011 = dma.vmem_to_hbm [thread:$0]  %s6006, 1024, %s6004, %s5991, 128, 128, 8
        $region80: #{tpu_custom_call.1} parent=47 // pred_fallthru
          _
        // Predicated region
        $region81: #{tpu_custom_call.1} parent=47 // pred_check
          %p6012 = pneg %p246
        $region82: #{tpu_custom_call.1} parent=47 // pred_check_branch
          %6014 = sbr.rel (%p6012) target = $region84
        $region83: #{tpu_custom_call.1} parent=47 // pred_region
          %s6016 = ssub.s32 128, 128
          %6017 = vsyncadd [#allocation14], %s6016
          %s6018 = smul.addr %s33, 128
          %s6019 = scalar_lea.hbm %s8, %s6018
          %s6021 = sshll.u32 [#allocation13], 4
          %s6022 = int_to_ptr.vmem [resolvable:$true] %s6021
          %6024 = dma.vmem_to_hbm [thread:$0]  %s6022, 128, %s6019, [#allocation14]
        $region84: #{tpu_custom_call.1} parent=47 // pred_fallthru
          _
        // Predicated region
        $region85: #{tpu_custom_call.1} parent=47 // pred_check
          %p6025 = pneg %p246
        $region86: #{tpu_custom_call.1} parent=47 // pred_check_branch
          %6027 = sbr.rel (%p6025) target = $region88
        $region87: #{tpu_custom_call.1} parent=47 // pred_region
          %6028 = dma.done [#allocation14], 128
        $region88: #{tpu_custom_call.1} parent=47 // pred_fallthru
          _
      $region48: #{tpu_custom_call.1} parent=5 // pred_fallthru
        _
      %p6029 = scmp.le.s32.totalorder 2, %s24
      // Predicated region
      $region89: #{tpu_custom_call.1} parent=5 // pred_check
        %p6030 = pneg %p6029
      $region90: #{tpu_custom_call.1} parent=5 // pred_check_branch
        %6032 = sbr.rel (%p6030) target = $region92
      $region91: #{tpu_custom_call.1} parent=5 // pred_region
        %s6033 = ssub.s32 %s24, 2
        // Predicated region
        $region93: #{tpu_custom_call.1} parent=91 // pred_check
          %p6034 = pneg %p226
        $region94: #{tpu_custom_call.1} parent=91 // pred_check_branch
          %6036 = sbr.rel (%p6034) target = $region96
        $region95: #{tpu_custom_call.1} parent=91 // pred_region
          %s6037 = sand.u32 %s211, 1
          %s6038 = scalar_lea.sflag [#allocation5], %s6037
          %s6039 = sand.u32 %s211, 1
          %s6040 = smul.addr %s6039, 64
          %s6041 = scalar_lea.vmem [#allocation12], %s6040
          %6042 = dma.done %s6038, 1024
        $region96: #{tpu_custom_call.1} parent=91 // pred_fallthru
          _
      $region92: #{tpu_custom_call.1} parent=5 // pred_fallthru
        _
    $region6: #{tpu_custom_call.1} parent=1 // loop_footer
      %s28 = sadd.s32 1, %s24
    $region7: #{tpu_custom_call.1} parent=1 // loop_footer_branch
      %23 = sbr.rel target = $region3
    $region8: #{tpu_custom_call.1} parent=1 // loop_exit
      _
    %6043 = vsyncpa [#allocation4], 1
    %s6044 = scalar_lea.sflag [#allocation4], 1
    %6045 = vsyncpa %s6044, 1
    %6046 = vsyncpa [#allocation7], 1
    %6047 = vsyncpa [#allocation10], 1
    %6048 = vsyncpa [#allocation5], 1
    %s6049 = scalar_lea.sflag [#allocation5], 1
    %6050 = vsyncpa %s6049, 1
    %6051 = vsyncpa [#allocation14], 1

</llo_original>
